<compile_context>
chip_gen: v5e
topology: v5e:2x2
jax: 0.10.0
libtpu: 0.0.40
codegen_flags: <defaults>
</compile_context>

<pallas_src>
import functools

import jax
import jax.numpy as jnp
from jax import lax
from jax.experimental import pallas as pl
from jax.experimental.pallas import tpu as pltpu

EPS = 1e-5


# ------------------------------- Pallas kernel ------------------------------ #

def _basic_block_kernel(x_ref, w1_ref, b1_ref, w2_ref, b2_ref, o_ref,
                        xp_scr, y1_scr, *, H, W, C, Cout, dil):
    """Fused conv3x3+BN+ReLU -> conv3x3+BN -> +identity for one image.

    x_ref : (1, H, W, C)     input image (NHWC), unpadded
    w*_ref: (9, Cin, Cout)   conv weights with BN scale folded in, tap-major
    b*_ref: (1, Cout)        folded BN bias
    o_ref : (1, H, W, Cout)  output image
    xp_scr, y1_scr : (H+2P, W+2P, C*) zero-halo VMEM scratch ('same' padding)
    """
    P = dil  # 'same' 3x3 conv => padding == dilation
    taps = [(kh, kw) for kh in range(3) for kw in range(3)]

    x = x_ref[0]                                            # (H, W, C)

    # ---- conv1 + folded BN + ReLU (entirely in VMEM) ----
    xp_scr[...] = jnp.zeros_like(xp_scr)                    # zero halo
    xp_scr[P:P + H, P:P + W, :] = x
    acc1 = jnp.zeros((H * W, Cout), jnp.float32)
    for t, (kh, kw) in enumerate(taps):                     # unrolled at trace time
        tap = xp_scr[kh * dil:kh * dil + H, kw * dil:kw * dil + W, :]
        acc1 = acc1 + jnp.dot(tap.reshape(H * W, C), w1_ref[t],
                              preferred_element_type=jnp.float32)
    y1 = jnp.maximum(acc1 + b1_ref[...], 0.0)               # (H*W, Cout)

    # ---- conv2 + folded BN + identity residual ----
    y1_scr[...] = jnp.zeros_like(y1_scr)
    y1_scr[P:P + H, P:P + W, :] = y1.reshape(H, W, Cout)
    acc2 = jnp.zeros((H * W, Cout), jnp.float32)
    for t, (kh, kw) in enumerate(taps):
        tap = y1_scr[kh * dil:kh * dil + H, kw * dil:kw * dil + W, :]
        acc2 = acc2 + jnp.dot(tap.reshape(H * W, Cout), w2_ref[t],
                              preferred_element_type=jnp.float32)
    out = acc2 + b2_ref[...] + x.reshape(H * W, C)          # no final ReLU (per spec)
    o_ref[...] = out.reshape(1, H, W, Cout).astype(o_ref.dtype)


# ------------------------------ JAX-side glue ------------------------------- #

def _fold_conv_bn(w_oihw, gamma, beta, mean, var):
    """Fold eval-mode BN into the conv: (9, Cin, Cout) weight + (1, Cout) bias."""
    cout, cin = w_oihw.shape[0], w_oihw.shape[1]
    scale = gamma / jnp.sqrt(var + EPS)                         # (Cout,)
    bias = beta - mean * scale                                  # (Cout,)
    w = jnp.transpose(w_oihw, (2, 3, 1, 0)).reshape(9, cin, cout)
    w = w * scale[None, None, :]                                # fold scale into weight
    return w.astype(jnp.float32), bias.reshape(1, cout).astype(jnp.float32)


def basic_block_apply_nhwc(x_nhwc, params, stride=1, pad=1, dilation=1):
    """BasicBlock.forward (downsample=None), NHWC in / NHWC out."""
    B, H, W, C = x_nhwc.shape
    P = dilation if dilation > 1 else pad
    # Identity shortcut requires a shape-preserving conv and matching channels.
    # TODO(synk): downsample branch (1x1 conv+BN) for stride>1 / channel change.
    assert stride == 1 and P == dilation, "identity shortcut needs stride=1, 'same' conv"
    w1, b1 = _fold_conv_bn(params["w1"], params["g1"], params["b1"],
                           params["m1"], params["v1"])
    w2, b2 = _fold_conv_bn(params["w2"], params["g2"], params["b2"],
                           params["m2"], params["v2"])
    Cout = w1.shape[-1]
    assert Cout == C, "identity shortcut needs in_channels == out_channels"
    Hp, Wp = H + 2 * P, W + 2 * P

    # TODO(synk): for large H*W / C, add row-strip tiling with a 2*dilation halo
    # so the per-step working set stays inside VMEM (esp. v7x's 64 MiB), and an
    # optional bf16 compute path (f32 accumulation) for v6e/v7x.
    kernel = functools.partial(_basic_block_kernel,
                               H=H, W=W, C=C, Cout=Cout, dil=dilation)
    return pl.pallas_call(
        kernel,
        out_shape=jax.ShapeDtypeStruct((B, H, W, Cout), jnp.float32),
        grid=(B,),
        in_specs=[
            pl.BlockSpec((1, H, W, C), lambda b: (b, 0, 0, 0)),    # image
            pl.BlockSpec((9, C, Cout), lambda b: (0, 0, 0)),       # folded w1
            pl.BlockSpec((1, Cout), lambda b: (0, 0)),             # folded bias1
            pl.BlockSpec((9, Cout, Cout), lambda b: (0, 0, 0)),    # folded w2
            pl.BlockSpec((1, Cout), lambda b: (0, 0)),             # folded bias2
        ],
        out_specs=pl.BlockSpec((1, H, W, Cout), lambda b: (b, 0, 0, 0)),
        scratch_shapes=[
            pltpu.VMEM((Hp, Wp, C), jnp.float32),      # zero-padded input
            pltpu.VMEM((Hp, Wp, Cout), jnp.float32),   # zero-padded conv1 output
        ],
        compiler_params=pltpu.CompilerParams(
            dimension_semantics=("parallel",),
            vmem_limit_bytes=32 * 1024 * 1024),
    )(x_nhwc.astype(jnp.float32), w1, b1, w2, b2)


def basic_block_forward(x_nchw, params, stride=1, pad=1, dilation=1):
    """PyTorch-parity wrapper: NCHW in / NCHW out (prefer the NHWC entry point)."""
    x = jnp.transpose(x_nchw, (0, 2, 3, 1))
    out = basic_block_apply_nhwc(x, params, stride=stride, pad=pad, dilation=dilation)
    return jnp.transpose(out, (0, 3, 1, 2))


# ----------------------------- pure-JAX reference --------------------------- #

def _ref_convbn(x, w, gamma, beta, mean, var, stride, padding, dilation):
    y = lax.conv_general_dilated(
        x, w, window_strides=(stride, stride),
        padding=[(padding, padding), (padding, padding)],
        rhs_dilation=(dilation, dilation),
        dimension_numbers=("NCHW", "OIHW", "NCHW"))
    scale = (gamma / jnp.sqrt(var + EPS)).reshape(1, -1, 1, 1)
    bias = (beta - mean * gamma / jnp.sqrt(var + EPS)).reshape(1, -1, 1, 1)
    return y * scale + bias


def ref_basic_block(x, params, stride=1, pad=1, dilation=1):
    padding = dilation if dilation > 1 else pad
    out = _ref_convbn(x, params["w1"], params["g1"], params["b1"],
                      params["m1"], params["v1"], stride, padding, dilation)
    out = jnp.maximum(out, 0.0)
    out = _ref_convbn(out, params["w2"], params["g2"], params["b2"],
                      params["m2"], params["v2"], 1, padding, dilation)
    return out + x


# ----------------------------------- main ----------------------------------- #

if __name__ == "__main__":
    B, C, H, W = 2, 4, 16, 16            # in_channels == out_channels, stride=1
    key = jax.random.PRNGKey(0)
    ks = jax.random.split(key, 11)

    params = {
        "w1": 0.1 * jax.random.normal(ks[0], (C, C, 3, 3), jnp.float32),
        "g1": 1.0 + 0.1 * jax.random.normal(ks[1], (C,), jnp.float32),
        "b1": 0.1 * jax.random.normal(ks[2], (C,), jnp.float32),
        "m1": 0.1 * jax.random.normal(ks[3], (C,), jnp.float32),
        "v1": 0.5 + jax.random.uniform(ks[4], (C,), jnp.float32),
        "w2": 0.1 * jax.random.normal(ks[5], (C, C, 3, 3), jnp.float32),
        "g2": 1.0 + 0.1 * jax.random.normal(ks[6], (C,), jnp.float32),
        "b2": 0.1 * jax.random.normal(ks[7], (C,), jnp.float32),
        "m2": 0.1 * jax.random.normal(ks[8], (C,), jnp.float32),
        "v2": 0.5 + jax.random.uniform(ks[9], (C,), jnp.float32),
    }
    x = jax.random.normal(ks[10], (B, C, H, W), jnp.float32)

    fwd = jax.jit(functools.partial(basic_block_forward,
                                    stride=1, pad=1, dilation=1))
    out = jax.block_until_ready(fwd(x, params))

    ref = jax.block_until_ready(ref_basic_block(x, params))
    assert out.shape == (B, C, H, W)
    err = float(jnp.max(jnp.abs(out - ref)))
    assert jnp.allclose(out, ref, rtol=1e-4, atol=5e-4), err

    print("KERNEL_OK")
</pallas_src>

<mosaic_0001>
module attributes {stable_mosaic.version = 11 : i64} {
  func.func @_basic_block_kernel(%arg0: i32, %arg1: memref<1x16x16x4xf32, #tpu.memory_space<vmem>>, %arg2: memref<9x4x4xf32, #tpu.memory_space<vmem>>, %arg3: memref<1x4xf32, #tpu.memory_space<vmem>>, %arg4: memref<9x4x4xf32, #tpu.memory_space<vmem>>, %arg5: memref<1x4xf32, #tpu.memory_space<vmem>>, %arg6: memref<1x16x16x4xf32, #tpu.memory_space<vmem>>, %arg7: memref<18x18x4xf32, #tpu.memory_space<vmem>>, %arg8: memref<18x18x4xf32, #tpu.memory_space<vmem>>) attributes {dimension_semantics = [#tpu.dimension_semantics<parallel>], iteration_bounds = array<i64: 2>, scalar_prefetch = 0 : i64, scratch_operands = 2 : i64, tpu.core_type = #tpu.core_type<tc>, window_params = [{transform_indices = @transform_0, window_bounds = array<i64: 1, 16, 16, 4>}, {pipeline_mode = #tpu.pipeline_mode<synchronous>, transform_indices = @transform_1, window_bounds = array<i64: 9, 4, 4>}, {pipeline_mode = #tpu.pipeline_mode<synchronous>, transform_indices = @transform_2, window_bounds = array<i64: 1, 4>}, {pipeline_mode = #tpu.pipeline_mode<synchronous>, transform_indices = @transform_3, window_bounds = array<i64: 9, 4, 4>}, {pipeline_mode = #tpu.pipeline_mode<synchronous>, transform_indices = @transform_4, window_bounds = array<i64: 1, 4>}, {transform_indices = @transform_5, window_bounds = array<i64: 1, 16, 16, 4>}]} {
    %c0 = arith.constant 0 : index
    %c0_0 = arith.constant 0 : index
    %c0_1 = arith.constant 0 : index
    %c0_2 = arith.constant 0 : index
    %0 = vector.load %arg1[%c0, %c0_0, %c0_1, %c0_2] : memref<1x16x16x4xf32, #tpu.memory_space<vmem>>, vector<1x16x16x4xf32>
    %1 = vector.shape_cast %0 : vector<1x16x16x4xf32> to vector<16x16x4xf32>
    %cst = arith.constant 0.000000e+00 : f32
    %2 = vector.broadcast %cst : f32 to vector<18x18x4xf32>
    %c0_3 = arith.constant 0 : index
    %c0_4 = arith.constant 0 : index
    %c0_5 = arith.constant 0 : index
    %3 = vector.load %arg7[%c0_3, %c0_4, %c0_5] : memref<18x18x4xf32, #tpu.memory_space<vmem>>, vector<18x18x4xf32>
    tpu.vector_store %arg7[%c0_3, %c0_4, %c0_5], %2 {strides = array<i32>} : memref<18x18x4xf32, #tpu.memory_space<vmem>>, vector<18x18x4xf32>,
    %c1 = arith.constant 1 : index
    %c1_6 = arith.constant 1 : index
    %c0_7 = arith.constant 0 : index
    %4 = vector.load %arg7[%c1, %c1_6, %c0_7] : memref<18x18x4xf32, #tpu.memory_space<vmem>>, vector<16x16x4xf32>
    tpu.vector_store %arg7[%c1, %c1_6, %c0_7], %1 {strides = array<i32>} : memref<18x18x4xf32, #tpu.memory_space<vmem>>, vector<16x16x4xf32>,
    %cst_8 = arith.constant 0.000000e+00 : f32
    %5 = vector.broadcast %cst_8 : f32 to vector<256x4xf32>
    %c0_9 = arith.constant 0 : index
    %c0_10 = arith.constant 0 : index
    %c0_11 = arith.constant 0 : index
    %6 = vector.load %arg7[%c0_9, %c0_10, %c0_11] : memref<18x18x4xf32, #tpu.memory_space<vmem>>, vector<16x16x4xf32>
    %7 = vector.shape_cast %6 : vector<16x16x4xf32> to vector<256x4xf32>
    %c0_12 = arith.constant 0 : index
    %c0_13 = arith.constant 0 : index
    %c0_14 = arith.constant 0 : index
    %8 = vector.load %arg2[%c0_12, %c0_13, %c0_14] : memref<9x4x4xf32, #tpu.memory_space<vmem>>, vector<1x4x4xf32>
    %9 = vector.shape_cast %8 : vector<1x4x4xf32> to vector<4x4xf32>
    %cst_15 = arith.constant dense<0.000000e+00> : vector<256x4xf32>
    %10 = tpu.matmul %7, %9, %cst_15 {dimension_numbers = #tpu.dot_dimension_numbers<[1], [0], [0], [1], [0, 0, 1, 1], [], []>} : vector<256x4xf32>, vector<4x4xf32>, vector<256x4xf32> -> vector<256x4xf32>
    %11 = arith.addf %5, %10 : vector<256x4xf32>
    %c0_16 = arith.constant 0 : index
    %c1_17 = arith.constant 1 : index
    %c0_18 = arith.constant 0 : index
    %12 = vector.load %arg7[%c0_16, %c1_17, %c0_18] : memref<18x18x4xf32, #tpu.memory_space<vmem>>, vector<16x16x4xf32>
    %13 = vector.shape_cast %12 : vector<16x16x4xf32> to vector<256x4xf32>
    %c1_19 = arith.constant 1 : index
    %c0_20 = arith.constant 0 : index
    %c0_21 = arith.constant 0 : index
    %14 = vector.load %arg2[%c1_19, %c0_20, %c0_21] : memref<9x4x4xf32, #tpu.memory_space<vmem>>, vector<1x4x4xf32>
    %15 = vector.shape_cast %14 : vector<1x4x4xf32> to vector<4x4xf32>
    %cst_22 = arith.constant dense<0.000000e+00> : vector<256x4xf32>
    %16 = tpu.matmul %13, %15, %cst_22 {dimension_numbers = #tpu.dot_dimension_numbers<[1], [0], [0], [1], [0, 0, 1, 1], [], []>} : vector<256x4xf32>, vector<4x4xf32>, vector<256x4xf32> -> vector<256x4xf32>
    %17 = arith.addf %11, %16 : vector<256x4xf32>
    %c0_23 = arith.constant 0 : index
    %c2 = arith.constant 2 : index
    %c0_24 = arith.constant 0 : index
    %18 = vector.load %arg7[%c0_23, %c2, %c0_24] : memref<18x18x4xf32, #tpu.memory_space<vmem>>, vector<16x16x4xf32>
    %19 = vector.shape_cast %18 : vector<16x16x4xf32> to vector<256x4xf32>
    %c2_25 = arith.constant 2 : index
    %c0_26 = arith.constant 0 : index
    %c0_27 = arith.constant 0 : index
    %20 = vector.load %arg2[%c2_25, %c0_26, %c0_27] : memref<9x4x4xf32, #tpu.memory_space<vmem>>, vector<1x4x4xf32>
    %21 = vector.shape_cast %20 : vector<1x4x4xf32> to vector<4x4xf32>
    %cst_28 = arith.constant dense<0.000000e+00> : vector<256x4xf32>
    %22 = tpu.matmul %19, %21, %cst_28 {dimension_numbers = #tpu.dot_dimension_numbers<[1], [0], [0], [1], [0, 0, 1, 1], [], []>} : vector<256x4xf32>, vector<4x4xf32>, vector<256x4xf32> -> vector<256x4xf32>
    %23 = arith.addf %17, %22 : vector<256x4xf32>
    %c1_29 = arith.constant 1 : index
    %c0_30 = arith.constant 0 : index
    %c0_31 = arith.constant 0 : index
    %24 = vector.load %arg7[%c1_29, %c0_30, %c0_31] : memref<18x18x4xf32, #tpu.memory_space<vmem>>, vector<16x16x4xf32>
    %25 = vector.shape_cast %24 : vector<16x16x4xf32> to vector<256x4xf32>
    %c3 = arith.constant 3 : index
    %c0_32 = arith.constant 0 : index
    %c0_33 = arith.constant 0 : index
    %26 = vector.load %arg2[%c3, %c0_32, %c0_33] : memref<9x4x4xf32, #tpu.memory_space<vmem>>, vector<1x4x4xf32>
    %27 = vector.shape_cast %26 : vector<1x4x4xf32> to vector<4x4xf32>
    %cst_34 = arith.constant dense<0.000000e+00> : vector<256x4xf32>
    %28 = tpu.matmul %25, %27, %cst_34 {dimension_numbers = #tpu.dot_dimension_numbers<[1], [0], [0], [1], [0, 0, 1, 1], [], []>} : vector<256x4xf32>, vector<4x4xf32>, vector<256x4xf32> -> vector<256x4xf32>
    %29 = arith.addf %23, %28 : vector<256x4xf32>
    %c1_35 = arith.constant 1 : index
    %c1_36 = arith.constant 1 : index
    %c0_37 = arith.constant 0 : index
    %30 = vector.load %arg7[%c1_35, %c1_36, %c0_37] : memref<18x18x4xf32, #tpu.memory_space<vmem>>, vector<16x16x4xf32>
    %31 = vector.shape_cast %30 : vector<16x16x4xf32> to vector<256x4xf32>
    %c4 = arith.constant 4 : index
    %c0_38 = arith.constant 0 : index
    %c0_39 = arith.constant 0 : index
    %32 = vector.load %arg2[%c4, %c0_38, %c0_39] : memref<9x4x4xf32, #tpu.memory_space<vmem>>, vector<1x4x4xf32>
    %33 = vector.shape_cast %32 : vector<1x4x4xf32> to vector<4x4xf32>
    %cst_40 = arith.constant dense<0.000000e+00> : vector<256x4xf32>
    %34 = tpu.matmul %31, %33, %cst_40 {dimension_numbers = #tpu.dot_dimension_numbers<[1], [0], [0], [1], [0, 0, 1, 1], [], []>} : vector<256x4xf32>, vector<4x4xf32>, vector<256x4xf32> -> vector<256x4xf32>
    %35 = arith.addf %29, %34 : vector<256x4xf32>
    %c1_41 = arith.constant 1 : index
    %c2_42 = arith.constant 2 : index
    %c0_43 = arith.constant 0 : index
    %36 = vector.load %arg7[%c1_41, %c2_42, %c0_43] : memref<18x18x4xf32, #tpu.memory_space<vmem>>, vector<16x16x4xf32>
    %37 = vector.shape_cast %36 : vector<16x16x4xf32> to vector<256x4xf32>
    %c5 = arith.constant 5 : index
    %c0_44 = arith.constant 0 : index
    %c0_45 = arith.constant 0 : index
    %38 = vector.load %arg2[%c5, %c0_44, %c0_45] : memref<9x4x4xf32, #tpu.memory_space<vmem>>, vector<1x4x4xf32>
    %39 = vector.shape_cast %38 : vector<1x4x4xf32> to vector<4x4xf32>
    %cst_46 = arith.constant dense<0.000000e+00> : vector<256x4xf32>
    %40 = tpu.matmul %37, %39, %cst_46 {dimension_numbers = #tpu.dot_dimension_numbers<[1], [0], [0], [1], [0, 0, 1, 1], [], []>} : vector<256x4xf32>, vector<4x4xf32>, vector<256x4xf32> -> vector<256x4xf32>
    %41 = arith.addf %35, %40 : vector<256x4xf32>
    %c2_47 = arith.constant 2 : index
    %c0_48 = arith.constant 0 : index
    %c0_49 = arith.constant 0 : index
    %42 = vector.load %arg7[%c2_47, %c0_48, %c0_49] : memref<18x18x4xf32, #tpu.memory_space<vmem>>, vector<16x16x4xf32>
    %43 = vector.shape_cast %42 : vector<16x16x4xf32> to vector<256x4xf32>
    %c6 = arith.constant 6 : index
    %c0_50 = arith.constant 0 : index
    %c0_51 = arith.constant 0 : index
    %44 = vector.load %arg2[%c6, %c0_50, %c0_51] : memref<9x4x4xf32, #tpu.memory_space<vmem>>, vector<1x4x4xf32>
    %45 = vector.shape_cast %44 : vector<1x4x4xf32> to vector<4x4xf32>
    %cst_52 = arith.constant dense<0.000000e+00> : vector<256x4xf32>
    %46 = tpu.matmul %43, %45, %cst_52 {dimension_numbers = #tpu.dot_dimension_numbers<[1], [0], [0], [1], [0, 0, 1, 1], [], []>} : vector<256x4xf32>, vector<4x4xf32>, vector<256x4xf32> -> vector<256x4xf32>
    %47 = arith.addf %41, %46 : vector<256x4xf32>
    %c2_53 = arith.constant 2 : index
    %c1_54 = arith.constant 1 : index
    %c0_55 = arith.constant 0 : index
    %48 = vector.load %arg7[%c2_53, %c1_54, %c0_55] : memref<18x18x4xf32, #tpu.memory_space<vmem>>, vector<16x16x4xf32>
    %49 = vector.shape_cast %48 : vector<16x16x4xf32> to vector<256x4xf32>
    %c7 = arith.constant 7 : index
    %c0_56 = arith.constant 0 : index
    %c0_57 = arith.constant 0 : index
    %50 = vector.load %arg2[%c7, %c0_56, %c0_57] : memref<9x4x4xf32, #tpu.memory_space<vmem>>, vector<1x4x4xf32>
    %51 = vector.shape_cast %50 : vector<1x4x4xf32> to vector<4x4xf32>
    %cst_58 = arith.constant dense<0.000000e+00> : vector<256x4xf32>
    %52 = tpu.matmul %49, %51, %cst_58 {dimension_numbers = #tpu.dot_dimension_numbers<[1], [0], [0], [1], [0, 0, 1, 1], [], []>} : vector<256x4xf32>, vector<4x4xf32>, vector<256x4xf32> -> vector<256x4xf32>
    %53 = arith.addf %47, %52 : vector<256x4xf32>
    %c2_59 = arith.constant 2 : index
    %c2_60 = arith.constant 2 : index
    %c0_61 = arith.constant 0 : index
    %54 = vector.load %arg7[%c2_59, %c2_60, %c0_61] : memref<18x18x4xf32, #tpu.memory_space<vmem>>, vector<16x16x4xf32>
    %55 = vector.shape_cast %54 : vector<16x16x4xf32> to vector<256x4xf32>
    %c8 = arith.constant 8 : index
    %c0_62 = arith.constant 0 : index
    %c0_63 = arith.constant 0 : index
    %56 = vector.load %arg2[%c8, %c0_62, %c0_63] : memref<9x4x4xf32, #tpu.memory_space<vmem>>, vector<1x4x4xf32>
    %57 = vector.shape_cast %56 : vector<1x4x4xf32> to vector<4x4xf32>
    %cst_64 = arith.constant dense<0.000000e+00> : vector<256x4xf32>
    %58 = tpu.matmul %55, %57, %cst_64 {dimension_numbers = #tpu.dot_dimension_numbers<[1], [0], [0], [1], [0, 0, 1, 1], [], []>} : vector<256x4xf32>, vector<4x4xf32>, vector<256x4xf32> -> vector<256x4xf32>
    %59 = arith.addf %53, %58 : vector<256x4xf32>
    %c0_65 = arith.constant 0 : index
    %c0_66 = arith.constant 0 : index
    %60 = vector.load %arg3[%c0_65, %c0_66] : memref<1x4xf32, #tpu.memory_space<vmem>>, vector<1x4xf32>
    %61 = vector.broadcast %60 : vector<1x4xf32> to vector<256x4xf32>
    %62 = arith.addf %59, %61 : vector<256x4xf32>
    %cst_67 = arith.constant 0.000000e+00 : f32
    %63 = vector.broadcast %cst_67 : f32 to vector<256x4xf32>
    %64 = arith.maximumf %62, %63 : vector<256x4xf32>
    %cst_68 = arith.constant 0.000000e+00 : f32
    %65 = vector.broadcast %cst_68 : f32 to vector<18x18x4xf32>
    %c0_69 = arith.constant 0 : index
    %c0_70 = arith.constant 0 : index
    %c0_71 = arith.constant 0 : index
    %66 = vector.load %arg8[%c0_69, %c0_70, %c0_71] : memref<18x18x4xf32, #tpu.memory_space<vmem>>, vector<18x18x4xf32>
    tpu.vector_store %arg8[%c0_69, %c0_70, %c0_71], %65 {strides = array<i32>} : memref<18x18x4xf32, #tpu.memory_space<vmem>>, vector<18x18x4xf32>,
    %67 = vector.shape_cast %64 : vector<256x4xf32> to vector<16x16x4xf32>
    %c1_72 = arith.constant 1 : index
    %c1_73 = arith.constant 1 : index
    %c0_74 = arith.constant 0 : index
    %68 = vector.load %arg8[%c1_72, %c1_73, %c0_74] : memref<18x18x4xf32, #tpu.memory_space<vmem>>, vector<16x16x4xf32>
    tpu.vector_store %arg8[%c1_72, %c1_73, %c0_74], %67 {strides = array<i32>} : memref<18x18x4xf32, #tpu.memory_space<vmem>>, vector<16x16x4xf32>,
    %cst_75 = arith.constant 0.000000e+00 : f32
    %69 = vector.broadcast %cst_75 : f32 to vector<256x4xf32>
    %c0_76 = arith.constant 0 : index
    %c0_77 = arith.constant 0 : index
    %c0_78 = arith.constant 0 : index
    %70 = vector.load %arg8[%c0_76, %c0_77, %c0_78] : memref<18x18x4xf32, #tpu.memory_space<vmem>>, vector<16x16x4xf32>
    %71 = vector.shape_cast %70 : vector<16x16x4xf32> to vector<256x4xf32>
    %c0_79 = arith.constant 0 : index
    %c0_80 = arith.constant 0 : index
    %c0_81 = arith.constant 0 : index
    %72 = vector.load %arg4[%c0_79, %c0_80, %c0_81] : memref<9x4x4xf32, #tpu.memory_space<vmem>>, vector<1x4x4xf32>
    %73 = vector.shape_cast %72 : vector<1x4x4xf32> to vector<4x4xf32>
    %cst_82 = arith.constant dense<0.000000e+00> : vector<256x4xf32>
    %74 = tpu.matmul %71, %73, %cst_82 {dimension_numbers = #tpu.dot_dimension_numbers<[1], [0], [0], [1], [0, 0, 1, 1], [], []>} : vector<256x4xf32>, vector<4x4xf32>, vector<256x4xf32> -> vector<256x4xf32>
    %75 = arith.addf %69, %74 : vector<256x4xf32>
    %c0_83 = arith.constant 0 : index
    %c1_84 = arith.constant 1 : index
    %c0_85 = arith.constant 0 : index
    %76 = vector.load %arg8[%c0_83, %c1_84, %c0_85] : memref<18x18x4xf32, #tpu.memory_space<vmem>>, vector<16x16x4xf32>
    %77 = vector.shape_cast %76 : vector<16x16x4xf32> to vector<256x4xf32>
    %c1_86 = arith.constant 1 : index
    %c0_87 = arith.constant 0 : index
    %c0_88 = arith.constant 0 : index
    %78 = vector.load %arg4[%c1_86, %c0_87, %c0_88] : memref<9x4x4xf32, #tpu.memory_space<vmem>>, vector<1x4x4xf32>
    %79 = vector.shape_cast %78 : vector<1x4x4xf32> to vector<4x4xf32>
    %cst_89 = arith.constant dense<0.000000e+00> : vector<256x4xf32>
    %80 = tpu.matmul %77, %79, %cst_89 {dimension_numbers = #tpu.dot_dimension_numbers<[1], [0], [0], [1], [0, 0, 1, 1], [], []>} : vector<256x4xf32>, vector<4x4xf32>, vector<256x4xf32> -> vector<256x4xf32>
    %81 = arith.addf %75, %80 : vector<256x4xf32>
    %c0_90 = arith.constant 0 : index
    %c2_91 = arith.constant 2 : index
    %c0_92 = arith.constant 0 : index
    %82 = vector.load %arg8[%c0_90, %c2_91, %c0_92] : memref<18x18x4xf32, #tpu.memory_space<vmem>>, vector<16x16x4xf32>
    %83 = vector.shape_cast %82 : vector<16x16x4xf32> to vector<256x4xf32>
    %c2_93 = arith.constant 2 : index
    %c0_94 = arith.constant 0 : index
    %c0_95 = arith.constant 0 : index
    %84 = vector.load %arg4[%c2_93, %c0_94, %c0_95] : memref<9x4x4xf32, #tpu.memory_space<vmem>>, vector<1x4x4xf32>
    %85 = vector.shape_cast %84 : vector<1x4x4xf32> to vector<4x4xf32>
    %cst_96 = arith.constant dense<0.000000e+00> : vector<256x4xf32>
    %86 = tpu.matmul %83, %85, %cst_96 {dimension_numbers = #tpu.dot_dimension_numbers<[1], [0], [0], [1], [0, 0, 1, 1], [], []>} : vector<256x4xf32>, vector<4x4xf32>, vector<256x4xf32> -> vector<256x4xf32>
    %87 = arith.addf %81, %86 : vector<256x4xf32>
    %c1_97 = arith.constant 1 : index
    %c0_98 = arith.constant 0 : index
    %c0_99 = arith.constant 0 : index
    %88 = vector.load %arg8[%c1_97, %c0_98, %c0_99] : memref<18x18x4xf32, #tpu.memory_space<vmem>>, vector<16x16x4xf32>
    %89 = vector.shape_cast %88 : vector<16x16x4xf32> to vector<256x4xf32>
    %c3_100 = arith.constant 3 : index
    %c0_101 = arith.constant 0 : index
    %c0_102 = arith.constant 0 : index
    %90 = vector.load %arg4[%c3_100, %c0_101, %c0_102] : memref<9x4x4xf32, #tpu.memory_space<vmem>>, vector<1x4x4xf32>
    %91 = vector.shape_cast %90 : vector<1x4x4xf32> to vector<4x4xf32>
    %cst_103 = arith.constant dense<0.000000e+00> : vector<256x4xf32>
    %92 = tpu.matmul %89, %91, %cst_103 {dimension_numbers = #tpu.dot_dimension_numbers<[1], [0], [0], [1], [0, 0, 1, 1], [], []>} : vector<256x4xf32>, vector<4x4xf32>, vector<256x4xf32> -> vector<256x4xf32>
    %93 = arith.addf %87, %92 : vector<256x4xf32>
    %c1_104 = arith.constant 1 : index
    %c1_105 = arith.constant 1 : index
    %c0_106 = arith.constant 0 : index
    %94 = vector.load %arg8[%c1_104, %c1_105, %c0_106] : memref<18x18x4xf32, #tpu.memory_space<vmem>>, vector<16x16x4xf32>
    %95 = vector.shape_cast %94 : vector<16x16x4xf32> to vector<256x4xf32>
    %c4_107 = arith.constant 4 : index
    %c0_108 = arith.constant 0 : index
    %c0_109 = arith.constant 0 : index
    %96 = vector.load %arg4[%c4_107, %c0_108, %c0_109] : memref<9x4x4xf32, #tpu.memory_space<vmem>>, vector<1x4x4xf32>
    %97 = vector.shape_cast %96 : vector<1x4x4xf32> to vector<4x4xf32>
    %cst_110 = arith.constant dense<0.000000e+00> : vector<256x4xf32>
    %98 = tpu.matmul %95, %97, %cst_110 {dimension_numbers = #tpu.dot_dimension_numbers<[1], [0], [0], [1], [0, 0, 1, 1], [], []>} : vector<256x4xf32>, vector<4x4xf32>, vector<256x4xf32> -> vector<256x4xf32>
    %99 = arith.addf %93, %98 : vector<256x4xf32>
    %c1_111 = arith.constant 1 : index
    %c2_112 = arith.constant 2 : index
    %c0_113 = arith.constant 0 : index
    %100 = vector.load %arg8[%c1_111, %c2_112, %c0_113] : memref<18x18x4xf32, #tpu.memory_space<vmem>>, vector<16x16x4xf32>
    %101 = vector.shape_cast %100 : vector<16x16x4xf32> to vector<256x4xf32>
    %c5_114 = arith.constant 5 : index
    %c0_115 = arith.constant 0 : index
    %c0_116 = arith.constant 0 : index
    %102 = vector.load %arg4[%c5_114, %c0_115, %c0_116] : memref<9x4x4xf32, #tpu.memory_space<vmem>>, vector<1x4x4xf32>
    %103 = vector.shape_cast %102 : vector<1x4x4xf32> to vector<4x4xf32>
    %cst_117 = arith.constant dense<0.000000e+00> : vector<256x4xf32>
    %104 = tpu.matmul %101, %103, %cst_117 {dimension_numbers = #tpu.dot_dimension_numbers<[1], [0], [0], [1], [0, 0, 1, 1], [], []>} : vector<256x4xf32>, vector<4x4xf32>, vector<256x4xf32> -> vector<256x4xf32>
    %105 = arith.addf %99, %104 : vector<256x4xf32>
    %c2_118 = arith.constant 2 : index
    %c0_119 = arith.constant 0 : index
    %c0_120 = arith.constant 0 : index
    %106 = vector.load %arg8[%c2_118, %c0_119, %c0_120] : memref<18x18x4xf32, #tpu.memory_space<vmem>>, vector<16x16x4xf32>
    %107 = vector.shape_cast %106 : vector<16x16x4xf32> to vector<256x4xf32>
    %c6_121 = arith.constant 6 : index
    %c0_122 = arith.constant 0 : index
    %c0_123 = arith.constant 0 : index
    %108 = vector.load %arg4[%c6_121, %c0_122, %c0_123] : memref<9x4x4xf32, #tpu.memory_space<vmem>>, vector<1x4x4xf32>
    %109 = vector.shape_cast %108 : vector<1x4x4xf32> to vector<4x4xf32>
    %cst_124 = arith.constant dense<0.000000e+00> : vector<256x4xf32>
    %110 = tpu.matmul %107, %109, %cst_124 {dimension_numbers = #tpu.dot_dimension_numbers<[1], [0], [0], [1], [0, 0, 1, 1], [], []>} : vector<256x4xf32>, vector<4x4xf32>, vector<256x4xf32> -> vector<256x4xf32>
    %111 = arith.addf %105, %110 : vector<256x4xf32>
    %c2_125 = arith.constant 2 : index
    %c1_126 = arith.constant 1 : index
    %c0_127 = arith.constant 0 : index
    %112 = vector.load %arg8[%c2_125, %c1_126, %c0_127] : memref<18x18x4xf32, #tpu.memory_space<vmem>>, vector<16x16x4xf32>
    %113 = vector.shape_cast %112 : vector<16x16x4xf32> to vector<256x4xf32>
    %c7_128 = arith.constant 7 : index
    %c0_129 = arith.constant 0 : index
    %c0_130 = arith.constant 0 : index
    %114 = vector.load %arg4[%c7_128, %c0_129, %c0_130] : memref<9x4x4xf32, #tpu.memory_space<vmem>>, vector<1x4x4xf32>
    %115 = vector.shape_cast %114 : vector<1x4x4xf32> to vector<4x4xf32>
    %cst_131 = arith.constant dense<0.000000e+00> : vector<256x4xf32>
    %116 = tpu.matmul %113, %115, %cst_131 {dimension_numbers = #tpu.dot_dimension_numbers<[1], [0], [0], [1], [0, 0, 1, 1], [], []>} : vector<256x4xf32>, vector<4x4xf32>, vector<256x4xf32> -> vector<256x4xf32>
    %117 = arith.addf %111, %116 : vector<256x4xf32>
    %c2_132 = arith.constant 2 : index
    %c2_133 = arith.constant 2 : index
    %c0_134 = arith.constant 0 : index
    %118 = vector.load %arg8[%c2_132, %c2_133, %c0_134] : memref<18x18x4xf32, #tpu.memory_space<vmem>>, vector<16x16x4xf32>
    %119 = vector.shape_cast %118 : vector<16x16x4xf32> to vector<256x4xf32>
    %c8_135 = arith.constant 8 : index
    %c0_136 = arith.constant 0 : index
    %c0_137 = arith.constant 0 : index
    %120 = vector.load %arg4[%c8_135, %c0_136, %c0_137] : memref<9x4x4xf32, #tpu.memory_space<vmem>>, vector<1x4x4xf32>
    %121 = vector.shape_cast %120 : vector<1x4x4xf32> to vector<4x4xf32>
    %cst_138 = arith.constant dense<0.000000e+00> : vector<256x4xf32>
    %122 = tpu.matmul %119, %121, %cst_138 {dimension_numbers = #tpu.dot_dimension_numbers<[1], [0], [0], [1], [0, 0, 1, 1], [], []>} : vector<256x4xf32>, vector<4x4xf32>, vector<256x4xf32> -> vector<256x4xf32>
    %123 = arith.addf %117, %122 : vector<256x4xf32>
    %c0_139 = arith.constant 0 : index
    %c0_140 = arith.constant 0 : index
    %124 = vector.load %arg5[%c0_139, %c0_140] : memref<1x4xf32, #tpu.memory_space<vmem>>, vector<1x4xf32>
    %125 = vector.broadcast %124 : vector<1x4xf32> to vector<256x4xf32>
    %126 = arith.addf %123, %125 : vector<256x4xf32>
    %127 = vector.shape_cast %1 : vector<16x16x4xf32> to vector<256x4xf32>
    %128 = arith.addf %126, %127 : vector<256x4xf32>
    %129 = vector.shape_cast %128 : vector<256x4xf32> to vector<1x16x16x4xf32>
    %c0_141 = arith.constant 0 : index
    %c0_142 = arith.constant 0 : index
    %c0_143 = arith.constant 0 : index
    %c0_144 = arith.constant 0 : index
    %130 = vector.load %arg6[%c0_141, %c0_142, %c0_143, %c0_144] : memref<1x16x16x4xf32, #tpu.memory_space<vmem>>, vector<1x16x16x4xf32>
    tpu.vector_store %arg6[%c0_141, %c0_142, %c0_143, %c0_144], %129 {strides = array<i32>} : memref<1x16x16x4xf32, #tpu.memory_space<vmem>>, vector<1x16x16x4xf32>,
    return
  }
  func.func @transform_0(%arg0: i32) -> (i32, i32, i32, i32) {
    %c0_i32 = arith.constant 0 : i32
    %c0_i32_0 = arith.constant 0 : i32
    %c0_i32_1 = arith.constant 0 : i32
    %c0_i32_2 = arith.constant 0 : i32
    return %arg0, %c0_i32, %c0_i32_0, %c0_i32_1 : i32, i32, i32, i32
  }
  func.func @transform_1(%arg0: i32) -> (i32, i32, i32) {
    %c0_i32 = arith.constant 0 : i32
    %c0_i32_0 = arith.constant 0 : i32
    %c0_i32_1 = arith.constant 0 : i32
    %c0_i32_2 = arith.constant 0 : i32
    return %c0_i32, %c0_i32_0, %c0_i32_1 : i32, i32, i32
  }
  func.func @transform_2(%arg0: i32) -> (i32, i32) {
    %c0_i32 = arith.constant 0 : i32
    %c0_i32_0 = arith.constant 0 : i32
    %c0_i32_1 = arith.constant 0 : i32
    return %c0_i32, %c0_i32_0 : i32, i32
  }
  func.func @transform_3(%arg0: i32) -> (i32, i32, i32) {
    %c0_i32 = arith.constant 0 : i32
    %c0_i32_0 = arith.constant 0 : i32
    %c0_i32_1 = arith.constant 0 : i32
    %c0_i32_2 = arith.constant 0 : i32
    return %c0_i32, %c0_i32_0, %c0_i32_1 : i32, i32, i32
  }
  func.func @transform_4(%arg0: i32) -> (i32, i32) {
    %c0_i32 = arith.constant 0 : i32
    %c0_i32_0 = arith.constant 0 : i32
    %c0_i32_1 = arith.constant 0 : i32
    return %c0_i32, %c0_i32_0 : i32, i32
  }
  func.func @transform_5(%arg0: i32) -> (i32, i32, i32, i32) {
    %c0_i32 = arith.constant 0 : i32
    %c0_i32_0 = arith.constant 0 : i32
    %c0_i32_1 = arith.constant 0 : i32
    %c0_i32_2 = arith.constant 0 : i32
    return %arg0, %c0_i32, %c0_i32_0, %c0_i32_1 : i32, i32, i32, i32
  }
}

</mosaic_0001>

<llo_original>
// kernel: basic_block_forward.1
$region0: #{basic_block_forward.1}
  #allocation0 [shape = 'u32[]', space=smem, size = 0x4, offset = 0x4, fixed_abs, tag = 'smem constant byte address 0x4 - core index']
  #allocation1 [shape = 'u32[72,128]{1,0:T(1,128)}', space=vmem, size = 0x9000, scoped, tag = 'internal scratch']
  #allocation2 [shape = 'f32[18,18,4]{2,1,0:T(8,128)}', space=vmem, size = 0x36000, scoped, tag = 'scratch operand']
  #allocation3 [shape = 'f32[18,18,4]{2,1,0:T(8,128)}', space=vmem, size = 0x36000, scoped, tag = 'scratch operand']
  %s0 = inlined_call_operand.vmem [shape: f32[2,16,16,4], index: 0, kind: input, shape index: {}]
  %s1 = inlined_call_operand.vmem [shape: f32[9,4,4], index: 1, kind: input, shape index: {}]
  %s2 = inlined_call_operand.vmem [shape: f32[1,4], index: 2, kind: input, shape index: {}]
  %s3 = inlined_call_operand.vmem [shape: f32[9,4,4], index: 3, kind: input, shape index: {}]
  %s4 = inlined_call_operand.vmem [shape: f32[1,4], index: 4, kind: input, shape index: {}]
  %s5 = inlined_call_operand.vmem [shape: f32[2,16,16,4], index: 5, kind: output, shape index: {}]
  %s6 = sld [smem:[#allocation0]]
  $region53: #{basic_block_forward.1} parent=0
    _
  %s8 = ssub.s32 1, %s6
  %s9 = scalar_select 0, %s8, %s6
  loop: start=0, step=1, limit=4
  $region2: #{basic_block_forward.1} parent=0 // loop_pre_header
    _
  $region3: #{basic_block_forward.1} parent=0 // loop_header
    %s11 = sphi 0, %s15
    %p12 = scmp.ge.s32.totalorder %s11, 4
    %s21 = sphi 0, %s23
    %s24 = sphi 0, %s21
    %s25 = sphi 0, %s24
    %s41 = sphi 0, %s25
    %s45 = sphi 0, %s45
    %s47 = sphi 0, %s45
    %s48 = sphi 0, %s47
    %s62 = sphi 0, %s48
    %s66 = sphi 0, %s66
    %s68 = sphi 0, %s66
    %s69 = sphi 0, %s68
    %s83 = sphi 0, %s69
    %s87 = sphi 0, %s87
    %s89 = sphi 0, %s87
    %s90 = sphi 0, %s89
    %s104 = sphi 0, %s90
    %s108 = sphi 0, %s108
    %s110 = sphi 0, %s108
    %s111 = sphi 0, %s110
    %s125 = sphi 0, %s111
    %s131 = sphi 0, %s133
    %s134 = sphi 0, %s131
    %s135 = sphi 0, %s134
    %s151 = sphi 0, %s135
  $region4: #{basic_block_forward.1} parent=0 // loop_header_branch
    %14 = sbr.rel (%p12) target = $region8
  $region5: #{basic_block_forward.1} parent=0 // loop_body
    %s16 = ssub.s32 %s11, 1
    %s17 = ssub.s32 %s11, 2
    %s18 = sadd.s32 %s11, 1
    %s19 = ssub.s32 %s11, %s18
    %p20 = scmp.eq.s32.totalorder %s19, 0
    %s22 = sadd.s32 %s21, 1
    %s23 = scalar_select %p20, %s21, %s22
    %p26 = pneg %p20
    %p27 = scmp.eq.s32.totalorder %s11, 1
    %p28 = por %p26, %p27
    %p29 = scmp.ne.s32.totalorder %s21, %s24
    %p30 = scmp.eq.s32.totalorder %s11, 0
    %p31 = por %p29, %p30
    %p32 = scmp.ne.s32.totalorder %s21, %s24
    %p33 = scmp.eq.s32.totalorder %s16, 1
    %p34 = por %p32, %p33
    %p35 = scmp.ne.s32.totalorder %s24, %s25
    %p36 = scmp.eq.s32.totalorder %s16, 0
    %p37 = por %p35, %p36
    %p38 = scmp.ne.s32.totalorder %s24, %s25
    %p39 = scmp.eq.s32.totalorder %s17, 1
    %p40 = por %p38, %p39
    %p42 = scmp.ne.s32.totalorder %s25, %s41
    %p43 = scmp.eq.s32.totalorder %s17, 0
    %p44 = por %p42, %p43
    %s46 = sadd.s32 %s45, 1
    %p49 = scmp.eq.s32.totalorder %s11, 1
    %p50 = scmp.ne.s32.totalorder %s45, %s47
    %p51 = scmp.eq.s32.totalorder %s11, 0
    %p52 = por %p50, %p51
    %p53 = scmp.ne.s32.totalorder %s45, %s47
    %p54 = scmp.eq.s32.totalorder %s16, 1
    %p55 = por %p53, %p54
    %p56 = scmp.ne.s32.totalorder %s47, %s48
    %p57 = scmp.eq.s32.totalorder %s16, 0
    %p58 = por %p56, %p57
    %p59 = scmp.ne.s32.totalorder %s47, %s48
    %p60 = scmp.eq.s32.totalorder %s17, 1
    %p61 = por %p59, %p60
    %p63 = scmp.ne.s32.totalorder %s48, %s62
    %p64 = scmp.eq.s32.totalorder %s17, 0
    %p65 = por %p63, %p64
    %s67 = sadd.s32 %s66, 1
    %p70 = scmp.eq.s32.totalorder %s11, 1
    %p71 = scmp.ne.s32.totalorder %s66, %s68
    %p72 = scmp.eq.s32.totalorder %s11, 0
    %p73 = por %p71, %p72
    %p74 = scmp.ne.s32.totalorder %s66, %s68
    %p75 = scmp.eq.s32.totalorder %s16, 1
    %p76 = por %p74, %p75
    %p77 = scmp.ne.s32.totalorder %s68, %s69
    %p78 = scmp.eq.s32.totalorder %s16, 0
    %p79 = por %p77, %p78
    %p80 = scmp.ne.s32.totalorder %s68, %s69
    %p81 = scmp.eq.s32.totalorder %s17, 1
    %p82 = por %p80, %p81
    %p84 = scmp.ne.s32.totalorder %s69, %s83
    %p85 = scmp.eq.s32.totalorder %s17, 0
    %p86 = por %p84, %p85
    %s88 = sadd.s32 %s87, 1
    %p91 = scmp.eq.s32.totalorder %s11, 1
    %p92 = scmp.ne.s32.totalorder %s87, %s89
    %p93 = scmp.eq.s32.totalorder %s11, 0
    %p94 = por %p92, %p93
    %p95 = scmp.ne.s32.totalorder %s87, %s89
    %p96 = scmp.eq.s32.totalorder %s16, 1
    %p97 = por %p95, %p96
    %p98 = scmp.ne.s32.totalorder %s89, %s90
    %p99 = scmp.eq.s32.totalorder %s16, 0
    %p100 = por %p98, %p99
    %p101 = scmp.ne.s32.totalorder %s89, %s90
    %p102 = scmp.eq.s32.totalorder %s17, 1
    %p103 = por %p101, %p102
    %p105 = scmp.ne.s32.totalorder %s90, %s104
    %p106 = scmp.eq.s32.totalorder %s17, 0
    %p107 = por %p105, %p106
    %s109 = sadd.s32 %s108, 1
    %p112 = scmp.eq.s32.totalorder %s11, 1
    %p113 = scmp.ne.s32.totalorder %s108, %s110
    %p114 = scmp.eq.s32.totalorder %s11, 0
    %p115 = por %p113, %p114
    %p116 = scmp.ne.s32.totalorder %s108, %s110
    %p117 = scmp.eq.s32.totalorder %s16, 1
    %p118 = por %p116, %p117
    %p119 = scmp.ne.s32.totalorder %s110, %s111
    %p120 = scmp.eq.s32.totalorder %s16, 0
    %p121 = por %p119, %p120
    %p122 = scmp.ne.s32.totalorder %s110, %s111
    %p123 = scmp.eq.s32.totalorder %s17, 1
    %p124 = por %p122, %p123
    %p126 = scmp.ne.s32.totalorder %s111, %s125
    %p127 = scmp.eq.s32.totalorder %s17, 0
    %p128 = por %p126, %p127
    %s129 = ssub.s32 %s11, %s18
    %p130 = scmp.eq.s32.totalorder %s129, 0
    %s132 = sadd.s32 %s131, 1
    %s133 = scalar_select %p130, %s131, %s132
    %p136 = pneg %p130
    %p137 = scmp.eq.s32.totalorder %s11, 1
    %p138 = por %p136, %p137
    %p139 = scmp.ne.s32.totalorder %s131, %s134
    %p140 = scmp.eq.s32.totalorder %s11, 0
    %p141 = por %p139, %p140
    %p142 = scmp.ne.s32.totalorder %s131, %s134
    %p143 = scmp.eq.s32.totalorder %s16, 1
    %p144 = por %p142, %p143
    %p145 = scmp.ne.s32.totalorder %s134, %s135
    %p146 = scmp.eq.s32.totalorder %s16, 0
    %p147 = por %p145, %p146
    %p148 = scmp.ne.s32.totalorder %s134, %s135
    %p149 = scmp.eq.s32.totalorder %s17, 1
    %p150 = por %p148, %p149
    %p152 = scmp.ne.s32.totalorder %s135, %s151
    %p153 = scmp.eq.s32.totalorder %s17, 0
    %p154 = por %p152, %p153
    %p155 = scmp.le.s32.totalorder 1, %s11
    %p156 = scmp.lt.s32.totalorder %s11, 3
    %p157 = pnand %p155, %p156
    %p158 = pneg %p157
    // Predicated region
    $region9: #{basic_block_forward.1} parent=5 // pred_check
      _
    $region10: #{basic_block_forward.1} parent=5 // pred_check_branch
      %160 = sbr.rel (%p157) target = $region12
    $region11: #{basic_block_forward.1} parent=5 // pred_region
      %s161 = ssub.s32 %s11, 1
      // Predicated region
      $region13: #{basic_block_forward.1} parent=11 // pred_check
        %p162 = pneg %p58
      $region14: #{basic_block_forward.1} parent=11 // pred_check_branch
        %164 = sbr.rel (%p162) target = $region16
      $region15: #{basic_block_forward.1} parent=11 // pred_region
        _
      $region16: #{basic_block_forward.1} parent=11 // pred_fallthru
        _
      // Predicated region
      $region17: #{basic_block_forward.1} parent=11 // pred_check
        %p165 = pneg %p79
      $region18: #{basic_block_forward.1} parent=11 // pred_check_branch
        %167 = sbr.rel (%p165) target = $region20
      $region19: #{basic_block_forward.1} parent=11 // pred_region
        _
      $region20: #{basic_block_forward.1} parent=11 // pred_fallthru
        _
      // Predicated region
      $region21: #{basic_block_forward.1} parent=11 // pred_check
        %p168 = pneg %p100
      $region22: #{basic_block_forward.1} parent=11 // pred_check_branch
        %170 = sbr.rel (%p168) target = $region24
      $region23: #{basic_block_forward.1} parent=11 // pred_region
        _
      $region24: #{basic_block_forward.1} parent=11 // pred_fallthru
        _
      // Predicated region
      $region25: #{basic_block_forward.1} parent=11 // pred_check
        %p171 = pneg %p121
      $region26: #{basic_block_forward.1} parent=11 // pred_check_branch
        %173 = sbr.rel (%p171) target = $region28
      $region27: #{basic_block_forward.1} parent=11 // pred_region
        _
      $region28: #{basic_block_forward.1} parent=11 // pred_fallthru
        _
    $region12: #{basic_block_forward.1} parent=5 // pred_fallthru
      _
    %p174 = scmp.lt.s32.totalorder %s11, 2
    // Predicated region
    $region29: #{basic_block_forward.1} parent=5 // pred_check
      %p175 = pneg %p174
    $region30: #{basic_block_forward.1} parent=5 // pred_check_branch
      %177 = sbr.rel (%p175) target = $region32
    $region31: #{basic_block_forward.1} parent=5 // pred_region
      // Predicated region
      $region33: #{basic_block_forward.1} parent=31 // pred_check
        %p178 = pneg %p31
      $region34: #{basic_block_forward.1} parent=31 // pred_check_branch
        %180 = sbr.rel (%p178) target = $region36
      $region35: #{basic_block_forward.1} parent=31 // pred_region
        %p181 = scmp.lt.s32.totalorder %s11, 1
        %s182 = scalar_select %p181, %s11, 1
        %s183 = smul.addr %s182, 32
        %s184 = smul.addr %s183, 8
        %s185 = scalar_lea.vmem %s0, %s184
      $region36: #{basic_block_forward.1} parent=31 // pred_fallthru
        _
    $region32: #{basic_block_forward.1} parent=5 // pred_fallthru
      _
    %p186 = scmp.le.s32.totalorder 1, %s11
    %p187 = scmp.lt.s32.totalorder %s11, 3
    %p188 = pnand %p186, %p187
    %p189 = pneg %p188
    // Predicated region
    $region37: #{basic_block_forward.1} parent=5 // pred_check
      _
    $region38: #{basic_block_forward.1} parent=5 // pred_check_branch
      %191 = sbr.rel (%p188) target = $region40
    $region39: #{basic_block_forward.1} parent=5 // pred_region
      %s192 = ssub.s32 %s11, 1
      %p193 = scmp.lt.s32.totalorder %s16, 1
      %s194 = scalar_select %p193, %s16, 1
      %s195 = smul.addr %s194, 32
      %s196 = smul.addr %s195, 8
      %s197 = scalar_lea.vmem %s0, %s196
      %p198 = pneg %p37
      %p199 = pneg %p34
      %p200 = pneg %p58
      %p201 = pneg %p55
      %p202 = pneg %p79
      %p203 = pneg %p76
      %p204 = pneg %p100
      %p205 = pneg %p97
      %p206 = pneg %p121
      %p207 = pneg %p118
      %p208 = pneg %p147
      %p209 = pneg %p144
      %p210 = scmp.lt.s32.totalorder %s16, 1
      %s211 = scalar_select %p210, %s16, 1
      %s212 = smul.addr %s211, 32
      %s213 = smul.addr %s212, 8
      %s214 = scalar_lea.vmem %s5, %s213
      %p215 = scmp.lt.s32.totalorder %s16, 1
      %s216 = scalar_select %p215, %s16, 1
      %s217 = smul.addr %s216, 32
      %s218 = smul.addr %s217, 8
      %s219 = scalar_lea.vmem %s0, %s218
      %p220 = scmp.lt.s32.totalorder %s16, 1
      %s221 = scalar_select %p220, %s16, 1
      %s222 = smul.addr %s221, 32
      %s223 = smul.addr %s222, 8
      %s224 = scalar_lea.vmem %s5, %s223
      %v225 = vld [vmem:[%s219] sm:$0xff]
      %v226 = vld [vmem:[%s219 + $0x8] sm:$0xff]
      %v227 = vld [vmem:[%s219 + $0x10] sm:$0xff]
      %v228 = vld [vmem:[%s219 + $0x18] sm:$0xff]
      %v229 = vld [vmem:[%s219 + $0x20] sm:$0xff]
      %v230 = vld [vmem:[%s219 + $0x28] sm:$0xff]
      %v231 = vld [vmem:[%s219 + $0x30] sm:$0xff]
      %v232 = vld [vmem:[%s219 + $0x38] sm:$0xff]
      %v233 = vld [vmem:[%s219 + $0x40] sm:$0xff]
      %v234 = vld [vmem:[%s219 + $0x48] sm:$0xff]
      %v235 = vld [vmem:[%s219 + $0x50] sm:$0xff]
      %v236 = vld [vmem:[%s219 + $0x58] sm:$0xff]
      %v237 = vld [vmem:[%s219 + $0x60] sm:$0xff]
      %v238 = vld [vmem:[%s219 + $0x68] sm:$0xff]
      %v239 = vld [vmem:[%s219 + $0x70] sm:$0xff]
      %v240 = vld [vmem:[%s219 + $0x78] sm:$0xff]
      %v241 = vld [vmem:[%s219 + $0x80] sm:$0xff]
      %v242 = vld [vmem:[%s219 + $0x88] sm:$0xff]
      %v243 = vld [vmem:[%s219 + $0x90] sm:$0xff]
      %v244 = vld [vmem:[%s219 + $0x98] sm:$0xff]
      %v245 = vld [vmem:[%s219 + $0xa0] sm:$0xff]
      %v246 = vld [vmem:[%s219 + $0xa8] sm:$0xff]
      %v247 = vld [vmem:[%s219 + $0xb0] sm:$0xff]
      %v248 = vld [vmem:[%s219 + $0xb8] sm:$0xff]
      %v249 = vld [vmem:[%s219 + $0xc0] sm:$0xff]
      %v250 = vld [vmem:[%s219 + $0xc8] sm:$0xff]
      %v251 = vld [vmem:[%s219 + $0xd0] sm:$0xff]
      %v252 = vld [vmem:[%s219 + $0xd8] sm:$0xff]
      %v253 = vld [vmem:[%s219 + $0xe0] sm:$0xff]
      %v254 = vld [vmem:[%s219 + $0xe8] sm:$0xff]
      %v255 = vld [vmem:[%s219 + $0xf0] sm:$0xff]
      %v256 = vld [vmem:[%s219 + $0xf8] sm:$0xff]
      %vm257 = vcmask 31744
      %258 = vst.msk [vmem:[#allocation2] sm:$0xff] %vm257, 0.0
      %259 = vst.msk [vmem:[#allocation2 + $0x8] sm:$0xff] %vm257, 0.0
      %vm260 = vcmask 25600
      %261 = vst.msk [vmem:[#allocation2 + $0x10] sm:$0x3] %vm260, 0.0
      %262 = vst.msk [vmem:[#allocation2 + $0x18] sm:$0xff] %vm257, 0.0
      %263 = vst.msk [vmem:[#allocation2 + $0x20] sm:$0xff] %vm257, 0.0
      %264 = vst.msk [vmem:[#allocation2 + $0x28] sm:$0x3] %vm260, 0.0
      %265 = vst.msk [vmem:[#allocation2 + $0x30] sm:$0xff] %vm257, 0.0
      %266 = vst.msk [vmem:[#allocation2 + $0x38] sm:$0xff] %vm257, 0.0
      %267 = vst.msk [vmem:[#allocation2 + $0x40] sm:$0x3] %vm260, 0.0
      %268 = vst.msk [vmem:[#allocation2 + $0x48] sm:$0xff] %vm257, 0.0
      %269 = vst.msk [vmem:[#allocation2 + $0x50] sm:$0xff] %vm257, 0.0
      %270 = vst.msk [vmem:[#allocation2 + $0x58] sm:$0x3] %vm260, 0.0
      %271 = vst.msk [vmem:[#allocation2 + $0x60] sm:$0xff] %vm257, 0.0
      %272 = vst.msk [vmem:[#allocation2 + $0x68] sm:$0xff] %vm257, 0.0
      %273 = vst.msk [vmem:[#allocation2 + $0x70] sm:$0x3] %vm260, 0.0
      %274 = vst.msk [vmem:[#allocation2 + $0x78] sm:$0xff] %vm257, 0.0
      %275 = vst.msk [vmem:[#allocation2 + $0x80] sm:$0xff] %vm257, 0.0
      %276 = vst.msk [vmem:[#allocation2 + $0x88] sm:$0x3] %vm260, 0.0
      %277 = vst.msk [vmem:[#allocation2 + $0x90] sm:$0xff] %vm257, 0.0
      %278 = vst.msk [vmem:[#allocation2 + $0x98] sm:$0xff] %vm257, 0.0
      %279 = vst.msk [vmem:[#allocation2 + $0xa0] sm:$0x3] %vm260, 0.0
      %280 = vst.msk [vmem:[#allocation2 + $0xa8] sm:$0xff] %vm257, 0.0
      %281 = vst.msk [vmem:[#allocation2 + $0xb0] sm:$0xff] %vm257, 0.0
      %282 = vst.msk [vmem:[#allocation2 + $0xb8] sm:$0x3] %vm260, 0.0
      %283 = vst.msk [vmem:[#allocation2 + $0xc0] sm:$0xff] %vm257, 0.0
      %284 = vst.msk [vmem:[#allocation2 + $0xc8] sm:$0xff] %vm257, 0.0
      %285 = vst.msk [vmem:[#allocation2 + $0xd0] sm:$0x3] %vm260, 0.0
      %286 = vst.msk [vmem:[#allocation2 + $0xd8] sm:$0xff] %vm257, 0.0
      %287 = vst.msk [vmem:[#allocation2 + $0xe0] sm:$0xff] %vm257, 0.0
      %288 = vst.msk [vmem:[#allocation2 + $0xe8] sm:$0x3] %vm260, 0.0
      %289 = vst.msk [vmem:[#allocation2 + $0xf0] sm:$0xff] %vm257, 0.0
      %290 = vst.msk [vmem:[#allocation2 + $0xf8] sm:$0xff] %vm257, 0.0
      %291 = vst.msk [vmem:[#allocation2 + $0x100] sm:$0x3] %vm260, 0.0
      %292 = vst.msk [vmem:[#allocation2 + $0x108] sm:$0xff] %vm257, 0.0
      %293 = vst.msk [vmem:[#allocation2 + $0x110] sm:$0xff] %vm257, 0.0
      %294 = vst.msk [vmem:[#allocation2 + $0x118] sm:$0x3] %vm260, 0.0
      %295 = vst.msk [vmem:[#allocation2 + $0x120] sm:$0xff] %vm257, 0.0
      %296 = vst.msk [vmem:[#allocation2 + $0x128] sm:$0xff] %vm257, 0.0
      %297 = vst.msk [vmem:[#allocation2 + $0x130] sm:$0x3] %vm260, 0.0
      %298 = vst.msk [vmem:[#allocation2 + $0x138] sm:$0xff] %vm257, 0.0
      %299 = vst.msk [vmem:[#allocation2 + $0x140] sm:$0xff] %vm257, 0.0
      %300 = vst.msk [vmem:[#allocation2 + $0x148] sm:$0x3] %vm260, 0.0
      %301 = vst.msk [vmem:[#allocation2 + $0x150] sm:$0xff] %vm257, 0.0
      %302 = vst.msk [vmem:[#allocation2 + $0x158] sm:$0xff] %vm257, 0.0
      %303 = vst.msk [vmem:[#allocation2 + $0x160] sm:$0x3] %vm260, 0.0
      %304 = vst.msk [vmem:[#allocation2 + $0x168] sm:$0xff] %vm257, 0.0
      %305 = vst.msk [vmem:[#allocation2 + $0x170] sm:$0xff] %vm257, 0.0
      %306 = vst.msk [vmem:[#allocation2 + $0x178] sm:$0x3] %vm260, 0.0
      %307 = vst.msk [vmem:[#allocation2 + $0x180] sm:$0xff] %vm257, 0.0
      %308 = vst.msk [vmem:[#allocation2 + $0x188] sm:$0xff] %vm257, 0.0
      %309 = vst.msk [vmem:[#allocation2 + $0x190] sm:$0x3] %vm260, 0.0
      %310 = vst.msk [vmem:[#allocation2 + $0x198] sm:$0xff] %vm257, 0.0
      %311 = vst.msk [vmem:[#allocation2 + $0x1a0] sm:$0xff] %vm257, 0.0
      %312 = vst.msk [vmem:[#allocation2 + $0x1a8] sm:$0x3] %vm260, 0.0
      %s313 = scalar_lea.vmem [#allocation2], 24
      %314 = vst.msk [vmem:[%s313 + $0x1] sm:$0xff] %vm257, %v225
      %315 = vst.msk [vmem:[%s313 + $0x9] sm:$0xff] %vm257, %v226
      %316 = vst.msk [vmem:[%s313 + $0x19] sm:$0xff] %vm257, %v227
      %317 = vst.msk [vmem:[%s313 + $0x21] sm:$0xff] %vm257, %v228
      %318 = vst.msk [vmem:[%s313 + $0x31] sm:$0xff] %vm257, %v229
      %319 = vst.msk [vmem:[%s313 + $0x39] sm:$0xff] %vm257, %v230
      %320 = vst.msk [vmem:[%s313 + $0x49] sm:$0xff] %vm257, %v231
      %321 = vst.msk [vmem:[%s313 + $0x51] sm:$0xff] %vm257, %v232
      %322 = vst.msk [vmem:[%s313 + $0x61] sm:$0xff] %vm257, %v233
      %323 = vst.msk [vmem:[%s313 + $0x69] sm:$0xff] %vm257, %v234
      %324 = vst.msk [vmem:[%s313 + $0x79] sm:$0xff] %vm257, %v235
      %325 = vst.msk [vmem:[%s313 + $0x81] sm:$0xff] %vm257, %v236
      %326 = vst.msk [vmem:[%s313 + $0x91] sm:$0xff] %vm257, %v237
      %327 = vst.msk [vmem:[%s313 + $0x99] sm:$0xff] %vm257, %v238
      %328 = vst.msk [vmem:[%s313 + $0xa9] sm:$0xff] %vm257, %v239
      %329 = vst.msk [vmem:[%s313 + $0xb1] sm:$0xff] %vm257, %v240
      %330 = vst.msk [vmem:[%s313 + $0xc1] sm:$0xff] %vm257, %v241
      %331 = vst.msk [vmem:[%s313 + $0xc9] sm:$0xff] %vm257, %v242
      %332 = vst.msk [vmem:[%s313 + $0xd9] sm:$0xff] %vm257, %v243
      %333 = vst.msk [vmem:[%s313 + $0xe1] sm:$0xff] %vm257, %v244
      %334 = vst.msk [vmem:[%s313 + $0xf1] sm:$0xff] %vm257, %v245
      %335 = vst.msk [vmem:[%s313 + $0xf9] sm:$0xff] %vm257, %v246
      %336 = vst.msk [vmem:[%s313 + $0x109] sm:$0xff] %vm257, %v247
      %337 = vst.msk [vmem:[%s313 + $0x111] sm:$0xff] %vm257, %v248
      %338 = vst.msk [vmem:[%s313 + $0x121] sm:$0xff] %vm257, %v249
      %339 = vst.msk [vmem:[%s313 + $0x129] sm:$0xff] %vm257, %v250
      %340 = vst.msk [vmem:[%s313 + $0x139] sm:$0xff] %vm257, %v251
      %341 = vst.msk [vmem:[%s313 + $0x141] sm:$0xff] %vm257, %v252
      %342 = vst.msk [vmem:[%s313 + $0x151] sm:$0xff] %vm257, %v253
      %343 = vst.msk [vmem:[%s313 + $0x159] sm:$0xff] %vm257, %v254
      %344 = vst.msk [vmem:[%s313 + $0x169] sm:$0xff] %vm257, %v255
      %345 = vst.msk [vmem:[%s313 + $0x171] sm:$0xff] %vm257, %v256
      %v346 = vld [vmem:[#allocation2] sm:$0xff]
      %v347 = vld [vmem:[#allocation2 + $0x8] sm:$0xff]
      %v348 = vld [vmem:[#allocation2 + $0x18] sm:$0xff]
      %v349 = vld [vmem:[#allocation2 + $0x20] sm:$0xff]
      %v350 = vld [vmem:[#allocation2 + $0x30] sm:$0xff]
      %v351 = vld [vmem:[#allocation2 + $0x38] sm:$0xff]
      %v352 = vld [vmem:[#allocation2 + $0x48] sm:$0xff]
      %v353 = vld [vmem:[#allocation2 + $0x50] sm:$0xff]
      %v354 = vld [vmem:[#allocation2 + $0x60] sm:$0xff]
      %v355 = vld [vmem:[#allocation2 + $0x68] sm:$0xff]
      %v356 = vld [vmem:[#allocation2 + $0x78] sm:$0xff]
      %v357 = vld [vmem:[#allocation2 + $0x80] sm:$0xff]
      %v358 = vld [vmem:[#allocation2 + $0x90] sm:$0xff]
      %v359 = vld [vmem:[#allocation2 + $0x98] sm:$0xff]
      %v360 = vld [vmem:[#allocation2 + $0xa8] sm:$0xff]
      %v361 = vld [vmem:[#allocation2 + $0xb0] sm:$0xff]
      %v362 = vld [vmem:[#allocation2 + $0xc0] sm:$0xff]
      %v363 = vld [vmem:[#allocation2 + $0xc8] sm:$0xff]
      %v364 = vld [vmem:[#allocation2 + $0xd8] sm:$0xff]
      %v365 = vld [vmem:[#allocation2 + $0xe0] sm:$0xff]
      %v366 = vld [vmem:[#allocation2 + $0xf0] sm:$0xff]
      %v367 = vld [vmem:[#allocation2 + $0xf8] sm:$0xff]
      %v368 = vld [vmem:[#allocation2 + $0x108] sm:$0xff]
      %v369 = vld [vmem:[#allocation2 + $0x110] sm:$0xff]
      %v370 = vld [vmem:[#allocation2 + $0x120] sm:$0xff]
      %v371 = vld [vmem:[#allocation2 + $0x128] sm:$0xff]
      %v372 = vld [vmem:[#allocation2 + $0x138] sm:$0xff]
      %v373 = vld [vmem:[#allocation2 + $0x140] sm:$0xff]
      %v374 = vld [vmem:[#allocation2 + $0x150] sm:$0xff]
      %v375 = vld [vmem:[#allocation2 + $0x158] sm:$0xff]
      %v376 = vld [vmem:[#allocation2 + $0x168] sm:$0xff]
      %v377 = vld [vmem:[#allocation2 + $0x170] sm:$0xff]
      %v378 = vld [vmem:[%s1] sm:$0xf]
      %v379 = vld [vmem:[#allocation2 + $0x1] sm:$0xff]
      %v380 = vld [vmem:[#allocation2 + $0x9] sm:$0xff]
      %v381 = vld [vmem:[#allocation2 + $0x19] sm:$0xff]
      %v382 = vld [vmem:[#allocation2 + $0x21] sm:$0xff]
      %v383 = vld [vmem:[#allocation2 + $0x31] sm:$0xff]
      %v384 = vld [vmem:[#allocation2 + $0x39] sm:$0xff]
      %v385 = vld [vmem:[#allocation2 + $0x49] sm:$0xff]
      %v386 = vld [vmem:[#allocation2 + $0x51] sm:$0xff]
      %v387 = vld [vmem:[#allocation2 + $0x61] sm:$0xff]
      %v388 = vld [vmem:[#allocation2 + $0x69] sm:$0xff]
      %v389 = vld [vmem:[#allocation2 + $0x79] sm:$0xff]
      %v390 = vld [vmem:[#allocation2 + $0x81] sm:$0xff]
      %v391 = vld [vmem:[#allocation2 + $0x91] sm:$0xff]
      %v392 = vld [vmem:[#allocation2 + $0x99] sm:$0xff]
      %v393 = vld [vmem:[#allocation2 + $0xa9] sm:$0xff]
      %v394 = vld [vmem:[#allocation2 + $0xb1] sm:$0xff]
      %v395 = vld [vmem:[#allocation2 + $0xc1] sm:$0xff]
      %v396 = vld [vmem:[#allocation2 + $0xc9] sm:$0xff]
      %v397 = vld [vmem:[#allocation2 + $0xd9] sm:$0xff]
      %v398 = vld [vmem:[#allocation2 + $0xe1] sm:$0xff]
      %v399 = vld [vmem:[#allocation2 + $0xf1] sm:$0xff]
      %v400 = vld [vmem:[#allocation2 + $0xf9] sm:$0xff]
      %v401 = vld [vmem:[#allocation2 + $0x109] sm:$0xff]
      %v402 = vld [vmem:[#allocation2 + $0x111] sm:$0xff]
      %v403 = vld [vmem:[#allocation2 + $0x121] sm:$0xff]
      %v404 = vld [vmem:[#allocation2 + $0x129] sm:$0xff]
      %v405 = vld [vmem:[#allocation2 + $0x139] sm:$0xff]
      %v406 = vld [vmem:[#allocation2 + $0x141] sm:$0xff]
      %v407 = vld [vmem:[#allocation2 + $0x151] sm:$0xff]
      %v408 = vld [vmem:[#allocation2 + $0x159] sm:$0xff]
      %v409 = vld [vmem:[#allocation2 + $0x169] sm:$0xff]
      %v410 = vld [vmem:[#allocation2 + $0x171] sm:$0xff]
      %s411 = scalar_lea.vmem %s1, 4
      %v412 = vld [vmem:[%s411] sm:$0xf]
      %v414 = vsel %vm257, %v379, 0
      %v417 = vsel %vm257, %v380, 0
      %v420 = vsel %vm257, %v381, 0
      %v423 = vsel %vm257, %v382, 0
      %v426 = vsel %vm257, %v383, 0
      %v429 = vsel %vm257, %v384, 0
      %v432 = vsel %vm257, %v385, 0
      %v435 = vsel %vm257, %v386, 0
      %v438 = vsel %vm257, %v387, 0
      %v441 = vsel %vm257, %v388, 0
      %v444 = vsel %vm257, %v389, 0
      %v447 = vsel %vm257, %v390, 0
      %v450 = vsel %vm257, %v391, 0
      %v453 = vsel %vm257, %v392, 0
      %v456 = vsel %vm257, %v393, 0
      %v459 = vsel %vm257, %v394, 0
      %v462 = vsel %vm257, %v395, 0
      %v465 = vsel %vm257, %v396, 0
      %v468 = vsel %vm257, %v397, 0
      %v471 = vsel %vm257, %v398, 0
      %v474 = vsel %vm257, %v399, 0
      %v477 = vsel %vm257, %v400, 0
      %v480 = vsel %vm257, %v401, 0
      %v483 = vsel %vm257, %v402, 0
      %v486 = vsel %vm257, %v403, 0
      %v489 = vsel %vm257, %v404, 0
      %v492 = vsel %vm257, %v405, 0
      %v495 = vsel %vm257, %v406, 0
      %v498 = vsel %vm257, %v407, 0
      %v501 = vsel %vm257, %v408, 0
      %v504 = vsel %vm257, %v409, 0
      %v507 = vsel %vm257, %v410, 0
      %vm509 = vcmask 1043456
      %v511 = vsel %vm509, %v412, 0
      %513 = vmatpush.msra.mxu0 0.0
      %514 = vmatpush.msra.mxu0 0.0
      %515 = vmatpush.msra.mxu0 0.0
      %516 = vmatpush.msra.mxu0 0.0
      %517 = vmatpush.msra.mxu0 0.0
      %518 = vmatpush.msra.mxu0 0.0
      %519 = vmatpush.msra.mxu0 0.0
      %520 = vmatpush.msra.mxu0 0.0
      %521 = vmatpush.msra.mxu0 0.0
      %522 = vmatpush.msra.mxu0 0.0
      %523 = vmatpush.msra.mxu0 0.0
      %524 = vmatpush.msra.mxu0 0.0
      %525 = vmatpush.msra.mxu0 0.0
      %526 = vmatpush.msra.mxu0 0.0
      %527 = vmatpush.msra.mxu0 0.0
      %528 = vmatpush.msra.mxu0 %v511
      %529 = vmatmul.f32.gmra.mxu0 %v414
      %v530 = vpop.f32.mrf.mxu0
      %v531 = vadd.f32 0.0, %v530
      %532 = vmatmul.f32.gmra.mxu0 %v417
      %v533 = vpop.f32.mrf.mxu0
      %v534 = vadd.f32 0.0, %v533
      %535 = vmatmul.f32.gmra.mxu0 %v420
      %v536 = vpop.f32.mrf.mxu0
      %v537 = vadd.f32 0.0, %v536
      %538 = vmatmul.f32.gmra.mxu0 %v423
      %v539 = vpop.f32.mrf.mxu0
      %v540 = vadd.f32 0.0, %v539
      %541 = vmatmul.f32.gmra.mxu0 %v426
      %v542 = vpop.f32.mrf.mxu0
      %v543 = vadd.f32 0.0, %v542
      %544 = vmatmul.f32.gmra.mxu0 %v429
      %v545 = vpop.f32.mrf.mxu0
      %v546 = vadd.f32 0.0, %v545
      %547 = vmatmul.f32.gmra.mxu0 %v432
      %v548 = vpop.f32.mrf.mxu0
      %v549 = vadd.f32 0.0, %v548
      %550 = vmatmul.f32.gmra.mxu0 %v435
      %v551 = vpop.f32.mrf.mxu0
      %v552 = vadd.f32 0.0, %v551
      %553 = vmatmul.f32.gmra.mxu0 %v438
      %v554 = vpop.f32.mrf.mxu0
      %v555 = vadd.f32 0.0, %v554
      %556 = vmatmul.f32.gmra.mxu0 %v441
      %v557 = vpop.f32.mrf.mxu0
      %v558 = vadd.f32 0.0, %v557
      %559 = vmatmul.f32.gmra.mxu0 %v444
      %v560 = vpop.f32.mrf.mxu0
      %v561 = vadd.f32 0.0, %v560
      %562 = vmatmul.f32.gmra.mxu0 %v447
      %v563 = vpop.f32.mrf.mxu0
      %v564 = vadd.f32 0.0, %v563
      %565 = vmatmul.f32.gmra.mxu0 %v450
      %v566 = vpop.f32.mrf.mxu0
      %v567 = vadd.f32 0.0, %v566
      %568 = vmatmul.f32.gmra.mxu0 %v453
      %v569 = vpop.f32.mrf.mxu0
      %v570 = vadd.f32 0.0, %v569
      %571 = vmatmul.f32.gmra.mxu0 %v456
      %v572 = vpop.f32.mrf.mxu0
      %v573 = vadd.f32 0.0, %v572
      %574 = vmatmul.f32.gmra.mxu0 %v459
      %v575 = vpop.f32.mrf.mxu0
      %v576 = vadd.f32 0.0, %v575
      %577 = vmatmul.f32.gmra.mxu0 %v462
      %v578 = vpop.f32.mrf.mxu0
      %v579 = vadd.f32 0.0, %v578
      %580 = vmatmul.f32.gmra.mxu0 %v465
      %v581 = vpop.f32.mrf.mxu0
      %v582 = vadd.f32 0.0, %v581
      %583 = vmatmul.f32.gmra.mxu0 %v468
      %v584 = vpop.f32.mrf.mxu0
      %v585 = vadd.f32 0.0, %v584
      %586 = vmatmul.f32.gmra.mxu0 %v471
      %v587 = vpop.f32.mrf.mxu0
      %v588 = vadd.f32 0.0, %v587
      %589 = vmatmul.f32.gmra.mxu0 %v474
      %v590 = vpop.f32.mrf.mxu0
      %v591 = vadd.f32 0.0, %v590
      %592 = vmatmul.f32.gmra.mxu0 %v477
      %v593 = vpop.f32.mrf.mxu0
      %v594 = vadd.f32 0.0, %v593
      %595 = vmatmul.f32.gmra.mxu0 %v480
      %v596 = vpop.f32.mrf.mxu0
      %v597 = vadd.f32 0.0, %v596
      %598 = vmatmul.f32.gmra.mxu0 %v483
      %v599 = vpop.f32.mrf.mxu0
      %v600 = vadd.f32 0.0, %v599
      %601 = vmatmul.f32.gmra.mxu0 %v486
      %v602 = vpop.f32.mrf.mxu0
      %v603 = vadd.f32 0.0, %v602
      %604 = vmatmul.f32.gmra.mxu0 %v489
      %v605 = vpop.f32.mrf.mxu0
      %v606 = vadd.f32 0.0, %v605
      %607 = vmatmul.f32.gmra.mxu0 %v492
      %v608 = vpop.f32.mrf.mxu0
      %v609 = vadd.f32 0.0, %v608
      %610 = vmatmul.f32.gmra.mxu0 %v495
      %v611 = vpop.f32.mrf.mxu0
      %v612 = vadd.f32 0.0, %v611
      %613 = vmatmul.f32.gmra.mxu0 %v498
      %v614 = vpop.f32.mrf.mxu0
      %v615 = vadd.f32 0.0, %v614
      %616 = vmatmul.f32.gmra.mxu0 %v501
      %v617 = vpop.f32.mrf.mxu0
      %v618 = vadd.f32 0.0, %v617
      %619 = vmatmul.f32.gmra.mxu0 %v504
      %v620 = vpop.f32.mrf.mxu0
      %v621 = vadd.f32 0.0, %v620
      %622 = vmatmul.f32.gmra.mxu0 %v507
      %v623 = vpop.f32.mrf.mxu0
      %v624 = vadd.f32 0.0, %v623
      %625 = vdwg.mxu0
      %v627 = vsel %vm257, %v346, 0
      %v630 = vsel %vm257, %v347, 0
      %v633 = vsel %vm257, %v348, 0
      %v636 = vsel %vm257, %v349, 0
      %v639 = vsel %vm257, %v350, 0
      %v642 = vsel %vm257, %v351, 0
      %v645 = vsel %vm257, %v352, 0
      %v648 = vsel %vm257, %v353, 0
      %v651 = vsel %vm257, %v354, 0
      %v654 = vsel %vm257, %v355, 0
      %v657 = vsel %vm257, %v356, 0
      %v660 = vsel %vm257, %v357, 0
      %v663 = vsel %vm257, %v358, 0
      %v666 = vsel %vm257, %v359, 0
      %v669 = vsel %vm257, %v360, 0
      %v672 = vsel %vm257, %v361, 0
      %v675 = vsel %vm257, %v362, 0
      %v678 = vsel %vm257, %v363, 0
      %v681 = vsel %vm257, %v364, 0
      %v684 = vsel %vm257, %v365, 0
      %v687 = vsel %vm257, %v366, 0
      %v690 = vsel %vm257, %v367, 0
      %v693 = vsel %vm257, %v368, 0
      %v696 = vsel %vm257, %v369, 0
      %v699 = vsel %vm257, %v370, 0
      %v702 = vsel %vm257, %v371, 0
      %v705 = vsel %vm257, %v372, 0
      %v708 = vsel %vm257, %v373, 0
      %v711 = vsel %vm257, %v374, 0
      %v714 = vsel %vm257, %v375, 0
      %v717 = vsel %vm257, %v376, 0
      %v720 = vsel %vm257, %v377, 0
      %v723 = vsel %vm509, %v378, 0
      %725 = vmatpush.msra.mxu0 0.0
      %726 = vmatpush.msra.mxu0 0.0
      %727 = vmatpush.msra.mxu0 0.0
      %728 = vmatpush.msra.mxu0 0.0
      %729 = vmatpush.msra.mxu0 0.0
      %730 = vmatpush.msra.mxu0 0.0
      %731 = vmatpush.msra.mxu0 0.0
      %732 = vmatpush.msra.mxu0 0.0
      %733 = vmatpush.msra.mxu0 0.0
      %734 = vmatpush.msra.mxu0 0.0
      %735 = vmatpush.msra.mxu0 0.0
      %736 = vmatpush.msra.mxu0 0.0
      %737 = vmatpush.msra.mxu0 0.0
      %738 = vmatpush.msra.mxu0 0.0
      %739 = vmatpush.msra.mxu0 0.0
      %740 = vmatpush.msra.mxu0 %v723
      %741 = vmatmul.f32.gmra.mxu0 %v627
      %v742 = vpop.f32.mrf.mxu0
      %v743 = vadd.f32 %v531, %v742
      %744 = vmatmul.f32.gmra.mxu0 %v630
      %v745 = vpop.f32.mrf.mxu0
      %v746 = vadd.f32 %v534, %v745
      %747 = vmatmul.f32.gmra.mxu0 %v633
      %v748 = vpop.f32.mrf.mxu0
      %v749 = vadd.f32 %v537, %v748
      %750 = vmatmul.f32.gmra.mxu0 %v636
      %v751 = vpop.f32.mrf.mxu0
      %v752 = vadd.f32 %v540, %v751
      %753 = vmatmul.f32.gmra.mxu0 %v639
      %v754 = vpop.f32.mrf.mxu0
      %v755 = vadd.f32 %v543, %v754
      %756 = vmatmul.f32.gmra.mxu0 %v642
      %v757 = vpop.f32.mrf.mxu0
      %v758 = vadd.f32 %v546, %v757
      %759 = vmatmul.f32.gmra.mxu0 %v645
      %v760 = vpop.f32.mrf.mxu0
      %v761 = vadd.f32 %v549, %v760
      %762 = vmatmul.f32.gmra.mxu0 %v648
      %v763 = vpop.f32.mrf.mxu0
      %v764 = vadd.f32 %v552, %v763
      %765 = vmatmul.f32.gmra.mxu0 %v651
      %v766 = vpop.f32.mrf.mxu0
      %v767 = vadd.f32 %v555, %v766
      %768 = vmatmul.f32.gmra.mxu0 %v654
      %v769 = vpop.f32.mrf.mxu0
      %v770 = vadd.f32 %v558, %v769
      %771 = vmatmul.f32.gmra.mxu0 %v657
      %v772 = vpop.f32.mrf.mxu0
      %v773 = vadd.f32 %v561, %v772
      %774 = vmatmul.f32.gmra.mxu0 %v660
      %v775 = vpop.f32.mrf.mxu0
      %v776 = vadd.f32 %v564, %v775
      %777 = vmatmul.f32.gmra.mxu0 %v663
      %v778 = vpop.f32.mrf.mxu0
      %v779 = vadd.f32 %v567, %v778
      %780 = vmatmul.f32.gmra.mxu0 %v666
      %v781 = vpop.f32.mrf.mxu0
      %v782 = vadd.f32 %v570, %v781
      %783 = vmatmul.f32.gmra.mxu0 %v669
      %v784 = vpop.f32.mrf.mxu0
      %v785 = vadd.f32 %v573, %v784
      %786 = vmatmul.f32.gmra.mxu0 %v672
      %v787 = vpop.f32.mrf.mxu0
      %v788 = vadd.f32 %v576, %v787
      %789 = vmatmul.f32.gmra.mxu0 %v675
      %v790 = vpop.f32.mrf.mxu0
      %v791 = vadd.f32 %v579, %v790
      %792 = vmatmul.f32.gmra.mxu0 %v678
      %v793 = vpop.f32.mrf.mxu0
      %v794 = vadd.f32 %v582, %v793
      %795 = vmatmul.f32.gmra.mxu0 %v681
      %v796 = vpop.f32.mrf.mxu0
      %v797 = vadd.f32 %v585, %v796
      %798 = vmatmul.f32.gmra.mxu0 %v684
      %v799 = vpop.f32.mrf.mxu0
      %v800 = vadd.f32 %v588, %v799
      %801 = vmatmul.f32.gmra.mxu0 %v687
      %v802 = vpop.f32.mrf.mxu0
      %v803 = vadd.f32 %v591, %v802
      %804 = vmatmul.f32.gmra.mxu0 %v690
      %v805 = vpop.f32.mrf.mxu0
      %v806 = vadd.f32 %v594, %v805
      %807 = vmatmul.f32.gmra.mxu0 %v693
      %v808 = vpop.f32.mrf.mxu0
      %v809 = vadd.f32 %v597, %v808
      %810 = vmatmul.f32.gmra.mxu0 %v696
      %v811 = vpop.f32.mrf.mxu0
      %v812 = vadd.f32 %v600, %v811
      %813 = vmatmul.f32.gmra.mxu0 %v699
      %v814 = vpop.f32.mrf.mxu0
      %v815 = vadd.f32 %v603, %v814
      %816 = vmatmul.f32.gmra.mxu0 %v702
      %v817 = vpop.f32.mrf.mxu0
      %v818 = vadd.f32 %v606, %v817
      %819 = vmatmul.f32.gmra.mxu0 %v705
      %v820 = vpop.f32.mrf.mxu0
      %v821 = vadd.f32 %v609, %v820
      %822 = vmatmul.f32.gmra.mxu0 %v708
      %v823 = vpop.f32.mrf.mxu0
      %v824 = vadd.f32 %v612, %v823
      %825 = vmatmul.f32.gmra.mxu0 %v711
      %v826 = vpop.f32.mrf.mxu0
      %v827 = vadd.f32 %v615, %v826
      %828 = vmatmul.f32.gmra.mxu0 %v714
      %v829 = vpop.f32.mrf.mxu0
      %v830 = vadd.f32 %v618, %v829
      %831 = vmatmul.f32.gmra.mxu0 %v717
      %v832 = vpop.f32.mrf.mxu0
      %v833 = vadd.f32 %v621, %v832
      %834 = vmatmul.f32.gmra.mxu0 %v720
      %v835 = vpop.f32.mrf.mxu0
      %v836 = vadd.f32 %v624, %v835
      %837 = vdwg.mxu0
      %v838 = vld [vmem:[#allocation2 + $0x2] sm:$0xff]
      %v839 = vld [vmem:[#allocation2 + $0xa] sm:$0xff]
      %v840 = vld [vmem:[#allocation2 + $0x1a] sm:$0xff]
      %v841 = vld [vmem:[#allocation2 + $0x22] sm:$0xff]
      %v842 = vld [vmem:[#allocation2 + $0x32] sm:$0xff]
      %v843 = vld [vmem:[#allocation2 + $0x3a] sm:$0xff]
      %v844 = vld [vmem:[#allocation2 + $0x4a] sm:$0xff]
      %v845 = vld [vmem:[#allocation2 + $0x52] sm:$0xff]
      %v846 = vld [vmem:[#allocation2 + $0x62] sm:$0xff]
      %v847 = vld [vmem:[#allocation2 + $0x6a] sm:$0xff]
      %v848 = vld [vmem:[#allocation2 + $0x7a] sm:$0xff]
      %v849 = vld [vmem:[#allocation2 + $0x82] sm:$0xff]
      %v850 = vld [vmem:[#allocation2 + $0x92] sm:$0xff]
      %v851 = vld [vmem:[#allocation2 + $0x9a] sm:$0xff]
      %v852 = vld [vmem:[#allocation2 + $0xaa] sm:$0xff]
      %v853 = vld [vmem:[#allocation2 + $0xb2] sm:$0xff]
      %v854 = vld [vmem:[#allocation2 + $0xc2] sm:$0xff]
      %v855 = vld [vmem:[#allocation2 + $0xca] sm:$0xff]
      %v856 = vld [vmem:[#allocation2 + $0xda] sm:$0xff]
      %v857 = vld [vmem:[#allocation2 + $0xe2] sm:$0xff]
      %v858 = vld [vmem:[#allocation2 + $0xf2] sm:$0xff]
      %v859 = vld [vmem:[#allocation2 + $0xfa] sm:$0xff]
      %v860 = vld [vmem:[#allocation2 + $0x10a] sm:$0xff]
      %v861 = vld [vmem:[#allocation2 + $0x112] sm:$0xff]
      %v862 = vld [vmem:[#allocation2 + $0x122] sm:$0xff]
      %v863 = vld [vmem:[#allocation2 + $0x12a] sm:$0xff]
      %v864 = vld [vmem:[#allocation2 + $0x13a] sm:$0xff]
      %v865 = vld [vmem:[#allocation2 + $0x142] sm:$0xff]
      %v866 = vld [vmem:[#allocation2 + $0x152] sm:$0xff]
      %v867 = vld [vmem:[#allocation2 + $0x15a] sm:$0xff]
      %v868 = vld [vmem:[#allocation2 + $0x16a] sm:$0xff]
      %v869 = vld [vmem:[#allocation2 + $0x172] sm:$0xff]
      %s870 = scalar_lea.vmem %s1, 8
      %v871 = vld [vmem:[%s870] sm:$0xf]
      %v873 = vsel %vm257, %v838, 0
      %v876 = vsel %vm257, %v839, 0
      %v879 = vsel %vm257, %v840, 0
      %v882 = vsel %vm257, %v841, 0
      %v885 = vsel %vm257, %v842, 0
      %v888 = vsel %vm257, %v843, 0
      %v891 = vsel %vm257, %v844, 0
      %v894 = vsel %vm257, %v845, 0
      %v897 = vsel %vm257, %v846, 0
      %v900 = vsel %vm257, %v847, 0
      %v903 = vsel %vm257, %v848, 0
      %v906 = vsel %vm257, %v849, 0
      %v909 = vsel %vm257, %v850, 0
      %v912 = vsel %vm257, %v851, 0
      %v915 = vsel %vm257, %v852, 0
      %v918 = vsel %vm257, %v853, 0
      %v921 = vsel %vm257, %v854, 0
      %v924 = vsel %vm257, %v855, 0
      %v927 = vsel %vm257, %v856, 0
      %v930 = vsel %vm257, %v857, 0
      %v933 = vsel %vm257, %v858, 0
      %v936 = vsel %vm257, %v859, 0
      %v939 = vsel %vm257, %v860, 0
      %v942 = vsel %vm257, %v861, 0
      %v945 = vsel %vm257, %v862, 0
      %v948 = vsel %vm257, %v863, 0
      %v951 = vsel %vm257, %v864, 0
      %v954 = vsel %vm257, %v865, 0
      %v957 = vsel %vm257, %v866, 0
      %v960 = vsel %vm257, %v867, 0
      %v963 = vsel %vm257, %v868, 0
      %v966 = vsel %vm257, %v869, 0
      %v969 = vsel %vm509, %v871, 0
      %971 = vmatpush.msra.mxu0 0.0
      %972 = vmatpush.msra.mxu0 0.0
      %973 = vmatpush.msra.mxu0 0.0
      %974 = vmatpush.msra.mxu0 0.0
      %975 = vmatpush.msra.mxu0 0.0
      %976 = vmatpush.msra.mxu0 0.0
      %977 = vmatpush.msra.mxu0 0.0
      %978 = vmatpush.msra.mxu0 0.0
      %979 = vmatpush.msra.mxu0 0.0
      %980 = vmatpush.msra.mxu0 0.0
      %981 = vmatpush.msra.mxu0 0.0
      %982 = vmatpush.msra.mxu0 0.0
      %983 = vmatpush.msra.mxu0 0.0
      %984 = vmatpush.msra.mxu0 0.0
      %985 = vmatpush.msra.mxu0 0.0
      %986 = vmatpush.msra.mxu0 %v969
      %987 = vmatmul.f32.gmra.mxu0 %v873
      %v988 = vpop.f32.mrf.mxu0
      %v989 = vadd.f32 0.0, %v988
      %990 = vmatmul.f32.gmra.mxu0 %v876
      %v991 = vpop.f32.mrf.mxu0
      %v992 = vadd.f32 0.0, %v991
      %993 = vmatmul.f32.gmra.mxu0 %v879
      %v994 = vpop.f32.mrf.mxu0
      %v995 = vadd.f32 0.0, %v994
      %996 = vmatmul.f32.gmra.mxu0 %v882
      %v997 = vpop.f32.mrf.mxu0
      %v998 = vadd.f32 0.0, %v997
      %999 = vmatmul.f32.gmra.mxu0 %v885
      %v1000 = vpop.f32.mrf.mxu0
      %v1001 = vadd.f32 0.0, %v1000
      %1002 = vmatmul.f32.gmra.mxu0 %v888
      %v1003 = vpop.f32.mrf.mxu0
      %v1004 = vadd.f32 0.0, %v1003
      %1005 = vmatmul.f32.gmra.mxu0 %v891
      %v1006 = vpop.f32.mrf.mxu0
      %v1007 = vadd.f32 0.0, %v1006
      %1008 = vmatmul.f32.gmra.mxu0 %v894
      %v1009 = vpop.f32.mrf.mxu0
      %v1010 = vadd.f32 0.0, %v1009
      %1011 = vmatmul.f32.gmra.mxu0 %v897
      %v1012 = vpop.f32.mrf.mxu0
      %v1013 = vadd.f32 0.0, %v1012
      %1014 = vmatmul.f32.gmra.mxu0 %v900
      %v1015 = vpop.f32.mrf.mxu0
      %v1016 = vadd.f32 0.0, %v1015
      %1017 = vmatmul.f32.gmra.mxu0 %v903
      %v1018 = vpop.f32.mrf.mxu0
      %v1019 = vadd.f32 0.0, %v1018
      %1020 = vmatmul.f32.gmra.mxu0 %v906
      %v1021 = vpop.f32.mrf.mxu0
      %v1022 = vadd.f32 0.0, %v1021
      %1023 = vmatmul.f32.gmra.mxu0 %v909
      %v1024 = vpop.f32.mrf.mxu0
      %v1025 = vadd.f32 0.0, %v1024
      %1026 = vmatmul.f32.gmra.mxu0 %v912
      %v1027 = vpop.f32.mrf.mxu0
      %v1028 = vadd.f32 0.0, %v1027
      %1029 = vmatmul.f32.gmra.mxu0 %v915
      %v1030 = vpop.f32.mrf.mxu0
      %v1031 = vadd.f32 0.0, %v1030
      %1032 = vmatmul.f32.gmra.mxu0 %v918
      %v1033 = vpop.f32.mrf.mxu0
      %v1034 = vadd.f32 0.0, %v1033
      %1035 = vmatmul.f32.gmra.mxu0 %v921
      %v1036 = vpop.f32.mrf.mxu0
      %v1037 = vadd.f32 0.0, %v1036
      %1038 = vmatmul.f32.gmra.mxu0 %v924
      %v1039 = vpop.f32.mrf.mxu0
      %v1040 = vadd.f32 0.0, %v1039
      %1041 = vmatmul.f32.gmra.mxu0 %v927
      %v1042 = vpop.f32.mrf.mxu0
      %v1043 = vadd.f32 0.0, %v1042
      %1044 = vmatmul.f32.gmra.mxu0 %v930
      %v1045 = vpop.f32.mrf.mxu0
      %v1046 = vadd.f32 0.0, %v1045
      %1047 = vmatmul.f32.gmra.mxu0 %v933
      %v1048 = vpop.f32.mrf.mxu0
      %v1049 = vadd.f32 0.0, %v1048
      %1050 = vmatmul.f32.gmra.mxu0 %v936
      %v1051 = vpop.f32.mrf.mxu0
      %v1052 = vadd.f32 0.0, %v1051
      %1053 = vmatmul.f32.gmra.mxu0 %v939
      %v1054 = vpop.f32.mrf.mxu0
      %v1055 = vadd.f32 0.0, %v1054
      %1056 = vmatmul.f32.gmra.mxu0 %v942
      %v1057 = vpop.f32.mrf.mxu0
      %v1058 = vadd.f32 0.0, %v1057
      %1059 = vmatmul.f32.gmra.mxu0 %v945
      %v1060 = vpop.f32.mrf.mxu0
      %v1061 = vadd.f32 0.0, %v1060
      %1062 = vmatmul.f32.gmra.mxu0 %v948
      %v1063 = vpop.f32.mrf.mxu0
      %v1064 = vadd.f32 0.0, %v1063
      %1065 = vmatmul.f32.gmra.mxu0 %v951
      %v1066 = vpop.f32.mrf.mxu0
      %v1067 = vadd.f32 0.0, %v1066
      %1068 = vmatmul.f32.gmra.mxu0 %v954
      %v1069 = vpop.f32.mrf.mxu0
      %v1070 = vadd.f32 0.0, %v1069
      %1071 = vmatmul.f32.gmra.mxu0 %v957
      %v1072 = vpop.f32.mrf.mxu0
      %v1073 = vadd.f32 0.0, %v1072
      %1074 = vmatmul.f32.gmra.mxu0 %v960
      %v1075 = vpop.f32.mrf.mxu0
      %v1076 = vadd.f32 0.0, %v1075
      %1077 = vmatmul.f32.gmra.mxu0 %v963
      %v1078 = vpop.f32.mrf.mxu0
      %v1079 = vadd.f32 0.0, %v1078
      %1080 = vmatmul.f32.gmra.mxu0 %v966
      %v1081 = vpop.f32.mrf.mxu0
      %v1082 = vadd.f32 0.0, %v1081
      %1083 = vdwg.mxu0
      %v1084 = vadd.f32 %v743, %v989
      %v1085 = vadd.f32 %v746, %v992
      %v1086 = vadd.f32 %v749, %v995
      %v1087 = vadd.f32 %v752, %v998
      %v1088 = vadd.f32 %v755, %v1001
      %v1089 = vadd.f32 %v758, %v1004
      %v1090 = vadd.f32 %v761, %v1007
      %v1091 = vadd.f32 %v764, %v1010
      %v1092 = vadd.f32 %v767, %v1013
      %v1093 = vadd.f32 %v770, %v1016
      %v1094 = vadd.f32 %v773, %v1019
      %v1095 = vadd.f32 %v776, %v1022
      %v1096 = vadd.f32 %v779, %v1025
      %v1097 = vadd.f32 %v782, %v1028
      %v1098 = vadd.f32 %v785, %v1031
      %v1099 = vadd.f32 %v788, %v1034
      %v1100 = vadd.f32 %v791, %v1037
      %v1101 = vadd.f32 %v794, %v1040
      %v1102 = vadd.f32 %v797, %v1043
      %v1103 = vadd.f32 %v800, %v1046
      %v1104 = vadd.f32 %v803, %v1049
      %v1105 = vadd.f32 %v806, %v1052
      %v1106 = vadd.f32 %v809, %v1055
      %v1107 = vadd.f32 %v812, %v1058
      %v1108 = vadd.f32 %v815, %v1061
      %v1109 = vadd.f32 %v818, %v1064
      %v1110 = vadd.f32 %v821, %v1067
      %v1111 = vadd.f32 %v824, %v1070
      %v1112 = vadd.f32 %v827, %v1073
      %v1113 = vadd.f32 %v830, %v1076
      %v1114 = vadd.f32 %v833, %v1079
      %v1115 = vadd.f32 %v836, %v1082
      %v1116 = vld [vmem:[%s313] sm:$0xff]
      %v1117 = vld [vmem:[%s313 + $0x8] sm:$0xff]
      %v1118 = vld [vmem:[%s313 + $0x18] sm:$0xff]
      %v1119 = vld [vmem:[%s313 + $0x20] sm:$0xff]
      %v1120 = vld [vmem:[%s313 + $0x30] sm:$0xff]
      %v1121 = vld [vmem:[%s313 + $0x38] sm:$0xff]
      %v1122 = vld [vmem:[%s313 + $0x48] sm:$0xff]
      %v1123 = vld [vmem:[%s313 + $0x50] sm:$0xff]
      %v1124 = vld [vmem:[%s313 + $0x60] sm:$0xff]
      %v1125 = vld [vmem:[%s313 + $0x68] sm:$0xff]
      %v1126 = vld [vmem:[%s313 + $0x78] sm:$0xff]
      %v1127 = vld [vmem:[%s313 + $0x80] sm:$0xff]
      %v1128 = vld [vmem:[%s313 + $0x90] sm:$0xff]
      %v1129 = vld [vmem:[%s313 + $0x98] sm:$0xff]
      %v1130 = vld [vmem:[%s313 + $0xa8] sm:$0xff]
      %v1131 = vld [vmem:[%s313 + $0xb0] sm:$0xff]
      %v1132 = vld [vmem:[%s313 + $0xc0] sm:$0xff]
      %v1133 = vld [vmem:[%s313 + $0xc8] sm:$0xff]
      %v1134 = vld [vmem:[%s313 + $0xd8] sm:$0xff]
      %v1135 = vld [vmem:[%s313 + $0xe0] sm:$0xff]
      %v1136 = vld [vmem:[%s313 + $0xf0] sm:$0xff]
      %v1137 = vld [vmem:[%s313 + $0xf8] sm:$0xff]
      %v1138 = vld [vmem:[%s313 + $0x108] sm:$0xff]
      %v1139 = vld [vmem:[%s313 + $0x110] sm:$0xff]
      %v1140 = vld [vmem:[%s313 + $0x120] sm:$0xff]
      %v1141 = vld [vmem:[%s313 + $0x128] sm:$0xff]
      %v1142 = vld [vmem:[%s313 + $0x138] sm:$0xff]
      %v1143 = vld [vmem:[%s313 + $0x140] sm:$0xff]
      %v1144 = vld [vmem:[%s313 + $0x150] sm:$0xff]
      %v1145 = vld [vmem:[%s313 + $0x158] sm:$0xff]
      %v1146 = vld [vmem:[%s313 + $0x168] sm:$0xff]
      %v1147 = vld [vmem:[%s313 + $0x170] sm:$0xff]
      %s1148 = scalar_lea.vmem %s1, 12
      %v1149 = vld [vmem:[%s1148] sm:$0xf]
      %v1151 = vsel %vm257, %v1116, 0
      %v1154 = vsel %vm257, %v1117, 0
      %v1157 = vsel %vm257, %v1118, 0
      %v1160 = vsel %vm257, %v1119, 0
      %v1163 = vsel %vm257, %v1120, 0
      %v1166 = vsel %vm257, %v1121, 0
      %v1169 = vsel %vm257, %v1122, 0
      %v1172 = vsel %vm257, %v1123, 0
      %v1175 = vsel %vm257, %v1124, 0
      %v1178 = vsel %vm257, %v1125, 0
      %v1181 = vsel %vm257, %v1126, 0
      %v1184 = vsel %vm257, %v1127, 0
      %v1187 = vsel %vm257, %v1128, 0
      %v1190 = vsel %vm257, %v1129, 0
      %v1193 = vsel %vm257, %v1130, 0
      %v1196 = vsel %vm257, %v1131, 0
      %v1199 = vsel %vm257, %v1132, 0
      %v1202 = vsel %vm257, %v1133, 0
      %v1205 = vsel %vm257, %v1134, 0
      %v1208 = vsel %vm257, %v1135, 0
      %v1211 = vsel %vm257, %v1136, 0
      %v1214 = vsel %vm257, %v1137, 0
      %v1217 = vsel %vm257, %v1138, 0
      %v1220 = vsel %vm257, %v1139, 0
      %v1223 = vsel %vm257, %v1140, 0
      %v1226 = vsel %vm257, %v1141, 0
      %v1229 = vsel %vm257, %v1142, 0
      %v1232 = vsel %vm257, %v1143, 0
      %v1235 = vsel %vm257, %v1144, 0
      %v1238 = vsel %vm257, %v1145, 0
      %v1241 = vsel %vm257, %v1146, 0
      %v1244 = vsel %vm257, %v1147, 0
      %v1247 = vsel %vm509, %v1149, 0
      %1249 = vmatpush.msra.mxu0 0.0
      %1250 = vmatpush.msra.mxu0 0.0
      %1251 = vmatpush.msra.mxu0 0.0
      %1252 = vmatpush.msra.mxu0 0.0
      %1253 = vmatpush.msra.mxu0 0.0
      %1254 = vmatpush.msra.mxu0 0.0
      %1255 = vmatpush.msra.mxu0 0.0
      %1256 = vmatpush.msra.mxu0 0.0
      %1257 = vmatpush.msra.mxu0 0.0
      %1258 = vmatpush.msra.mxu0 0.0
      %1259 = vmatpush.msra.mxu0 0.0
      %1260 = vmatpush.msra.mxu0 0.0
      %1261 = vmatpush.msra.mxu0 0.0
      %1262 = vmatpush.msra.mxu0 0.0
      %1263 = vmatpush.msra.mxu0 0.0
      %1264 = vmatpush.msra.mxu0 %v1247
      %1265 = vmatmul.f32.gmra.mxu0 %v1151
      %v1266 = vpop.f32.mrf.mxu0
      %v1267 = vadd.f32 0.0, %v1266
      %1268 = vmatmul.f32.gmra.mxu0 %v1154
      %v1269 = vpop.f32.mrf.mxu0
      %v1270 = vadd.f32 0.0, %v1269
      %1271 = vmatmul.f32.gmra.mxu0 %v1157
      %v1272 = vpop.f32.mrf.mxu0
      %v1273 = vadd.f32 0.0, %v1272
      %1274 = vmatmul.f32.gmra.mxu0 %v1160
      %v1275 = vpop.f32.mrf.mxu0
      %v1276 = vadd.f32 0.0, %v1275
      %1277 = vmatmul.f32.gmra.mxu0 %v1163
      %v1278 = vpop.f32.mrf.mxu0
      %v1279 = vadd.f32 0.0, %v1278
      %1280 = vmatmul.f32.gmra.mxu0 %v1166
      %v1281 = vpop.f32.mrf.mxu0
      %v1282 = vadd.f32 0.0, %v1281
      %1283 = vmatmul.f32.gmra.mxu0 %v1169
      %v1284 = vpop.f32.mrf.mxu0
      %v1285 = vadd.f32 0.0, %v1284
      %1286 = vmatmul.f32.gmra.mxu0 %v1172
      %v1287 = vpop.f32.mrf.mxu0
      %v1288 = vadd.f32 0.0, %v1287
      %1289 = vmatmul.f32.gmra.mxu0 %v1175
      %v1290 = vpop.f32.mrf.mxu0
      %v1291 = vadd.f32 0.0, %v1290
      %1292 = vmatmul.f32.gmra.mxu0 %v1178
      %v1293 = vpop.f32.mrf.mxu0
      %v1294 = vadd.f32 0.0, %v1293
      %1295 = vmatmul.f32.gmra.mxu0 %v1181
      %v1296 = vpop.f32.mrf.mxu0
      %v1297 = vadd.f32 0.0, %v1296
      %1298 = vmatmul.f32.gmra.mxu0 %v1184
      %v1299 = vpop.f32.mrf.mxu0
      %v1300 = vadd.f32 0.0, %v1299
      %1301 = vmatmul.f32.gmra.mxu0 %v1187
      %v1302 = vpop.f32.mrf.mxu0
      %v1303 = vadd.f32 0.0, %v1302
      %1304 = vmatmul.f32.gmra.mxu0 %v1190
      %v1305 = vpop.f32.mrf.mxu0
      %v1306 = vadd.f32 0.0, %v1305
      %1307 = vmatmul.f32.gmra.mxu0 %v1193
      %v1308 = vpop.f32.mrf.mxu0
      %v1309 = vadd.f32 0.0, %v1308
      %1310 = vmatmul.f32.gmra.mxu0 %v1196
      %v1311 = vpop.f32.mrf.mxu0
      %v1312 = vadd.f32 0.0, %v1311
      %1313 = vmatmul.f32.gmra.mxu0 %v1199
      %v1314 = vpop.f32.mrf.mxu0
      %v1315 = vadd.f32 0.0, %v1314
      %1316 = vmatmul.f32.gmra.mxu0 %v1202
      %v1317 = vpop.f32.mrf.mxu0
      %v1318 = vadd.f32 0.0, %v1317
      %1319 = vmatmul.f32.gmra.mxu0 %v1205
      %v1320 = vpop.f32.mrf.mxu0
      %v1321 = vadd.f32 0.0, %v1320
      %1322 = vmatmul.f32.gmra.mxu0 %v1208
      %v1323 = vpop.f32.mrf.mxu0
      %v1324 = vadd.f32 0.0, %v1323
      %1325 = vmatmul.f32.gmra.mxu0 %v1211
      %v1326 = vpop.f32.mrf.mxu0
      %v1327 = vadd.f32 0.0, %v1326
      %1328 = vmatmul.f32.gmra.mxu0 %v1214
      %v1329 = vpop.f32.mrf.mxu0
      %v1330 = vadd.f32 0.0, %v1329
      %1331 = vmatmul.f32.gmra.mxu0 %v1217
      %v1332 = vpop.f32.mrf.mxu0
      %v1333 = vadd.f32 0.0, %v1332
      %1334 = vmatmul.f32.gmra.mxu0 %v1220
      %v1335 = vpop.f32.mrf.mxu0
      %v1336 = vadd.f32 0.0, %v1335
      %1337 = vmatmul.f32.gmra.mxu0 %v1223
      %v1338 = vpop.f32.mrf.mxu0
      %v1339 = vadd.f32 0.0, %v1338
      %1340 = vmatmul.f32.gmra.mxu0 %v1226
      %v1341 = vpop.f32.mrf.mxu0
      %v1342 = vadd.f32 0.0, %v1341
      %1343 = vmatmul.f32.gmra.mxu0 %v1229
      %v1344 = vpop.f32.mrf.mxu0
      %v1345 = vadd.f32 0.0, %v1344
      %1346 = vmatmul.f32.gmra.mxu0 %v1232
      %v1347 = vpop.f32.mrf.mxu0
      %v1348 = vadd.f32 0.0, %v1347
      %1349 = vmatmul.f32.gmra.mxu0 %v1235
      %v1350 = vpop.f32.mrf.mxu0
      %v1351 = vadd.f32 0.0, %v1350
      %1352 = vmatmul.f32.gmra.mxu0 %v1238
      %v1353 = vpop.f32.mrf.mxu0
      %v1354 = vadd.f32 0.0, %v1353
      %1355 = vmatmul.f32.gmra.mxu0 %v1241
      %v1356 = vpop.f32.mrf.mxu0
      %v1357 = vadd.f32 0.0, %v1356
      %1358 = vmatmul.f32.gmra.mxu0 %v1244
      %v1359 = vpop.f32.mrf.mxu0
      %v1360 = vadd.f32 0.0, %v1359
      %1361 = vdwg.mxu0
      %v1362 = vadd.f32 %v1084, %v1267
      %v1363 = vadd.f32 %v1085, %v1270
      %v1364 = vadd.f32 %v1086, %v1273
      %v1365 = vadd.f32 %v1087, %v1276
      %v1366 = vadd.f32 %v1088, %v1279
      %v1367 = vadd.f32 %v1089, %v1282
      %v1368 = vadd.f32 %v1090, %v1285
      %v1369 = vadd.f32 %v1091, %v1288
      %v1370 = vadd.f32 %v1092, %v1291
      %v1371 = vadd.f32 %v1093, %v1294
      %v1372 = vadd.f32 %v1094, %v1297
      %v1373 = vadd.f32 %v1095, %v1300
      %v1374 = vadd.f32 %v1096, %v1303
      %v1375 = vadd.f32 %v1097, %v1306
      %v1376 = vadd.f32 %v1098, %v1309
      %v1377 = vadd.f32 %v1099, %v1312
      %v1378 = vadd.f32 %v1100, %v1315
      %v1379 = vadd.f32 %v1101, %v1318
      %v1380 = vadd.f32 %v1102, %v1321
      %v1381 = vadd.f32 %v1103, %v1324
      %v1382 = vadd.f32 %v1104, %v1327
      %v1383 = vadd.f32 %v1105, %v1330
      %v1384 = vadd.f32 %v1106, %v1333
      %v1385 = vadd.f32 %v1107, %v1336
      %v1386 = vadd.f32 %v1108, %v1339
      %v1387 = vadd.f32 %v1109, %v1342
      %v1388 = vadd.f32 %v1110, %v1345
      %v1389 = vadd.f32 %v1111, %v1348
      %v1390 = vadd.f32 %v1112, %v1351
      %v1391 = vadd.f32 %v1113, %v1354
      %v1392 = vadd.f32 %v1114, %v1357
      %v1393 = vadd.f32 %v1115, %v1360
      %v1394 = vld [vmem:[%s313 + $0x1] sm:$0xff]
      %v1395 = vld [vmem:[%s313 + $0x9] sm:$0xff]
      %v1396 = vld [vmem:[%s313 + $0x19] sm:$0xff]
      %v1397 = vld [vmem:[%s313 + $0x21] sm:$0xff]
      %v1398 = vld [vmem:[%s313 + $0x31] sm:$0xff]
      %v1399 = vld [vmem:[%s313 + $0x39] sm:$0xff]
      %v1400 = vld [vmem:[%s313 + $0x49] sm:$0xff]
      %v1401 = vld [vmem:[%s313 + $0x51] sm:$0xff]
      %v1402 = vld [vmem:[%s313 + $0x61] sm:$0xff]
      %v1403 = vld [vmem:[%s313 + $0x69] sm:$0xff]
      %v1404 = vld [vmem:[%s313 + $0x79] sm:$0xff]
      %v1405 = vld [vmem:[%s313 + $0x81] sm:$0xff]
      %v1406 = vld [vmem:[%s313 + $0x91] sm:$0xff]
      %v1407 = vld [vmem:[%s313 + $0x99] sm:$0xff]
      %v1408 = vld [vmem:[%s313 + $0xa9] sm:$0xff]
      %v1409 = vld [vmem:[%s313 + $0xb1] sm:$0xff]
      %v1410 = vld [vmem:[%s313 + $0xc1] sm:$0xff]
      %v1411 = vld [vmem:[%s313 + $0xc9] sm:$0xff]
      %v1412 = vld [vmem:[%s313 + $0xd9] sm:$0xff]
      %v1413 = vld [vmem:[%s313 + $0xe1] sm:$0xff]
      %v1414 = vld [vmem:[%s313 + $0xf1] sm:$0xff]
      %v1415 = vld [vmem:[%s313 + $0xf9] sm:$0xff]
      %v1416 = vld [vmem:[%s313 + $0x109] sm:$0xff]
      %v1417 = vld [vmem:[%s313 + $0x111] sm:$0xff]
      %v1418 = vld [vmem:[%s313 + $0x121] sm:$0xff]
      %v1419 = vld [vmem:[%s313 + $0x129] sm:$0xff]
      %v1420 = vld [vmem:[%s313 + $0x139] sm:$0xff]
      %v1421 = vld [vmem:[%s313 + $0x141] sm:$0xff]
      %v1422 = vld [vmem:[%s313 + $0x151] sm:$0xff]
      %v1423 = vld [vmem:[%s313 + $0x159] sm:$0xff]
      %v1424 = vld [vmem:[%s313 + $0x169] sm:$0xff]
      %v1425 = vld [vmem:[%s313 + $0x171] sm:$0xff]
      %s1426 = scalar_lea.vmem %s1, 16
      %v1427 = vld [vmem:[%s1426] sm:$0xf]
      %v1429 = vsel %vm257, %v1394, 0
      %v1432 = vsel %vm257, %v1395, 0
      %v1435 = vsel %vm257, %v1396, 0
      %v1438 = vsel %vm257, %v1397, 0
      %v1441 = vsel %vm257, %v1398, 0
      %v1444 = vsel %vm257, %v1399, 0
      %v1447 = vsel %vm257, %v1400, 0
      %v1450 = vsel %vm257, %v1401, 0
      %v1453 = vsel %vm257, %v1402, 0
      %v1456 = vsel %vm257, %v1403, 0
      %v1459 = vsel %vm257, %v1404, 0
      %v1462 = vsel %vm257, %v1405, 0
      %v1465 = vsel %vm257, %v1406, 0
      %v1468 = vsel %vm257, %v1407, 0
      %v1471 = vsel %vm257, %v1408, 0
      %v1474 = vsel %vm257, %v1409, 0
      %v1477 = vsel %vm257, %v1410, 0
      %v1480 = vsel %vm257, %v1411, 0
      %v1483 = vsel %vm257, %v1412, 0
      %v1486 = vsel %vm257, %v1413, 0
      %v1489 = vsel %vm257, %v1414, 0
      %v1492 = vsel %vm257, %v1415, 0
      %v1495 = vsel %vm257, %v1416, 0
      %v1498 = vsel %vm257, %v1417, 0
      %v1501 = vsel %vm257, %v1418, 0
      %v1504 = vsel %vm257, %v1419, 0
      %v1507 = vsel %vm257, %v1420, 0
      %v1510 = vsel %vm257, %v1421, 0
      %v1513 = vsel %vm257, %v1422, 0
      %v1516 = vsel %vm257, %v1423, 0
      %v1519 = vsel %vm257, %v1424, 0
      %v1522 = vsel %vm257, %v1425, 0
      %v1525 = vsel %vm509, %v1427, 0
      %1527 = vmatpush.msra.mxu0 0.0
      %1528 = vmatpush.msra.mxu0 0.0
      %1529 = vmatpush.msra.mxu0 0.0
      %1530 = vmatpush.msra.mxu0 0.0
      %1531 = vmatpush.msra.mxu0 0.0
      %1532 = vmatpush.msra.mxu0 0.0
      %1533 = vmatpush.msra.mxu0 0.0
      %1534 = vmatpush.msra.mxu0 0.0
      %1535 = vmatpush.msra.mxu0 0.0
      %1536 = vmatpush.msra.mxu0 0.0
      %1537 = vmatpush.msra.mxu0 0.0
      %1538 = vmatpush.msra.mxu0 0.0
      %1539 = vmatpush.msra.mxu0 0.0
      %1540 = vmatpush.msra.mxu0 0.0
      %1541 = vmatpush.msra.mxu0 0.0
      %1542 = vmatpush.msra.mxu0 %v1525
      %1543 = vmatmul.f32.gmra.mxu0 %v1429
      %v1544 = vpop.f32.mrf.mxu0
      %v1545 = vadd.f32 0.0, %v1544
      %1546 = vmatmul.f32.gmra.mxu0 %v1432
      %v1547 = vpop.f32.mrf.mxu0
      %v1548 = vadd.f32 0.0, %v1547
      %1549 = vmatmul.f32.gmra.mxu0 %v1435
      %v1550 = vpop.f32.mrf.mxu0
      %v1551 = vadd.f32 0.0, %v1550
      %1552 = vmatmul.f32.gmra.mxu0 %v1438
      %v1553 = vpop.f32.mrf.mxu0
      %v1554 = vadd.f32 0.0, %v1553
      %1555 = vmatmul.f32.gmra.mxu0 %v1441
      %v1556 = vpop.f32.mrf.mxu0
      %v1557 = vadd.f32 0.0, %v1556
      %1558 = vmatmul.f32.gmra.mxu0 %v1444
      %v1559 = vpop.f32.mrf.mxu0
      %v1560 = vadd.f32 0.0, %v1559
      %1561 = vmatmul.f32.gmra.mxu0 %v1447
      %v1562 = vpop.f32.mrf.mxu0
      %v1563 = vadd.f32 0.0, %v1562
      %1564 = vmatmul.f32.gmra.mxu0 %v1450
      %v1565 = vpop.f32.mrf.mxu0
      %v1566 = vadd.f32 0.0, %v1565
      %1567 = vmatmul.f32.gmra.mxu0 %v1453
      %v1568 = vpop.f32.mrf.mxu0
      %v1569 = vadd.f32 0.0, %v1568
      %1570 = vmatmul.f32.gmra.mxu0 %v1456
      %v1571 = vpop.f32.mrf.mxu0
      %v1572 = vadd.f32 0.0, %v1571
      %1573 = vmatmul.f32.gmra.mxu0 %v1459
      %v1574 = vpop.f32.mrf.mxu0
      %v1575 = vadd.f32 0.0, %v1574
      %1576 = vmatmul.f32.gmra.mxu0 %v1462
      %v1577 = vpop.f32.mrf.mxu0
      %v1578 = vadd.f32 0.0, %v1577
      %1579 = vmatmul.f32.gmra.mxu0 %v1465
      %v1580 = vpop.f32.mrf.mxu0
      %v1581 = vadd.f32 0.0, %v1580
      %1582 = vmatmul.f32.gmra.mxu0 %v1468
      %v1583 = vpop.f32.mrf.mxu0
      %v1584 = vadd.f32 0.0, %v1583
      %1585 = vmatmul.f32.gmra.mxu0 %v1471
      %v1586 = vpop.f32.mrf.mxu0
      %v1587 = vadd.f32 0.0, %v1586
      %1588 = vmatmul.f32.gmra.mxu0 %v1474
      %v1589 = vpop.f32.mrf.mxu0
      %v1590 = vadd.f32 0.0, %v1589
      %1591 = vmatmul.f32.gmra.mxu0 %v1477
      %v1592 = vpop.f32.mrf.mxu0
      %v1593 = vadd.f32 0.0, %v1592
      %1594 = vmatmul.f32.gmra.mxu0 %v1480
      %v1595 = vpop.f32.mrf.mxu0
      %v1596 = vadd.f32 0.0, %v1595
      %1597 = vmatmul.f32.gmra.mxu0 %v1483
      %v1598 = vpop.f32.mrf.mxu0
      %v1599 = vadd.f32 0.0, %v1598
      %1600 = vmatmul.f32.gmra.mxu0 %v1486
      %v1601 = vpop.f32.mrf.mxu0
      %v1602 = vadd.f32 0.0, %v1601
      %1603 = vmatmul.f32.gmra.mxu0 %v1489
      %v1604 = vpop.f32.mrf.mxu0
      %v1605 = vadd.f32 0.0, %v1604
      %1606 = vmatmul.f32.gmra.mxu0 %v1492
      %v1607 = vpop.f32.mrf.mxu0
      %v1608 = vadd.f32 0.0, %v1607
      %1609 = vmatmul.f32.gmra.mxu0 %v1495
      %v1610 = vpop.f32.mrf.mxu0
      %v1611 = vadd.f32 0.0, %v1610
      %1612 = vmatmul.f32.gmra.mxu0 %v1498
      %v1613 = vpop.f32.mrf.mxu0
      %v1614 = vadd.f32 0.0, %v1613
      %1615 = vmatmul.f32.gmra.mxu0 %v1501
      %v1616 = vpop.f32.mrf.mxu0
      %v1617 = vadd.f32 0.0, %v1616
      %1618 = vmatmul.f32.gmra.mxu0 %v1504
      %v1619 = vpop.f32.mrf.mxu0
      %v1620 = vadd.f32 0.0, %v1619
      %1621 = vmatmul.f32.gmra.mxu0 %v1507
      %v1622 = vpop.f32.mrf.mxu0
      %v1623 = vadd.f32 0.0, %v1622
      %1624 = vmatmul.f32.gmra.mxu0 %v1510
      %v1625 = vpop.f32.mrf.mxu0
      %v1626 = vadd.f32 0.0, %v1625
      %1627 = vmatmul.f32.gmra.mxu0 %v1513
      %v1628 = vpop.f32.mrf.mxu0
      %v1629 = vadd.f32 0.0, %v1628
      %1630 = vmatmul.f32.gmra.mxu0 %v1516
      %v1631 = vpop.f32.mrf.mxu0
      %v1632 = vadd.f32 0.0, %v1631
      %1633 = vmatmul.f32.gmra.mxu0 %v1519
      %v1634 = vpop.f32.mrf.mxu0
      %v1635 = vadd.f32 0.0, %v1634
      %1636 = vmatmul.f32.gmra.mxu0 %v1522
      %v1637 = vpop.f32.mrf.mxu0
      %v1638 = vadd.f32 0.0, %v1637
      %1639 = vdwg.mxu0
      %v1640 = vadd.f32 %v1362, %v1545
      %v1641 = vadd.f32 %v1363, %v1548
      %v1642 = vadd.f32 %v1364, %v1551
      %v1643 = vadd.f32 %v1365, %v1554
      %v1644 = vadd.f32 %v1366, %v1557
      %v1645 = vadd.f32 %v1367, %v1560
      %v1646 = vadd.f32 %v1368, %v1563
      %v1647 = vadd.f32 %v1369, %v1566
      %v1648 = vadd.f32 %v1370, %v1569
      %v1649 = vadd.f32 %v1371, %v1572
      %v1650 = vadd.f32 %v1372, %v1575
      %v1651 = vadd.f32 %v1373, %v1578
      %v1652 = vadd.f32 %v1374, %v1581
      %v1653 = vadd.f32 %v1375, %v1584
      %v1654 = vadd.f32 %v1376, %v1587
      %v1655 = vadd.f32 %v1377, %v1590
      %v1656 = vadd.f32 %v1378, %v1593
      %v1657 = vadd.f32 %v1379, %v1596
      %v1658 = vadd.f32 %v1380, %v1599
      %v1659 = vadd.f32 %v1381, %v1602
      %v1660 = vadd.f32 %v1382, %v1605
      %v1661 = vadd.f32 %v1383, %v1608
      %v1662 = vadd.f32 %v1384, %v1611
      %v1663 = vadd.f32 %v1385, %v1614
      %v1664 = vadd.f32 %v1386, %v1617
      %v1665 = vadd.f32 %v1387, %v1620
      %v1666 = vadd.f32 %v1388, %v1623
      %v1667 = vadd.f32 %v1389, %v1626
      %v1668 = vadd.f32 %v1390, %v1629
      %v1669 = vadd.f32 %v1391, %v1632
      %v1670 = vadd.f32 %v1392, %v1635
      %v1671 = vadd.f32 %v1393, %v1638
      %v1672 = vld [vmem:[%s313 + $0x2] sm:$0xff]
      %v1673 = vld [vmem:[%s313 + $0xa] sm:$0xff]
      %v1674 = vld [vmem:[%s313 + $0x1a] sm:$0xff]
      %v1675 = vld [vmem:[%s313 + $0x22] sm:$0xff]
      %v1676 = vld [vmem:[%s313 + $0x32] sm:$0xff]
      %v1677 = vld [vmem:[%s313 + $0x3a] sm:$0xff]
      %v1678 = vld [vmem:[%s313 + $0x4a] sm:$0xff]
      %v1679 = vld [vmem:[%s313 + $0x52] sm:$0xff]
      %v1680 = vld [vmem:[%s313 + $0x62] sm:$0xff]
      %v1681 = vld [vmem:[%s313 + $0x6a] sm:$0xff]
      %v1682 = vld [vmem:[%s313 + $0x7a] sm:$0xff]
      %v1683 = vld [vmem:[%s313 + $0x82] sm:$0xff]
      %v1684 = vld [vmem:[%s313 + $0x92] sm:$0xff]
      %v1685 = vld [vmem:[%s313 + $0x9a] sm:$0xff]
      %v1686 = vld [vmem:[%s313 + $0xaa] sm:$0xff]
      %v1687 = vld [vmem:[%s313 + $0xb2] sm:$0xff]
      %v1688 = vld [vmem:[%s313 + $0xc2] sm:$0xff]
      %v1689 = vld [vmem:[%s313 + $0xca] sm:$0xff]
      %v1690 = vld [vmem:[%s313 + $0xda] sm:$0xff]
      %v1691 = vld [vmem:[%s313 + $0xe2] sm:$0xff]
      %v1692 = vld [vmem:[%s313 + $0xf2] sm:$0xff]
      %v1693 = vld [vmem:[%s313 + $0xfa] sm:$0xff]
      %v1694 = vld [vmem:[%s313 + $0x10a] sm:$0xff]
      %v1695 = vld [vmem:[%s313 + $0x112] sm:$0xff]
      %v1696 = vld [vmem:[%s313 + $0x122] sm:$0xff]
      %v1697 = vld [vmem:[%s313 + $0x12a] sm:$0xff]
      %v1698 = vld [vmem:[%s313 + $0x13a] sm:$0xff]
      %v1699 = vld [vmem:[%s313 + $0x142] sm:$0xff]
      %v1700 = vld [vmem:[%s313 + $0x152] sm:$0xff]
      %v1701 = vld [vmem:[%s313 + $0x15a] sm:$0xff]
      %v1702 = vld [vmem:[%s313 + $0x16a] sm:$0xff]
      %v1703 = vld [vmem:[%s313 + $0x172] sm:$0xff]
      %s1704 = scalar_lea.vmem %s1, 20
      %v1705 = vld [vmem:[%s1704] sm:$0xf]
      %v1707 = vsel %vm257, %v1672, 0
      %v1710 = vsel %vm257, %v1673, 0
      %v1713 = vsel %vm257, %v1674, 0
      %v1716 = vsel %vm257, %v1675, 0
      %v1719 = vsel %vm257, %v1676, 0
      %v1722 = vsel %vm257, %v1677, 0
      %v1725 = vsel %vm257, %v1678, 0
      %v1728 = vsel %vm257, %v1679, 0
      %v1731 = vsel %vm257, %v1680, 0
      %v1734 = vsel %vm257, %v1681, 0
      %v1737 = vsel %vm257, %v1682, 0
      %v1740 = vsel %vm257, %v1683, 0
      %v1743 = vsel %vm257, %v1684, 0
      %v1746 = vsel %vm257, %v1685, 0
      %v1749 = vsel %vm257, %v1686, 0
      %v1752 = vsel %vm257, %v1687, 0
      %v1755 = vsel %vm257, %v1688, 0
      %v1758 = vsel %vm257, %v1689, 0
      %v1761 = vsel %vm257, %v1690, 0
      %v1764 = vsel %vm257, %v1691, 0
      %v1767 = vsel %vm257, %v1692, 0
      %v1770 = vsel %vm257, %v1693, 0
      %v1773 = vsel %vm257, %v1694, 0
      %v1776 = vsel %vm257, %v1695, 0
      %v1779 = vsel %vm257, %v1696, 0
      %v1782 = vsel %vm257, %v1697, 0
      %v1785 = vsel %vm257, %v1698, 0
      %v1788 = vsel %vm257, %v1699, 0
      %v1791 = vsel %vm257, %v1700, 0
      %v1794 = vsel %vm257, %v1701, 0
      %v1797 = vsel %vm257, %v1702, 0
      %v1800 = vsel %vm257, %v1703, 0
      %v1803 = vsel %vm509, %v1705, 0
      %1805 = vmatpush.msra.mxu0 0.0
      %1806 = vmatpush.msra.mxu0 0.0
      %1807 = vmatpush.msra.mxu0 0.0
      %1808 = vmatpush.msra.mxu0 0.0
      %1809 = vmatpush.msra.mxu0 0.0
      %1810 = vmatpush.msra.mxu0 0.0
      %1811 = vmatpush.msra.mxu0 0.0
      %1812 = vmatpush.msra.mxu0 0.0
      %1813 = vmatpush.msra.mxu0 0.0
      %1814 = vmatpush.msra.mxu0 0.0
      %1815 = vmatpush.msra.mxu0 0.0
      %1816 = vmatpush.msra.mxu0 0.0
      %1817 = vmatpush.msra.mxu0 0.0
      %1818 = vmatpush.msra.mxu0 0.0
      %1819 = vmatpush.msra.mxu0 0.0
      %1820 = vmatpush.msra.mxu0 %v1803
      %1821 = vmatmul.f32.gmra.mxu0 %v1707
      %v1822 = vpop.f32.mrf.mxu0
      %v1823 = vadd.f32 0.0, %v1822
      %1824 = vmatmul.f32.gmra.mxu0 %v1710
      %v1825 = vpop.f32.mrf.mxu0
      %v1826 = vadd.f32 0.0, %v1825
      %1827 = vmatmul.f32.gmra.mxu0 %v1713
      %v1828 = vpop.f32.mrf.mxu0
      %v1829 = vadd.f32 0.0, %v1828
      %1830 = vmatmul.f32.gmra.mxu0 %v1716
      %v1831 = vpop.f32.mrf.mxu0
      %v1832 = vadd.f32 0.0, %v1831
      %1833 = vmatmul.f32.gmra.mxu0 %v1719
      %v1834 = vpop.f32.mrf.mxu0
      %v1835 = vadd.f32 0.0, %v1834
      %1836 = vmatmul.f32.gmra.mxu0 %v1722
      %v1837 = vpop.f32.mrf.mxu0
      %v1838 = vadd.f32 0.0, %v1837
      %1839 = vmatmul.f32.gmra.mxu0 %v1725
      %v1840 = vpop.f32.mrf.mxu0
      %v1841 = vadd.f32 0.0, %v1840
      %1842 = vmatmul.f32.gmra.mxu0 %v1728
      %v1843 = vpop.f32.mrf.mxu0
      %v1844 = vadd.f32 0.0, %v1843
      %1845 = vmatmul.f32.gmra.mxu0 %v1731
      %v1846 = vpop.f32.mrf.mxu0
      %v1847 = vadd.f32 0.0, %v1846
      %1848 = vmatmul.f32.gmra.mxu0 %v1734
      %v1849 = vpop.f32.mrf.mxu0
      %v1850 = vadd.f32 0.0, %v1849
      %1851 = vmatmul.f32.gmra.mxu0 %v1737
      %v1852 = vpop.f32.mrf.mxu0
      %v1853 = vadd.f32 0.0, %v1852
      %1854 = vmatmul.f32.gmra.mxu0 %v1740
      %v1855 = vpop.f32.mrf.mxu0
      %v1856 = vadd.f32 0.0, %v1855
      %1857 = vmatmul.f32.gmra.mxu0 %v1743
      %v1858 = vpop.f32.mrf.mxu0
      %v1859 = vadd.f32 0.0, %v1858
      %1860 = vmatmul.f32.gmra.mxu0 %v1746
      %v1861 = vpop.f32.mrf.mxu0
      %v1862 = vadd.f32 0.0, %v1861
      %1863 = vmatmul.f32.gmra.mxu0 %v1749
      %v1864 = vpop.f32.mrf.mxu0
      %v1865 = vadd.f32 0.0, %v1864
      %1866 = vmatmul.f32.gmra.mxu0 %v1752
      %v1867 = vpop.f32.mrf.mxu0
      %v1868 = vadd.f32 0.0, %v1867
      %1869 = vmatmul.f32.gmra.mxu0 %v1755
      %v1870 = vpop.f32.mrf.mxu0
      %v1871 = vadd.f32 0.0, %v1870
      %1872 = vmatmul.f32.gmra.mxu0 %v1758
      %v1873 = vpop.f32.mrf.mxu0
      %v1874 = vadd.f32 0.0, %v1873
      %1875 = vmatmul.f32.gmra.mxu0 %v1761
      %v1876 = vpop.f32.mrf.mxu0
      %v1877 = vadd.f32 0.0, %v1876
      %1878 = vmatmul.f32.gmra.mxu0 %v1764
      %v1879 = vpop.f32.mrf.mxu0
      %v1880 = vadd.f32 0.0, %v1879
      %1881 = vmatmul.f32.gmra.mxu0 %v1767
      %v1882 = vpop.f32.mrf.mxu0
      %v1883 = vadd.f32 0.0, %v1882
      %1884 = vmatmul.f32.gmra.mxu0 %v1770
      %v1885 = vpop.f32.mrf.mxu0
      %v1886 = vadd.f32 0.0, %v1885
      %1887 = vmatmul.f32.gmra.mxu0 %v1773
      %v1888 = vpop.f32.mrf.mxu0
      %v1889 = vadd.f32 0.0, %v1888
      %1890 = vmatmul.f32.gmra.mxu0 %v1776
      %v1891 = vpop.f32.mrf.mxu0
      %v1892 = vadd.f32 0.0, %v1891
      %1893 = vmatmul.f32.gmra.mxu0 %v1779
      %v1894 = vpop.f32.mrf.mxu0
      %v1895 = vadd.f32 0.0, %v1894
      %1896 = vmatmul.f32.gmra.mxu0 %v1782
      %v1897 = vpop.f32.mrf.mxu0
      %v1898 = vadd.f32 0.0, %v1897
      %1899 = vmatmul.f32.gmra.mxu0 %v1785
      %v1900 = vpop.f32.mrf.mxu0
      %v1901 = vadd.f32 0.0, %v1900
      %1902 = vmatmul.f32.gmra.mxu0 %v1788
      %v1903 = vpop.f32.mrf.mxu0
      %v1904 = vadd.f32 0.0, %v1903
      %1905 = vmatmul.f32.gmra.mxu0 %v1791
      %v1906 = vpop.f32.mrf.mxu0
      %v1907 = vadd.f32 0.0, %v1906
      %1908 = vmatmul.f32.gmra.mxu0 %v1794
      %v1909 = vpop.f32.mrf.mxu0
      %v1910 = vadd.f32 0.0, %v1909
      %1911 = vmatmul.f32.gmra.mxu0 %v1797
      %v1912 = vpop.f32.mrf.mxu0
      %v1913 = vadd.f32 0.0, %v1912
      %1914 = vmatmul.f32.gmra.mxu0 %v1800
      %v1915 = vpop.f32.mrf.mxu0
      %v1916 = vadd.f32 0.0, %v1915
      %1917 = vdwg.mxu0
      %v1918 = vadd.f32 %v1640, %v1823
      %v1919 = vadd.f32 %v1641, %v1826
      %v1920 = vadd.f32 %v1642, %v1829
      %v1921 = vadd.f32 %v1643, %v1832
      %v1922 = vadd.f32 %v1644, %v1835
      %v1923 = vadd.f32 %v1645, %v1838
      %v1924 = vadd.f32 %v1646, %v1841
      %v1925 = vadd.f32 %v1647, %v1844
      %v1926 = vadd.f32 %v1648, %v1847
      %v1927 = vadd.f32 %v1649, %v1850
      %v1928 = vadd.f32 %v1650, %v1853
      %v1929 = vadd.f32 %v1651, %v1856
      %v1930 = vadd.f32 %v1652, %v1859
      %v1931 = vadd.f32 %v1653, %v1862
      %v1932 = vadd.f32 %v1654, %v1865
      %v1933 = vadd.f32 %v1655, %v1868
      %v1934 = vadd.f32 %v1656, %v1871
      %v1935 = vadd.f32 %v1657, %v1874
      %v1936 = vadd.f32 %v1658, %v1877
      %v1937 = vadd.f32 %v1659, %v1880
      %v1938 = vadd.f32 %v1660, %v1883
      %v1939 = vadd.f32 %v1661, %v1886
      %v1940 = vadd.f32 %v1662, %v1889
      %v1941 = vadd.f32 %v1663, %v1892
      %v1942 = vadd.f32 %v1664, %v1895
      %v1943 = vadd.f32 %v1665, %v1898
      %v1944 = vadd.f32 %v1666, %v1901
      %v1945 = vadd.f32 %v1667, %v1904
      %v1946 = vadd.f32 %v1668, %v1907
      %v1947 = vadd.f32 %v1669, %v1910
      %v1948 = vadd.f32 %v1670, %v1913
      %v1949 = vadd.f32 %v1671, %v1916
      %s1950 = scalar_lea.vmem [#allocation2], 48
      %v1951 = vld [vmem:[%s1950] sm:$0xff]
      %v1952 = vld [vmem:[%s1950 + $0x8] sm:$0xff]
      %v1953 = vld [vmem:[%s1950 + $0x18] sm:$0xff]
      %v1954 = vld [vmem:[%s1950 + $0x20] sm:$0xff]
      %v1955 = vld [vmem:[%s1950 + $0x30] sm:$0xff]
      %v1956 = vld [vmem:[%s1950 + $0x38] sm:$0xff]
      %v1957 = vld [vmem:[%s1950 + $0x48] sm:$0xff]
      %v1958 = vld [vmem:[%s1950 + $0x50] sm:$0xff]
      %v1959 = vld [vmem:[%s1950 + $0x60] sm:$0xff]
      %v1960 = vld [vmem:[%s1950 + $0x68] sm:$0xff]
      %v1961 = vld [vmem:[%s1950 + $0x78] sm:$0xff]
      %v1962 = vld [vmem:[%s1950 + $0x80] sm:$0xff]
      %v1963 = vld [vmem:[%s1950 + $0x90] sm:$0xff]
      %v1964 = vld [vmem:[%s1950 + $0x98] sm:$0xff]
      %v1965 = vld [vmem:[%s1950 + $0xa8] sm:$0xff]
      %v1966 = vld [vmem:[%s1950 + $0xb0] sm:$0xff]
      %v1967 = vld [vmem:[%s1950 + $0xc0] sm:$0xff]
      %v1968 = vld [vmem:[%s1950 + $0xc8] sm:$0xff]
      %v1969 = vld [vmem:[%s1950 + $0xd8] sm:$0xff]
      %v1970 = vld [vmem:[%s1950 + $0xe0] sm:$0xff]
      %v1971 = vld [vmem:[%s1950 + $0xf0] sm:$0xff]
      %v1972 = vld [vmem:[%s1950 + $0xf8] sm:$0xff]
      %v1973 = vld [vmem:[%s1950 + $0x108] sm:$0xff]
      %v1974 = vld [vmem:[%s1950 + $0x110] sm:$0xff]
      %v1975 = vld [vmem:[%s1950 + $0x120] sm:$0xff]
      %v1976 = vld [vmem:[%s1950 + $0x128] sm:$0xff]
      %v1977 = vld [vmem:[%s1950 + $0x138] sm:$0xff]
      %v1978 = vld [vmem:[%s1950 + $0x140] sm:$0xff]
      %v1979 = vld [vmem:[%s1950 + $0x150] sm:$0xff]
      %v1980 = vld [vmem:[%s1950 + $0x158] sm:$0xff]
      %v1981 = vld [vmem:[%s1950 + $0x168] sm:$0xff]
      %v1982 = vld [vmem:[%s1950 + $0x170] sm:$0xff]
      %s1983 = scalar_lea.vmem %s1, 24
      %v1984 = vld [vmem:[%s1983] sm:$0xf]
      %v1986 = vsel %vm257, %v1951, 0
      %v1989 = vsel %vm257, %v1952, 0
      %v1992 = vsel %vm257, %v1953, 0
      %v1995 = vsel %vm257, %v1954, 0
      %v1998 = vsel %vm257, %v1955, 0
      %v2001 = vsel %vm257, %v1956, 0
      %v2004 = vsel %vm257, %v1957, 0
      %v2007 = vsel %vm257, %v1958, 0
      %v2010 = vsel %vm257, %v1959, 0
      %v2013 = vsel %vm257, %v1960, 0
      %v2016 = vsel %vm257, %v1961, 0
      %v2019 = vsel %vm257, %v1962, 0
      %v2022 = vsel %vm257, %v1963, 0
      %v2025 = vsel %vm257, %v1964, 0
      %v2028 = vsel %vm257, %v1965, 0
      %v2031 = vsel %vm257, %v1966, 0
      %v2034 = vsel %vm257, %v1967, 0
      %v2037 = vsel %vm257, %v1968, 0
      %v2040 = vsel %vm257, %v1969, 0
      %v2043 = vsel %vm257, %v1970, 0
      %v2046 = vsel %vm257, %v1971, 0
      %v2049 = vsel %vm257, %v1972, 0
      %v2052 = vsel %vm257, %v1973, 0
      %v2055 = vsel %vm257, %v1974, 0
      %v2058 = vsel %vm257, %v1975, 0
      %v2061 = vsel %vm257, %v1976, 0
      %v2064 = vsel %vm257, %v1977, 0
      %v2067 = vsel %vm257, %v1978, 0
      %v2070 = vsel %vm257, %v1979, 0
      %v2073 = vsel %vm257, %v1980, 0
      %v2076 = vsel %vm257, %v1981, 0
      %v2079 = vsel %vm257, %v1982, 0
      %v2082 = vsel %vm509, %v1984, 0
      %2084 = vmatpush.msra.mxu0 0.0
      %2085 = vmatpush.msra.mxu0 0.0
      %2086 = vmatpush.msra.mxu0 0.0
      %2087 = vmatpush.msra.mxu0 0.0
      %2088 = vmatpush.msra.mxu0 0.0
      %2089 = vmatpush.msra.mxu0 0.0
      %2090 = vmatpush.msra.mxu0 0.0
      %2091 = vmatpush.msra.mxu0 0.0
      %2092 = vmatpush.msra.mxu0 0.0
      %2093 = vmatpush.msra.mxu0 0.0
      %2094 = vmatpush.msra.mxu0 0.0
      %2095 = vmatpush.msra.mxu0 0.0
      %2096 = vmatpush.msra.mxu0 0.0
      %2097 = vmatpush.msra.mxu0 0.0
      %2098 = vmatpush.msra.mxu0 0.0
      %2099 = vmatpush.msra.mxu0 %v2082
      %2100 = vmatmul.f32.gmra.mxu0 %v1986
      %v2101 = vpop.f32.mrf.mxu0
      %v2102 = vadd.f32 0.0, %v2101
      %2103 = vmatmul.f32.gmra.mxu0 %v1989
      %v2104 = vpop.f32.mrf.mxu0
      %v2105 = vadd.f32 0.0, %v2104
      %2106 = vmatmul.f32.gmra.mxu0 %v1992
      %v2107 = vpop.f32.mrf.mxu0
      %v2108 = vadd.f32 0.0, %v2107
      %2109 = vmatmul.f32.gmra.mxu0 %v1995
      %v2110 = vpop.f32.mrf.mxu0
      %v2111 = vadd.f32 0.0, %v2110
      %2112 = vmatmul.f32.gmra.mxu0 %v1998
      %v2113 = vpop.f32.mrf.mxu0
      %v2114 = vadd.f32 0.0, %v2113
      %2115 = vmatmul.f32.gmra.mxu0 %v2001
      %v2116 = vpop.f32.mrf.mxu0
      %v2117 = vadd.f32 0.0, %v2116
      %2118 = vmatmul.f32.gmra.mxu0 %v2004
      %v2119 = vpop.f32.mrf.mxu0
      %v2120 = vadd.f32 0.0, %v2119
      %2121 = vmatmul.f32.gmra.mxu0 %v2007
      %v2122 = vpop.f32.mrf.mxu0
      %v2123 = vadd.f32 0.0, %v2122
      %2124 = vmatmul.f32.gmra.mxu0 %v2010
      %v2125 = vpop.f32.mrf.mxu0
      %v2126 = vadd.f32 0.0, %v2125
      %2127 = vmatmul.f32.gmra.mxu0 %v2013
      %v2128 = vpop.f32.mrf.mxu0
      %v2129 = vadd.f32 0.0, %v2128
      %2130 = vmatmul.f32.gmra.mxu0 %v2016
      %v2131 = vpop.f32.mrf.mxu0
      %v2132 = vadd.f32 0.0, %v2131
      %2133 = vmatmul.f32.gmra.mxu0 %v2019
      %v2134 = vpop.f32.mrf.mxu0
      %v2135 = vadd.f32 0.0, %v2134
      %2136 = vmatmul.f32.gmra.mxu0 %v2022
      %v2137 = vpop.f32.mrf.mxu0
      %v2138 = vadd.f32 0.0, %v2137
      %2139 = vmatmul.f32.gmra.mxu0 %v2025
      %v2140 = vpop.f32.mrf.mxu0
      %v2141 = vadd.f32 0.0, %v2140
      %2142 = vmatmul.f32.gmra.mxu0 %v2028
      %v2143 = vpop.f32.mrf.mxu0
      %v2144 = vadd.f32 0.0, %v2143
      %2145 = vmatmul.f32.gmra.mxu0 %v2031
      %v2146 = vpop.f32.mrf.mxu0
      %v2147 = vadd.f32 0.0, %v2146
      %2148 = vmatmul.f32.gmra.mxu0 %v2034
      %v2149 = vpop.f32.mrf.mxu0
      %v2150 = vadd.f32 0.0, %v2149
      %2151 = vmatmul.f32.gmra.mxu0 %v2037
      %v2152 = vpop.f32.mrf.mxu0
      %v2153 = vadd.f32 0.0, %v2152
      %2154 = vmatmul.f32.gmra.mxu0 %v2040
      %v2155 = vpop.f32.mrf.mxu0
      %v2156 = vadd.f32 0.0, %v2155
      %2157 = vmatmul.f32.gmra.mxu0 %v2043
      %v2158 = vpop.f32.mrf.mxu0
      %v2159 = vadd.f32 0.0, %v2158
      %2160 = vmatmul.f32.gmra.mxu0 %v2046
      %v2161 = vpop.f32.mrf.mxu0
      %v2162 = vadd.f32 0.0, %v2161
      %2163 = vmatmul.f32.gmra.mxu0 %v2049
      %v2164 = vpop.f32.mrf.mxu0
      %v2165 = vadd.f32 0.0, %v2164
      %2166 = vmatmul.f32.gmra.mxu0 %v2052
      %v2167 = vpop.f32.mrf.mxu0
      %v2168 = vadd.f32 0.0, %v2167
      %2169 = vmatmul.f32.gmra.mxu0 %v2055
      %v2170 = vpop.f32.mrf.mxu0
      %v2171 = vadd.f32 0.0, %v2170
      %2172 = vmatmul.f32.gmra.mxu0 %v2058
      %v2173 = vpop.f32.mrf.mxu0
      %v2174 = vadd.f32 0.0, %v2173
      %2175 = vmatmul.f32.gmra.mxu0 %v2061
      %v2176 = vpop.f32.mrf.mxu0
      %v2177 = vadd.f32 0.0, %v2176
      %2178 = vmatmul.f32.gmra.mxu0 %v2064
      %v2179 = vpop.f32.mrf.mxu0
      %v2180 = vadd.f32 0.0, %v2179
      %2181 = vmatmul.f32.gmra.mxu0 %v2067
      %v2182 = vpop.f32.mrf.mxu0
      %v2183 = vadd.f32 0.0, %v2182
      %2184 = vmatmul.f32.gmra.mxu0 %v2070
      %v2185 = vpop.f32.mrf.mxu0
      %v2186 = vadd.f32 0.0, %v2185
      %2187 = vmatmul.f32.gmra.mxu0 %v2073
      %v2188 = vpop.f32.mrf.mxu0
      %v2189 = vadd.f32 0.0, %v2188
      %2190 = vmatmul.f32.gmra.mxu0 %v2076
      %v2191 = vpop.f32.mrf.mxu0
      %v2192 = vadd.f32 0.0, %v2191
      %2193 = vmatmul.f32.gmra.mxu0 %v2079
      %v2194 = vpop.f32.mrf.mxu0
      %v2195 = vadd.f32 0.0, %v2194
      %2196 = vdwg.mxu0
      %v2197 = vadd.f32 %v1918, %v2102
      %v2198 = vadd.f32 %v1919, %v2105
      %v2199 = vadd.f32 %v1920, %v2108
      %v2200 = vadd.f32 %v1921, %v2111
      %v2201 = vadd.f32 %v1922, %v2114
      %v2202 = vadd.f32 %v1923, %v2117
      %v2203 = vadd.f32 %v1924, %v2120
      %v2204 = vadd.f32 %v1925, %v2123
      %v2205 = vadd.f32 %v1926, %v2126
      %v2206 = vadd.f32 %v1927, %v2129
      %v2207 = vadd.f32 %v1928, %v2132
      %v2208 = vadd.f32 %v1929, %v2135
      %v2209 = vadd.f32 %v1930, %v2138
      %v2210 = vadd.f32 %v1931, %v2141
      %v2211 = vadd.f32 %v1932, %v2144
      %v2212 = vadd.f32 %v1933, %v2147
      %v2213 = vadd.f32 %v1934, %v2150
      %v2214 = vadd.f32 %v1935, %v2153
      %v2215 = vadd.f32 %v1936, %v2156
      %v2216 = vadd.f32 %v1937, %v2159
      %v2217 = vadd.f32 %v1938, %v2162
      %v2218 = vadd.f32 %v1939, %v2165
      %v2219 = vadd.f32 %v1940, %v2168
      %v2220 = vadd.f32 %v1941, %v2171
      %v2221 = vadd.f32 %v1942, %v2174
      %v2222 = vadd.f32 %v1943, %v2177
      %v2223 = vadd.f32 %v1944, %v2180
      %v2224 = vadd.f32 %v1945, %v2183
      %v2225 = vadd.f32 %v1946, %v2186
      %v2226 = vadd.f32 %v1947, %v2189
      %v2227 = vadd.f32 %v1948, %v2192
      %v2228 = vadd.f32 %v1949, %v2195
      %v2229 = vld [vmem:[%s1950 + $0x1] sm:$0xff]
      %v2230 = vld [vmem:[%s1950 + $0x9] sm:$0xff]
      %v2231 = vld [vmem:[%s1950 + $0x19] sm:$0xff]
      %v2232 = vld [vmem:[%s1950 + $0x21] sm:$0xff]
      %v2233 = vld [vmem:[%s1950 + $0x31] sm:$0xff]
      %v2234 = vld [vmem:[%s1950 + $0x39] sm:$0xff]
      %v2235 = vld [vmem:[%s1950 + $0x49] sm:$0xff]
      %v2236 = vld [vmem:[%s1950 + $0x51] sm:$0xff]
      %v2237 = vld [vmem:[%s1950 + $0x61] sm:$0xff]
      %v2238 = vld [vmem:[%s1950 + $0x69] sm:$0xff]
      %v2239 = vld [vmem:[%s1950 + $0x79] sm:$0xff]
      %v2240 = vld [vmem:[%s1950 + $0x81] sm:$0xff]
      %v2241 = vld [vmem:[%s1950 + $0x91] sm:$0xff]
      %v2242 = vld [vmem:[%s1950 + $0x99] sm:$0xff]
      %v2243 = vld [vmem:[%s1950 + $0xa9] sm:$0xff]
      %v2244 = vld [vmem:[%s1950 + $0xb1] sm:$0xff]
      %v2245 = vld [vmem:[%s1950 + $0xc1] sm:$0xff]
      %v2246 = vld [vmem:[%s1950 + $0xc9] sm:$0xff]
      %v2247 = vld [vmem:[%s1950 + $0xd9] sm:$0xff]
      %v2248 = vld [vmem:[%s1950 + $0xe1] sm:$0xff]
      %v2249 = vld [vmem:[%s1950 + $0xf1] sm:$0xff]
      %v2250 = vld [vmem:[%s1950 + $0xf9] sm:$0xff]
      %v2251 = vld [vmem:[%s1950 + $0x109] sm:$0xff]
      %v2252 = vld [vmem:[%s1950 + $0x111] sm:$0xff]
      %v2253 = vld [vmem:[%s1950 + $0x121] sm:$0xff]
      %v2254 = vld [vmem:[%s1950 + $0x129] sm:$0xff]
      %v2255 = vld [vmem:[%s1950 + $0x139] sm:$0xff]
      %v2256 = vld [vmem:[%s1950 + $0x141] sm:$0xff]
      %v2257 = vld [vmem:[%s1950 + $0x151] sm:$0xff]
      %v2258 = vld [vmem:[%s1950 + $0x159] sm:$0xff]
      %v2259 = vld [vmem:[%s1950 + $0x169] sm:$0xff]
      %v2260 = vld [vmem:[%s1950 + $0x171] sm:$0xff]
      %s2261 = scalar_lea.vmem %s1, 28
      %v2262 = vld [vmem:[%s2261] sm:$0xf]
      %v2264 = vsel %vm257, %v2229, 0
      %v2267 = vsel %vm257, %v2230, 0
      %v2270 = vsel %vm257, %v2231, 0
      %v2273 = vsel %vm257, %v2232, 0
      %v2276 = vsel %vm257, %v2233, 0
      %v2279 = vsel %vm257, %v2234, 0
      %v2282 = vsel %vm257, %v2235, 0
      %v2285 = vsel %vm257, %v2236, 0
      %v2288 = vsel %vm257, %v2237, 0
      %v2291 = vsel %vm257, %v2238, 0
      %v2294 = vsel %vm257, %v2239, 0
      %v2297 = vsel %vm257, %v2240, 0
      %v2300 = vsel %vm257, %v2241, 0
      %v2303 = vsel %vm257, %v2242, 0
      %v2306 = vsel %vm257, %v2243, 0
      %v2309 = vsel %vm257, %v2244, 0
      %v2312 = vsel %vm257, %v2245, 0
      %v2315 = vsel %vm257, %v2246, 0
      %v2318 = vsel %vm257, %v2247, 0
      %v2321 = vsel %vm257, %v2248, 0
      %v2324 = vsel %vm257, %v2249, 0
      %v2327 = vsel %vm257, %v2250, 0
      %v2330 = vsel %vm257, %v2251, 0
      %v2333 = vsel %vm257, %v2252, 0
      %v2336 = vsel %vm257, %v2253, 0
      %v2339 = vsel %vm257, %v2254, 0
      %v2342 = vsel %vm257, %v2255, 0
      %v2345 = vsel %vm257, %v2256, 0
      %v2348 = vsel %vm257, %v2257, 0
      %v2351 = vsel %vm257, %v2258, 0
      %v2354 = vsel %vm257, %v2259, 0
      %v2357 = vsel %vm257, %v2260, 0
      %v2360 = vsel %vm509, %v2262, 0
      %2362 = vmatpush.msra.mxu0 0.0
      %2363 = vmatpush.msra.mxu0 0.0
      %2364 = vmatpush.msra.mxu0 0.0
      %2365 = vmatpush.msra.mxu0 0.0
      %2366 = vmatpush.msra.mxu0 0.0
      %2367 = vmatpush.msra.mxu0 0.0
      %2368 = vmatpush.msra.mxu0 0.0
      %2369 = vmatpush.msra.mxu0 0.0
      %2370 = vmatpush.msra.mxu0 0.0
      %2371 = vmatpush.msra.mxu0 0.0
      %2372 = vmatpush.msra.mxu0 0.0
      %2373 = vmatpush.msra.mxu0 0.0
      %2374 = vmatpush.msra.mxu0 0.0
      %2375 = vmatpush.msra.mxu0 0.0
      %2376 = vmatpush.msra.mxu0 0.0
      %2377 = vmatpush.msra.mxu0 %v2360
      %2378 = vmatmul.f32.gmra.mxu0 %v2264
      %v2379 = vpop.f32.mrf.mxu0
      %v2380 = vadd.f32 0.0, %v2379
      %2381 = vmatmul.f32.gmra.mxu0 %v2267
      %v2382 = vpop.f32.mrf.mxu0
      %v2383 = vadd.f32 0.0, %v2382
      %2384 = vmatmul.f32.gmra.mxu0 %v2270
      %v2385 = vpop.f32.mrf.mxu0
      %v2386 = vadd.f32 0.0, %v2385
      %2387 = vmatmul.f32.gmra.mxu0 %v2273
      %v2388 = vpop.f32.mrf.mxu0
      %v2389 = vadd.f32 0.0, %v2388
      %2390 = vmatmul.f32.gmra.mxu0 %v2276
      %v2391 = vpop.f32.mrf.mxu0
      %v2392 = vadd.f32 0.0, %v2391
      %2393 = vmatmul.f32.gmra.mxu0 %v2279
      %v2394 = vpop.f32.mrf.mxu0
      %v2395 = vadd.f32 0.0, %v2394
      %2396 = vmatmul.f32.gmra.mxu0 %v2282
      %v2397 = vpop.f32.mrf.mxu0
      %v2398 = vadd.f32 0.0, %v2397
      %2399 = vmatmul.f32.gmra.mxu0 %v2285
      %v2400 = vpop.f32.mrf.mxu0
      %v2401 = vadd.f32 0.0, %v2400
      %2402 = vmatmul.f32.gmra.mxu0 %v2288
      %v2403 = vpop.f32.mrf.mxu0
      %v2404 = vadd.f32 0.0, %v2403
      %2405 = vmatmul.f32.gmra.mxu0 %v2291
      %v2406 = vpop.f32.mrf.mxu0
      %v2407 = vadd.f32 0.0, %v2406
      %2408 = vmatmul.f32.gmra.mxu0 %v2294
      %v2409 = vpop.f32.mrf.mxu0
      %v2410 = vadd.f32 0.0, %v2409
      %2411 = vmatmul.f32.gmra.mxu0 %v2297
      %v2412 = vpop.f32.mrf.mxu0
      %v2413 = vadd.f32 0.0, %v2412
      %2414 = vmatmul.f32.gmra.mxu0 %v2300
      %v2415 = vpop.f32.mrf.mxu0
      %v2416 = vadd.f32 0.0, %v2415
      %2417 = vmatmul.f32.gmra.mxu0 %v2303
      %v2418 = vpop.f32.mrf.mxu0
      %v2419 = vadd.f32 0.0, %v2418
      %2420 = vmatmul.f32.gmra.mxu0 %v2306
      %v2421 = vpop.f32.mrf.mxu0
      %v2422 = vadd.f32 0.0, %v2421
      %2423 = vmatmul.f32.gmra.mxu0 %v2309
      %v2424 = vpop.f32.mrf.mxu0
      %v2425 = vadd.f32 0.0, %v2424
      %2426 = vmatmul.f32.gmra.mxu0 %v2312
      %v2427 = vpop.f32.mrf.mxu0
      %v2428 = vadd.f32 0.0, %v2427
      %2429 = vmatmul.f32.gmra.mxu0 %v2315
      %v2430 = vpop.f32.mrf.mxu0
      %v2431 = vadd.f32 0.0, %v2430
      %2432 = vmatmul.f32.gmra.mxu0 %v2318
      %v2433 = vpop.f32.mrf.mxu0
      %v2434 = vadd.f32 0.0, %v2433
      %2435 = vmatmul.f32.gmra.mxu0 %v2321
      %v2436 = vpop.f32.mrf.mxu0
      %v2437 = vadd.f32 0.0, %v2436
      %2438 = vmatmul.f32.gmra.mxu0 %v2324
      %v2439 = vpop.f32.mrf.mxu0
      %v2440 = vadd.f32 0.0, %v2439
      %2441 = vmatmul.f32.gmra.mxu0 %v2327
      %v2442 = vpop.f32.mrf.mxu0
      %v2443 = vadd.f32 0.0, %v2442
      %2444 = vmatmul.f32.gmra.mxu0 %v2330
      %v2445 = vpop.f32.mrf.mxu0
      %v2446 = vadd.f32 0.0, %v2445
      %2447 = vmatmul.f32.gmra.mxu0 %v2333
      %v2448 = vpop.f32.mrf.mxu0
      %v2449 = vadd.f32 0.0, %v2448
      %2450 = vmatmul.f32.gmra.mxu0 %v2336
      %v2451 = vpop.f32.mrf.mxu0
      %v2452 = vadd.f32 0.0, %v2451
      %2453 = vmatmul.f32.gmra.mxu0 %v2339
      %v2454 = vpop.f32.mrf.mxu0
      %v2455 = vadd.f32 0.0, %v2454
      %2456 = vmatmul.f32.gmra.mxu0 %v2342
      %v2457 = vpop.f32.mrf.mxu0
      %v2458 = vadd.f32 0.0, %v2457
      %2459 = vmatmul.f32.gmra.mxu0 %v2345
      %v2460 = vpop.f32.mrf.mxu0
      %v2461 = vadd.f32 0.0, %v2460
      %2462 = vmatmul.f32.gmra.mxu0 %v2348
      %v2463 = vpop.f32.mrf.mxu0
      %v2464 = vadd.f32 0.0, %v2463
      %2465 = vmatmul.f32.gmra.mxu0 %v2351
      %v2466 = vpop.f32.mrf.mxu0
      %v2467 = vadd.f32 0.0, %v2466
      %2468 = vmatmul.f32.gmra.mxu0 %v2354
      %v2469 = vpop.f32.mrf.mxu0
      %v2470 = vadd.f32 0.0, %v2469
      %2471 = vmatmul.f32.gmra.mxu0 %v2357
      %v2472 = vpop.f32.mrf.mxu0
      %v2473 = vadd.f32 0.0, %v2472
      %2474 = vdwg.mxu0
      %v2475 = vadd.f32 %v2197, %v2380
      %v2476 = vadd.f32 %v2198, %v2383
      %v2477 = vadd.f32 %v2199, %v2386
      %v2478 = vadd.f32 %v2200, %v2389
      %v2479 = vadd.f32 %v2201, %v2392
      %v2480 = vadd.f32 %v2202, %v2395
      %v2481 = vadd.f32 %v2203, %v2398
      %v2482 = vadd.f32 %v2204, %v2401
      %v2483 = vadd.f32 %v2205, %v2404
      %v2484 = vadd.f32 %v2206, %v2407
      %v2485 = vadd.f32 %v2207, %v2410
      %v2486 = vadd.f32 %v2208, %v2413
      %v2487 = vadd.f32 %v2209, %v2416
      %v2488 = vadd.f32 %v2210, %v2419
      %v2489 = vadd.f32 %v2211, %v2422
      %v2490 = vadd.f32 %v2212, %v2425
      %v2491 = vadd.f32 %v2213, %v2428
      %v2492 = vadd.f32 %v2214, %v2431
      %v2493 = vadd.f32 %v2215, %v2434
      %v2494 = vadd.f32 %v2216, %v2437
      %v2495 = vadd.f32 %v2217, %v2440
      %v2496 = vadd.f32 %v2218, %v2443
      %v2497 = vadd.f32 %v2219, %v2446
      %v2498 = vadd.f32 %v2220, %v2449
      %v2499 = vadd.f32 %v2221, %v2452
      %v2500 = vadd.f32 %v2222, %v2455
      %v2501 = vadd.f32 %v2223, %v2458
      %v2502 = vadd.f32 %v2224, %v2461
      %v2503 = vadd.f32 %v2225, %v2464
      %v2504 = vadd.f32 %v2226, %v2467
      %v2505 = vadd.f32 %v2227, %v2470
      %v2506 = vadd.f32 %v2228, %v2473
      %v2507 = vld [vmem:[%s1950 + $0x2] sm:$0xff]
      %v2508 = vld [vmem:[%s1950 + $0xa] sm:$0xff]
      %v2509 = vld [vmem:[%s1950 + $0x1a] sm:$0xff]
      %v2510 = vld [vmem:[%s1950 + $0x22] sm:$0xff]
      %v2511 = vld [vmem:[%s1950 + $0x32] sm:$0xff]
      %v2512 = vld [vmem:[%s1950 + $0x3a] sm:$0xff]
      %v2513 = vld [vmem:[%s1950 + $0x4a] sm:$0xff]
      %v2514 = vld [vmem:[%s1950 + $0x52] sm:$0xff]
      %v2515 = vld [vmem:[%s1950 + $0x62] sm:$0xff]
      %v2516 = vld [vmem:[%s1950 + $0x6a] sm:$0xff]
      %v2517 = vld [vmem:[%s1950 + $0x7a] sm:$0xff]
      %v2518 = vld [vmem:[%s1950 + $0x82] sm:$0xff]
      %v2519 = vld [vmem:[%s1950 + $0x92] sm:$0xff]
      %v2520 = vld [vmem:[%s1950 + $0x9a] sm:$0xff]
      %v2521 = vld [vmem:[%s1950 + $0xaa] sm:$0xff]
      %v2522 = vld [vmem:[%s1950 + $0xb2] sm:$0xff]
      %v2523 = vld [vmem:[%s1950 + $0xc2] sm:$0xff]
      %v2524 = vld [vmem:[%s1950 + $0xca] sm:$0xff]
      %v2525 = vld [vmem:[%s1950 + $0xda] sm:$0xff]
      %v2526 = vld [vmem:[%s1950 + $0xe2] sm:$0xff]
      %v2527 = vld [vmem:[%s1950 + $0xf2] sm:$0xff]
      %v2528 = vld [vmem:[%s1950 + $0xfa] sm:$0xff]
      %v2529 = vld [vmem:[%s1950 + $0x10a] sm:$0xff]
      %v2530 = vld [vmem:[%s1950 + $0x112] sm:$0xff]
      %v2531 = vld [vmem:[%s1950 + $0x122] sm:$0xff]
      %v2532 = vld [vmem:[%s1950 + $0x12a] sm:$0xff]
      %v2533 = vld [vmem:[%s1950 + $0x13a] sm:$0xff]
      %v2534 = vld [vmem:[%s1950 + $0x142] sm:$0xff]
      %v2535 = vld [vmem:[%s1950 + $0x152] sm:$0xff]
      %v2536 = vld [vmem:[%s1950 + $0x15a] sm:$0xff]
      %v2537 = vld [vmem:[%s1950 + $0x16a] sm:$0xff]
      %v2538 = vld [vmem:[%s1950 + $0x172] sm:$0xff]
      %s2539 = scalar_lea.vmem %s1, 32
      %v2540 = vld [vmem:[%s2539] sm:$0xf]
      %v2542 = vsel %vm257, %v2507, 0
      %v2545 = vsel %vm257, %v2508, 0
      %v2548 = vsel %vm257, %v2509, 0
      %v2551 = vsel %vm257, %v2510, 0
      %v2554 = vsel %vm257, %v2511, 0
      %v2557 = vsel %vm257, %v2512, 0
      %v2560 = vsel %vm257, %v2513, 0
      %v2563 = vsel %vm257, %v2514, 0
      %v2566 = vsel %vm257, %v2515, 0
      %v2569 = vsel %vm257, %v2516, 0
      %v2572 = vsel %vm257, %v2517, 0
      %v2575 = vsel %vm257, %v2518, 0
      %v2578 = vsel %vm257, %v2519, 0
      %v2581 = vsel %vm257, %v2520, 0
      %v2584 = vsel %vm257, %v2521, 0
      %v2587 = vsel %vm257, %v2522, 0
      %v2590 = vsel %vm257, %v2523, 0
      %v2593 = vsel %vm257, %v2524, 0
      %v2596 = vsel %vm257, %v2525, 0
      %v2599 = vsel %vm257, %v2526, 0
      %v2602 = vsel %vm257, %v2527, 0
      %v2605 = vsel %vm257, %v2528, 0
      %v2608 = vsel %vm257, %v2529, 0
      %v2611 = vsel %vm257, %v2530, 0
      %v2614 = vsel %vm257, %v2531, 0
      %v2617 = vsel %vm257, %v2532, 0
      %v2620 = vsel %vm257, %v2533, 0
      %v2623 = vsel %vm257, %v2534, 0
      %v2626 = vsel %vm257, %v2535, 0
      %v2629 = vsel %vm257, %v2536, 0
      %v2632 = vsel %vm257, %v2537, 0
      %v2635 = vsel %vm257, %v2538, 0
      %v2638 = vsel %vm509, %v2540, 0
      %2640 = vmatpush.msra.mxu0 0.0
      %2641 = vmatpush.msra.mxu0 0.0
      %2642 = vmatpush.msra.mxu0 0.0
      %2643 = vmatpush.msra.mxu0 0.0
      %2644 = vmatpush.msra.mxu0 0.0
      %2645 = vmatpush.msra.mxu0 0.0
      %2646 = vmatpush.msra.mxu0 0.0
      %2647 = vmatpush.msra.mxu0 0.0
      %2648 = vmatpush.msra.mxu0 0.0
      %2649 = vmatpush.msra.mxu0 0.0
      %2650 = vmatpush.msra.mxu0 0.0
      %2651 = vmatpush.msra.mxu0 0.0
      %2652 = vmatpush.msra.mxu0 0.0
      %2653 = vmatpush.msra.mxu0 0.0
      %2654 = vmatpush.msra.mxu0 0.0
      %2655 = vmatpush.msra.mxu0 %v2638
      %2656 = vmatmul.f32.gmra.mxu0 %v2542
      %v2657 = vpop.f32.mrf.mxu0
      %v2658 = vadd.f32 0.0, %v2657
      %2659 = vmatmul.f32.gmra.mxu0 %v2545
      %v2660 = vpop.f32.mrf.mxu0
      %v2661 = vadd.f32 0.0, %v2660
      %2662 = vmatmul.f32.gmra.mxu0 %v2548
      %v2663 = vpop.f32.mrf.mxu0
      %v2664 = vadd.f32 0.0, %v2663
      %2665 = vmatmul.f32.gmra.mxu0 %v2551
      %v2666 = vpop.f32.mrf.mxu0
      %v2667 = vadd.f32 0.0, %v2666
      %2668 = vmatmul.f32.gmra.mxu0 %v2554
      %v2669 = vpop.f32.mrf.mxu0
      %v2670 = vadd.f32 0.0, %v2669
      %2671 = vmatmul.f32.gmra.mxu0 %v2557
      %v2672 = vpop.f32.mrf.mxu0
      %v2673 = vadd.f32 0.0, %v2672
      %2674 = vmatmul.f32.gmra.mxu0 %v2560
      %v2675 = vpop.f32.mrf.mxu0
      %v2676 = vadd.f32 0.0, %v2675
      %2677 = vmatmul.f32.gmra.mxu0 %v2563
      %v2678 = vpop.f32.mrf.mxu0
      %v2679 = vadd.f32 0.0, %v2678
      %2680 = vmatmul.f32.gmra.mxu0 %v2566
      %v2681 = vpop.f32.mrf.mxu0
      %v2682 = vadd.f32 0.0, %v2681
      %2683 = vmatmul.f32.gmra.mxu0 %v2569
      %v2684 = vpop.f32.mrf.mxu0
      %v2685 = vadd.f32 0.0, %v2684
      %2686 = vmatmul.f32.gmra.mxu0 %v2572
      %v2687 = vpop.f32.mrf.mxu0
      %v2688 = vadd.f32 0.0, %v2687
      %2689 = vmatmul.f32.gmra.mxu0 %v2575
      %v2690 = vpop.f32.mrf.mxu0
      %v2691 = vadd.f32 0.0, %v2690
      %2692 = vmatmul.f32.gmra.mxu0 %v2578
      %v2693 = vpop.f32.mrf.mxu0
      %v2694 = vadd.f32 0.0, %v2693
      %2695 = vmatmul.f32.gmra.mxu0 %v2581
      %v2696 = vpop.f32.mrf.mxu0
      %v2697 = vadd.f32 0.0, %v2696
      %2698 = vmatmul.f32.gmra.mxu0 %v2584
      %v2699 = vpop.f32.mrf.mxu0
      %v2700 = vadd.f32 0.0, %v2699
      %2701 = vmatmul.f32.gmra.mxu0 %v2587
      %v2702 = vpop.f32.mrf.mxu0
      %v2703 = vadd.f32 0.0, %v2702
      %2704 = vmatmul.f32.gmra.mxu0 %v2590
      %v2705 = vpop.f32.mrf.mxu0
      %v2706 = vadd.f32 0.0, %v2705
      %2707 = vmatmul.f32.gmra.mxu0 %v2593
      %v2708 = vpop.f32.mrf.mxu0
      %v2709 = vadd.f32 0.0, %v2708
      %2710 = vmatmul.f32.gmra.mxu0 %v2596
      %v2711 = vpop.f32.mrf.mxu0
      %v2712 = vadd.f32 0.0, %v2711
      %2713 = vmatmul.f32.gmra.mxu0 %v2599
      %v2714 = vpop.f32.mrf.mxu0
      %v2715 = vadd.f32 0.0, %v2714
      %2716 = vmatmul.f32.gmra.mxu0 %v2602
      %v2717 = vpop.f32.mrf.mxu0
      %v2718 = vadd.f32 0.0, %v2717
      %2719 = vmatmul.f32.gmra.mxu0 %v2605
      %v2720 = vpop.f32.mrf.mxu0
      %v2721 = vadd.f32 0.0, %v2720
      %2722 = vmatmul.f32.gmra.mxu0 %v2608
      %v2723 = vpop.f32.mrf.mxu0
      %v2724 = vadd.f32 0.0, %v2723
      %2725 = vmatmul.f32.gmra.mxu0 %v2611
      %v2726 = vpop.f32.mrf.mxu0
      %v2727 = vadd.f32 0.0, %v2726
      %2728 = vmatmul.f32.gmra.mxu0 %v2614
      %v2729 = vpop.f32.mrf.mxu0
      %v2730 = vadd.f32 0.0, %v2729
      %2731 = vmatmul.f32.gmra.mxu0 %v2617
      %v2732 = vpop.f32.mrf.mxu0
      %v2733 = vadd.f32 0.0, %v2732
      %2734 = vmatmul.f32.gmra.mxu0 %v2620
      %v2735 = vpop.f32.mrf.mxu0
      %v2736 = vadd.f32 0.0, %v2735
      %2737 = vmatmul.f32.gmra.mxu0 %v2623
      %v2738 = vpop.f32.mrf.mxu0
      %v2739 = vadd.f32 0.0, %v2738
      %2740 = vmatmul.f32.gmra.mxu0 %v2626
      %v2741 = vpop.f32.mrf.mxu0
      %v2742 = vadd.f32 0.0, %v2741
      %2743 = vmatmul.f32.gmra.mxu0 %v2629
      %v2744 = vpop.f32.mrf.mxu0
      %v2745 = vadd.f32 0.0, %v2744
      %2746 = vmatmul.f32.gmra.mxu0 %v2632
      %v2747 = vpop.f32.mrf.mxu0
      %v2748 = vadd.f32 0.0, %v2747
      %2749 = vmatmul.f32.gmra.mxu0 %v2635
      %v2750 = vpop.f32.mrf.mxu0
      %v2751 = vadd.f32 0.0, %v2750
      %2752 = vdwg.mxu0
      %v2753 = vadd.f32 %v2475, %v2658
      %v2754 = vadd.f32 %v2476, %v2661
      %v2755 = vadd.f32 %v2477, %v2664
      %v2756 = vadd.f32 %v2478, %v2667
      %v2757 = vadd.f32 %v2479, %v2670
      %v2758 = vadd.f32 %v2480, %v2673
      %v2759 = vadd.f32 %v2481, %v2676
      %v2760 = vadd.f32 %v2482, %v2679
      %v2761 = vadd.f32 %v2483, %v2682
      %v2762 = vadd.f32 %v2484, %v2685
      %v2763 = vadd.f32 %v2485, %v2688
      %v2764 = vadd.f32 %v2486, %v2691
      %v2765 = vadd.f32 %v2487, %v2694
      %v2766 = vadd.f32 %v2488, %v2697
      %v2767 = vadd.f32 %v2489, %v2700
      %v2768 = vadd.f32 %v2490, %v2703
      %v2769 = vadd.f32 %v2491, %v2706
      %v2770 = vadd.f32 %v2492, %v2709
      %v2771 = vadd.f32 %v2493, %v2712
      %v2772 = vadd.f32 %v2494, %v2715
      %v2773 = vadd.f32 %v2495, %v2718
      %v2774 = vadd.f32 %v2496, %v2721
      %v2775 = vadd.f32 %v2497, %v2724
      %v2776 = vadd.f32 %v2498, %v2727
      %v2777 = vadd.f32 %v2499, %v2730
      %v2778 = vadd.f32 %v2500, %v2733
      %v2779 = vadd.f32 %v2501, %v2736
      %v2780 = vadd.f32 %v2502, %v2739
      %v2781 = vadd.f32 %v2503, %v2742
      %v2782 = vadd.f32 %v2504, %v2745
      %v2783 = vadd.f32 %v2505, %v2748
      %v2784 = vadd.f32 %v2506, %v2751
      %v2785 = vld [vmem:[%s2] sm:$0x1]
      %v2787 = vperm.slane %v2785, 0
      %v2789 = vadd.f32 %v2753, %v2787
      %v2790 = vadd.f32 %v2754, %v2787
      %v2791 = vadd.f32 %v2755, %v2787
      %v2792 = vadd.f32 %v2756, %v2787
      %v2793 = vadd.f32 %v2757, %v2787
      %v2794 = vadd.f32 %v2758, %v2787
      %v2795 = vadd.f32 %v2759, %v2787
      %v2796 = vadd.f32 %v2760, %v2787
      %v2797 = vadd.f32 %v2761, %v2787
      %v2798 = vadd.f32 %v2762, %v2787
      %v2799 = vadd.f32 %v2763, %v2787
      %v2800 = vadd.f32 %v2764, %v2787
      %v2801 = vadd.f32 %v2765, %v2787
      %v2802 = vadd.f32 %v2766, %v2787
      %v2803 = vadd.f32 %v2767, %v2787
      %v2804 = vadd.f32 %v2768, %v2787
      %v2805 = vadd.f32 %v2769, %v2787
      %v2806 = vadd.f32 %v2770, %v2787
      %v2807 = vadd.f32 %v2771, %v2787
      %v2808 = vadd.f32 %v2772, %v2787
      %v2809 = vadd.f32 %v2773, %v2787
      %v2810 = vadd.f32 %v2774, %v2787
      %v2811 = vadd.f32 %v2775, %v2787
      %v2812 = vadd.f32 %v2776, %v2787
      %v2813 = vadd.f32 %v2777, %v2787
      %v2814 = vadd.f32 %v2778, %v2787
      %v2815 = vadd.f32 %v2779, %v2787
      %v2816 = vadd.f32 %v2780, %v2787
      %v2817 = vadd.f32 %v2781, %v2787
      %v2818 = vadd.f32 %v2782, %v2787
      %v2819 = vadd.f32 %v2783, %v2787
      %v2820 = vadd.f32 %v2784, %v2787
      %v2821 = vmax.f32 %v2789, 0.0
      %v2822 = vmax.f32 %v2790, 0.0
      %v2823 = vmax.f32 %v2791, 0.0
      %v2824 = vmax.f32 %v2792, 0.0
      %v2825 = vmax.f32 %v2793, 0.0
      %v2826 = vmax.f32 %v2794, 0.0
      %v2827 = vmax.f32 %v2795, 0.0
      %v2828 = vmax.f32 %v2796, 0.0
      %v2829 = vmax.f32 %v2797, 0.0
      %v2830 = vmax.f32 %v2798, 0.0
      %v2831 = vmax.f32 %v2799, 0.0
      %v2832 = vmax.f32 %v2800, 0.0
      %v2833 = vmax.f32 %v2801, 0.0
      %v2834 = vmax.f32 %v2802, 0.0
      %v2835 = vmax.f32 %v2803, 0.0
      %v2836 = vmax.f32 %v2804, 0.0
      %v2837 = vmax.f32 %v2805, 0.0
      %v2838 = vmax.f32 %v2806, 0.0
      %v2839 = vmax.f32 %v2807, 0.0
      %v2840 = vmax.f32 %v2808, 0.0
      %v2841 = vmax.f32 %v2809, 0.0
      %v2842 = vmax.f32 %v2810, 0.0
      %v2843 = vmax.f32 %v2811, 0.0
      %v2844 = vmax.f32 %v2812, 0.0
      %v2845 = vmax.f32 %v2813, 0.0
      %v2846 = vmax.f32 %v2814, 0.0
      %v2847 = vmax.f32 %v2815, 0.0
      %v2848 = vmax.f32 %v2816, 0.0
      %v2849 = vmax.f32 %v2817, 0.0
      %v2850 = vmax.f32 %v2818, 0.0
      %v2851 = vmax.f32 %v2819, 0.0
      %v2852 = vmax.f32 %v2820, 0.0
      %2853 = vst.msk [vmem:[#allocation3] sm:$0xff] %vm257, 0.0
      %2854 = vst.msk [vmem:[#allocation3 + $0x8] sm:$0xff] %vm257, 0.0
      %2855 = vst.msk [vmem:[#allocation3 + $0x10] sm:$0x3] %vm260, 0.0
      %2856 = vst.msk [vmem:[#allocation3 + $0x18] sm:$0xff] %vm257, 0.0
      %2857 = vst.msk [vmem:[#allocation3 + $0x20] sm:$0xff] %vm257, 0.0
      %2858 = vst.msk [vmem:[#allocation3 + $0x28] sm:$0x3] %vm260, 0.0
      %2859 = vst.msk [vmem:[#allocation3 + $0x30] sm:$0xff] %vm257, 0.0
      %2860 = vst.msk [vmem:[#allocation3 + $0x38] sm:$0xff] %vm257, 0.0
      %2861 = vst.msk [vmem:[#allocation3 + $0x40] sm:$0x3] %vm260, 0.0
      %2862 = vst.msk [vmem:[#allocation3 + $0x48] sm:$0xff] %vm257, 0.0
      %2863 = vst.msk [vmem:[#allocation3 + $0x50] sm:$0xff] %vm257, 0.0
      %2864 = vst.msk [vmem:[#allocation3 + $0x58] sm:$0x3] %vm260, 0.0
      %2865 = vst.msk [vmem:[#allocation3 + $0x60] sm:$0xff] %vm257, 0.0
      %2866 = vst.msk [vmem:[#allocation3 + $0x68] sm:$0xff] %vm257, 0.0
      %2867 = vst.msk [vmem:[#allocation3 + $0x70] sm:$0x3] %vm260, 0.0
      %2868 = vst.msk [vmem:[#allocation3 + $0x78] sm:$0xff] %vm257, 0.0
      %2869 = vst.msk [vmem:[#allocation3 + $0x80] sm:$0xff] %vm257, 0.0
      %2870 = vst.msk [vmem:[#allocation3 + $0x88] sm:$0x3] %vm260, 0.0
      %2871 = vst.msk [vmem:[#allocation3 + $0x90] sm:$0xff] %vm257, 0.0
      %2872 = vst.msk [vmem:[#allocation3 + $0x98] sm:$0xff] %vm257, 0.0
      %2873 = vst.msk [vmem:[#allocation3 + $0xa0] sm:$0x3] %vm260, 0.0
      %2874 = vst.msk [vmem:[#allocation3 + $0xa8] sm:$0xff] %vm257, 0.0
      %2875 = vst.msk [vmem:[#allocation3 + $0xb0] sm:$0xff] %vm257, 0.0
      %2876 = vst.msk [vmem:[#allocation3 + $0xb8] sm:$0x3] %vm260, 0.0
      %2877 = vst.msk [vmem:[#allocation3 + $0xc0] sm:$0xff] %vm257, 0.0
      %2878 = vst.msk [vmem:[#allocation3 + $0xc8] sm:$0xff] %vm257, 0.0
      %2879 = vst.msk [vmem:[#allocation3 + $0xd0] sm:$0x3] %vm260, 0.0
      %2880 = vst.msk [vmem:[#allocation3 + $0xd8] sm:$0xff] %vm257, 0.0
      %2881 = vst.msk [vmem:[#allocation3 + $0xe0] sm:$0xff] %vm257, 0.0
      %2882 = vst.msk [vmem:[#allocation3 + $0xe8] sm:$0x3] %vm260, 0.0
      %2883 = vst.msk [vmem:[#allocation3 + $0xf0] sm:$0xff] %vm257, 0.0
      %2884 = vst.msk [vmem:[#allocation3 + $0xf8] sm:$0xff] %vm257, 0.0
      %2885 = vst.msk [vmem:[#allocation3 + $0x100] sm:$0x3] %vm260, 0.0
      %2886 = vst.msk [vmem:[#allocation3 + $0x108] sm:$0xff] %vm257, 0.0
      %2887 = vst.msk [vmem:[#allocation3 + $0x110] sm:$0xff] %vm257, 0.0
      %2888 = vst.msk [vmem:[#allocation3 + $0x118] sm:$0x3] %vm260, 0.0
      %2889 = vst.msk [vmem:[#allocation3 + $0x120] sm:$0xff] %vm257, 0.0
      %2890 = vst.msk [vmem:[#allocation3 + $0x128] sm:$0xff] %vm257, 0.0
      %2891 = vst.msk [vmem:[#allocation3 + $0x130] sm:$0x3] %vm260, 0.0
      %2892 = vst.msk [vmem:[#allocation3 + $0x138] sm:$0xff] %vm257, 0.0
      %2893 = vst.msk [vmem:[#allocation3 + $0x140] sm:$0xff] %vm257, 0.0
      %2894 = vst.msk [vmem:[#allocation3 + $0x148] sm:$0x3] %vm260, 0.0
      %2895 = vst.msk [vmem:[#allocation3 + $0x150] sm:$0xff] %vm257, 0.0
      %2896 = vst.msk [vmem:[#allocation3 + $0x158] sm:$0xff] %vm257, 0.0
      %2897 = vst.msk [vmem:[#allocation3 + $0x160] sm:$0x3] %vm260, 0.0
      %2898 = vst.msk [vmem:[#allocation3 + $0x168] sm:$0xff] %vm257, 0.0
      %2899 = vst.msk [vmem:[#allocation3 + $0x170] sm:$0xff] %vm257, 0.0
      %2900 = vst.msk [vmem:[#allocation3 + $0x178] sm:$0x3] %vm260, 0.0
      %2901 = vst.msk [vmem:[#allocation3 + $0x180] sm:$0xff] %vm257, 0.0
      %2902 = vst.msk [vmem:[#allocation3 + $0x188] sm:$0xff] %vm257, 0.0
      %2903 = vst.msk [vmem:[#allocation3 + $0x190] sm:$0x3] %vm260, 0.0
      %2904 = vst.msk [vmem:[#allocation3 + $0x198] sm:$0xff] %vm257, 0.0
      %2905 = vst.msk [vmem:[#allocation3 + $0x1a0] sm:$0xff] %vm257, 0.0
      %2906 = vst.msk [vmem:[#allocation3 + $0x1a8] sm:$0x3] %vm260, 0.0
      %s2907 = scalar_lea.vmem [#allocation3], 24
      %2908 = vst.msk [vmem:[%s2907 + $0x1] sm:$0xff] %vm257, %v2821
      %2909 = vst.msk [vmem:[%s2907 + $0x9] sm:$0xff] %vm257, %v2822
      %2910 = vst.msk [vmem:[%s2907 + $0x19] sm:$0xff] %vm257, %v2823
      %2911 = vst.msk [vmem:[%s2907 + $0x21] sm:$0xff] %vm257, %v2824
      %2912 = vst.msk [vmem:[%s2907 + $0x31] sm:$0xff] %vm257, %v2825
      %2913 = vst.msk [vmem:[%s2907 + $0x39] sm:$0xff] %vm257, %v2826
      %2914 = vst.msk [vmem:[%s2907 + $0x49] sm:$0xff] %vm257, %v2827
      %2915 = vst.msk [vmem:[%s2907 + $0x51] sm:$0xff] %vm257, %v2828
      %2916 = vst.msk [vmem:[%s2907 + $0x61] sm:$0xff] %vm257, %v2829
      %2917 = vst.msk [vmem:[%s2907 + $0x69] sm:$0xff] %vm257, %v2830
      %2918 = vst.msk [vmem:[%s2907 + $0x79] sm:$0xff] %vm257, %v2831
      %2919 = vst.msk [vmem:[%s2907 + $0x81] sm:$0xff] %vm257, %v2832
      %2920 = vst.msk [vmem:[%s2907 + $0x91] sm:$0xff] %vm257, %v2833
      %2921 = vst.msk [vmem:[%s2907 + $0x99] sm:$0xff] %vm257, %v2834
      %2922 = vst.msk [vmem:[%s2907 + $0xa9] sm:$0xff] %vm257, %v2835
      %2923 = vst.msk [vmem:[%s2907 + $0xb1] sm:$0xff] %vm257, %v2836
      %2924 = vst.msk [vmem:[%s2907 + $0xc1] sm:$0xff] %vm257, %v2837
      %2925 = vst.msk [vmem:[%s2907 + $0xc9] sm:$0xff] %vm257, %v2838
      %2926 = vst.msk [vmem:[%s2907 + $0xd9] sm:$0xff] %vm257, %v2839
      %2927 = vst.msk [vmem:[%s2907 + $0xe1] sm:$0xff] %vm257, %v2840
      %2928 = vst.msk [vmem:[%s2907 + $0xf1] sm:$0xff] %vm257, %v2841
      %2929 = vst.msk [vmem:[%s2907 + $0xf9] sm:$0xff] %vm257, %v2842
      %2930 = vst.msk [vmem:[%s2907 + $0x109] sm:$0xff] %vm257, %v2843
      %2931 = vst.msk [vmem:[%s2907 + $0x111] sm:$0xff] %vm257, %v2844
      %2932 = vst.msk [vmem:[%s2907 + $0x121] sm:$0xff] %vm257, %v2845
      %2933 = vst.msk [vmem:[%s2907 + $0x129] sm:$0xff] %vm257, %v2846
      %2934 = vst.msk [vmem:[%s2907 + $0x139] sm:$0xff] %vm257, %v2847
      %2935 = vst.msk [vmem:[%s2907 + $0x141] sm:$0xff] %vm257, %v2848
      %2936 = vst.msk [vmem:[%s2907 + $0x151] sm:$0xff] %vm257, %v2849
      %2937 = vst.msk [vmem:[%s2907 + $0x159] sm:$0xff] %vm257, %v2850
      %2938 = vst.msk [vmem:[%s2907 + $0x169] sm:$0xff] %vm257, %v2851
      %2939 = vst.msk [vmem:[%s2907 + $0x171] sm:$0xff] %vm257, %v2852
      %v2940 = vld [vmem:[#allocation3] sm:$0xff]
      %v2941 = vld [vmem:[#allocation3 + $0x8] sm:$0xff]
      %v2942 = vld [vmem:[#allocation3 + $0x18] sm:$0xff]
      %v2943 = vld [vmem:[#allocation3 + $0x20] sm:$0xff]
      %v2944 = vld [vmem:[#allocation3 + $0x30] sm:$0xff]
      %v2945 = vld [vmem:[#allocation3 + $0x38] sm:$0xff]
      %v2946 = vld [vmem:[#allocation3 + $0x48] sm:$0xff]
      %v2947 = vld [vmem:[#allocation3 + $0x50] sm:$0xff]
      %v2948 = vld [vmem:[#allocation3 + $0x60] sm:$0xff]
      %v2949 = vld [vmem:[#allocation3 + $0x68] sm:$0xff]
      %v2950 = vld [vmem:[#allocation3 + $0x78] sm:$0xff]
      %v2951 = vld [vmem:[#allocation3 + $0x80] sm:$0xff]
      %v2952 = vld [vmem:[#allocation3 + $0x90] sm:$0xff]
      %v2953 = vld [vmem:[#allocation3 + $0x98] sm:$0xff]
      %v2954 = vld [vmem:[#allocation3 + $0xa8] sm:$0xff]
      %v2955 = vld [vmem:[#allocation3 + $0xb0] sm:$0xff]
      %v2956 = vld [vmem:[#allocation3 + $0xc0] sm:$0xff]
      %v2957 = vld [vmem:[#allocation3 + $0xc8] sm:$0xff]
      %v2958 = vld [vmem:[#allocation3 + $0xd8] sm:$0xff]
      %v2959 = vld [vmem:[#allocation3 + $0xe0] sm:$0xff]
      %v2960 = vld [vmem:[#allocation3 + $0xf0] sm:$0xff]
      %v2961 = vld [vmem:[#allocation3 + $0xf8] sm:$0xff]
      %v2962 = vld [vmem:[#allocation3 + $0x108] sm:$0xff]
      %v2963 = vld [vmem:[#allocation3 + $0x110] sm:$0xff]
      %v2964 = vld [vmem:[#allocation3 + $0x120] sm:$0xff]
      %v2965 = vld [vmem:[#allocation3 + $0x128] sm:$0xff]
      %v2966 = vld [vmem:[#allocation3 + $0x138] sm:$0xff]
      %v2967 = vld [vmem:[#allocation3 + $0x140] sm:$0xff]
      %v2968 = vld [vmem:[#allocation3 + $0x150] sm:$0xff]
      %v2969 = vld [vmem:[#allocation3 + $0x158] sm:$0xff]
      %v2970 = vld [vmem:[#allocation3 + $0x168] sm:$0xff]
      %v2971 = vld [vmem:[#allocation3 + $0x170] sm:$0xff]
      %v2972 = vld [vmem:[%s3] sm:$0xf]
      %v2973 = vld [vmem:[#allocation3 + $0x1] sm:$0xff]
      %v2974 = vld [vmem:[#allocation3 + $0x9] sm:$0xff]
      %v2975 = vld [vmem:[#allocation3 + $0x19] sm:$0xff]
      %v2976 = vld [vmem:[#allocation3 + $0x21] sm:$0xff]
      %v2977 = vld [vmem:[#allocation3 + $0x31] sm:$0xff]
      %v2978 = vld [vmem:[#allocation3 + $0x39] sm:$0xff]
      %v2979 = vld [vmem:[#allocation3 + $0x49] sm:$0xff]
      %v2980 = vld [vmem:[#allocation3 + $0x51] sm:$0xff]
      %v2981 = vld [vmem:[#allocation3 + $0x61] sm:$0xff]
      %v2982 = vld [vmem:[#allocation3 + $0x69] sm:$0xff]
      %v2983 = vld [vmem:[#allocation3 + $0x79] sm:$0xff]
      %v2984 = vld [vmem:[#allocation3 + $0x81] sm:$0xff]
      %v2985 = vld [vmem:[#allocation3 + $0x91] sm:$0xff]
      %v2986 = vld [vmem:[#allocation3 + $0x99] sm:$0xff]
      %v2987 = vld [vmem:[#allocation3 + $0xa9] sm:$0xff]
      %v2988 = vld [vmem:[#allocation3 + $0xb1] sm:$0xff]
      %v2989 = vld [vmem:[#allocation3 + $0xc1] sm:$0xff]
      %v2990 = vld [vmem:[#allocation3 + $0xc9] sm:$0xff]
      %v2991 = vld [vmem:[#allocation3 + $0xd9] sm:$0xff]
      %v2992 = vld [vmem:[#allocation3 + $0xe1] sm:$0xff]
      %v2993 = vld [vmem:[#allocation3 + $0xf1] sm:$0xff]
      %v2994 = vld [vmem:[#allocation3 + $0xf9] sm:$0xff]
      %v2995 = vld [vmem:[#allocation3 + $0x109] sm:$0xff]
      %v2996 = vld [vmem:[#allocation3 + $0x111] sm:$0xff]
      %v2997 = vld [vmem:[#allocation3 + $0x121] sm:$0xff]
      %v2998 = vld [vmem:[#allocation3 + $0x129] sm:$0xff]
      %v2999 = vld [vmem:[#allocation3 + $0x139] sm:$0xff]
      %v3000 = vld [vmem:[#allocation3 + $0x141] sm:$0xff]
      %v3001 = vld [vmem:[#allocation3 + $0x151] sm:$0xff]
      %v3002 = vld [vmem:[#allocation3 + $0x159] sm:$0xff]
      %v3003 = vld [vmem:[#allocation3 + $0x169] sm:$0xff]
      %v3004 = vld [vmem:[#allocation3 + $0x171] sm:$0xff]
      %s3005 = scalar_lea.vmem %s3, 4
      %v3006 = vld [vmem:[%s3005] sm:$0xf]
      %v3008 = vsel %vm257, %v2973, 0
      %v3011 = vsel %vm257, %v2974, 0
      %v3014 = vsel %vm257, %v2975, 0
      %v3017 = vsel %vm257, %v2976, 0
      %v3020 = vsel %vm257, %v2977, 0
      %v3023 = vsel %vm257, %v2978, 0
      %v3026 = vsel %vm257, %v2979, 0
      %v3029 = vsel %vm257, %v2980, 0
      %v3032 = vsel %vm257, %v2981, 0
      %v3035 = vsel %vm257, %v2982, 0
      %v3038 = vsel %vm257, %v2983, 0
      %v3041 = vsel %vm257, %v2984, 0
      %v3044 = vsel %vm257, %v2985, 0
      %v3047 = vsel %vm257, %v2986, 0
      %v3050 = vsel %vm257, %v2987, 0
      %v3053 = vsel %vm257, %v2988, 0
      %v3056 = vsel %vm257, %v2989, 0
      %v3059 = vsel %vm257, %v2990, 0
      %v3062 = vsel %vm257, %v2991, 0
      %v3065 = vsel %vm257, %v2992, 0
      %v3068 = vsel %vm257, %v2993, 0
      %v3071 = vsel %vm257, %v2994, 0
      %v3074 = vsel %vm257, %v2995, 0
      %v3077 = vsel %vm257, %v2996, 0
      %v3080 = vsel %vm257, %v2997, 0
      %v3083 = vsel %vm257, %v2998, 0
      %v3086 = vsel %vm257, %v2999, 0
      %v3089 = vsel %vm257, %v3000, 0
      %v3092 = vsel %vm257, %v3001, 0
      %v3095 = vsel %vm257, %v3002, 0
      %v3098 = vsel %vm257, %v3003, 0
      %v3101 = vsel %vm257, %v3004, 0
      %v3104 = vsel %vm509, %v3006, 0
      %3106 = vmatpush.msra.mxu0 0.0
      %3107 = vmatpush.msra.mxu0 0.0
      %3108 = vmatpush.msra.mxu0 0.0
      %3109 = vmatpush.msra.mxu0 0.0
      %3110 = vmatpush.msra.mxu0 0.0
      %3111 = vmatpush.msra.mxu0 0.0
      %3112 = vmatpush.msra.mxu0 0.0
      %3113 = vmatpush.msra.mxu0 0.0
      %3114 = vmatpush.msra.mxu0 0.0
      %3115 = vmatpush.msra.mxu0 0.0
      %3116 = vmatpush.msra.mxu0 0.0
      %3117 = vmatpush.msra.mxu0 0.0
      %3118 = vmatpush.msra.mxu0 0.0
      %3119 = vmatpush.msra.mxu0 0.0
      %3120 = vmatpush.msra.mxu0 0.0
      %3121 = vmatpush.msra.mxu0 %v3104
      %3122 = vmatmul.f32.gmra.mxu0 %v3008
      %v3123 = vpop.f32.mrf.mxu0
      %v3124 = vadd.f32 0.0, %v3123
      %3125 = vmatmul.f32.gmra.mxu0 %v3011
      %v3126 = vpop.f32.mrf.mxu0
      %v3127 = vadd.f32 0.0, %v3126
      %3128 = vmatmul.f32.gmra.mxu0 %v3014
      %v3129 = vpop.f32.mrf.mxu0
      %v3130 = vadd.f32 0.0, %v3129
      %3131 = vmatmul.f32.gmra.mxu0 %v3017
      %v3132 = vpop.f32.mrf.mxu0
      %v3133 = vadd.f32 0.0, %v3132
      %3134 = vmatmul.f32.gmra.mxu0 %v3020
      %v3135 = vpop.f32.mrf.mxu0
      %v3136 = vadd.f32 0.0, %v3135
      %3137 = vmatmul.f32.gmra.mxu0 %v3023
      %v3138 = vpop.f32.mrf.mxu0
      %v3139 = vadd.f32 0.0, %v3138
      %3140 = vmatmul.f32.gmra.mxu0 %v3026
      %v3141 = vpop.f32.mrf.mxu0
      %v3142 = vadd.f32 0.0, %v3141
      %3143 = vmatmul.f32.gmra.mxu0 %v3029
      %v3144 = vpop.f32.mrf.mxu0
      %v3145 = vadd.f32 0.0, %v3144
      %3146 = vmatmul.f32.gmra.mxu0 %v3032
      %v3147 = vpop.f32.mrf.mxu0
      %v3148 = vadd.f32 0.0, %v3147
      %3149 = vmatmul.f32.gmra.mxu0 %v3035
      %v3150 = vpop.f32.mrf.mxu0
      %v3151 = vadd.f32 0.0, %v3150
      %3152 = vmatmul.f32.gmra.mxu0 %v3038
      %v3153 = vpop.f32.mrf.mxu0
      %v3154 = vadd.f32 0.0, %v3153
      %3155 = vmatmul.f32.gmra.mxu0 %v3041
      %v3156 = vpop.f32.mrf.mxu0
      %v3157 = vadd.f32 0.0, %v3156
      %3158 = vmatmul.f32.gmra.mxu0 %v3044
      %v3159 = vpop.f32.mrf.mxu0
      %v3160 = vadd.f32 0.0, %v3159
      %3161 = vmatmul.f32.gmra.mxu0 %v3047
      %v3162 = vpop.f32.mrf.mxu0
      %v3163 = vadd.f32 0.0, %v3162
      %3164 = vmatmul.f32.gmra.mxu0 %v3050
      %v3165 = vpop.f32.mrf.mxu0
      %v3166 = vadd.f32 0.0, %v3165
      %3167 = vmatmul.f32.gmra.mxu0 %v3053
      %v3168 = vpop.f32.mrf.mxu0
      %v3169 = vadd.f32 0.0, %v3168
      %3170 = vmatmul.f32.gmra.mxu0 %v3056
      %v3171 = vpop.f32.mrf.mxu0
      %v3172 = vadd.f32 0.0, %v3171
      %3173 = vmatmul.f32.gmra.mxu0 %v3059
      %v3174 = vpop.f32.mrf.mxu0
      %v3175 = vadd.f32 0.0, %v3174
      %3176 = vmatmul.f32.gmra.mxu0 %v3062
      %v3177 = vpop.f32.mrf.mxu0
      %v3178 = vadd.f32 0.0, %v3177
      %3179 = vmatmul.f32.gmra.mxu0 %v3065
      %v3180 = vpop.f32.mrf.mxu0
      %v3181 = vadd.f32 0.0, %v3180
      %3182 = vmatmul.f32.gmra.mxu0 %v3068
      %v3183 = vpop.f32.mrf.mxu0
      %v3184 = vadd.f32 0.0, %v3183
      %3185 = vmatmul.f32.gmra.mxu0 %v3071
      %v3186 = vpop.f32.mrf.mxu0
      %v3187 = vadd.f32 0.0, %v3186
      %3188 = vmatmul.f32.gmra.mxu0 %v3074
      %v3189 = vpop.f32.mrf.mxu0
      %v3190 = vadd.f32 0.0, %v3189
      %3191 = vmatmul.f32.gmra.mxu0 %v3077
      %v3192 = vpop.f32.mrf.mxu0
      %v3193 = vadd.f32 0.0, %v3192
      %3194 = vmatmul.f32.gmra.mxu0 %v3080
      %v3195 = vpop.f32.mrf.mxu0
      %v3196 = vadd.f32 0.0, %v3195
      %3197 = vmatmul.f32.gmra.mxu0 %v3083
      %v3198 = vpop.f32.mrf.mxu0
      %v3199 = vadd.f32 0.0, %v3198
      %3200 = vmatmul.f32.gmra.mxu0 %v3086
      %v3201 = vpop.f32.mrf.mxu0
      %v3202 = vadd.f32 0.0, %v3201
      %3203 = vmatmul.f32.gmra.mxu0 %v3089
      %v3204 = vpop.f32.mrf.mxu0
      %v3205 = vadd.f32 0.0, %v3204
      %3206 = vmatmul.f32.gmra.mxu0 %v3092
      %v3207 = vpop.f32.mrf.mxu0
      %v3208 = vadd.f32 0.0, %v3207
      %3209 = vmatmul.f32.gmra.mxu0 %v3095
      %v3210 = vpop.f32.mrf.mxu0
      %v3211 = vadd.f32 0.0, %v3210
      %3212 = vmatmul.f32.gmra.mxu0 %v3098
      %v3213 = vpop.f32.mrf.mxu0
      %v3214 = vadd.f32 0.0, %v3213
      %3215 = vmatmul.f32.gmra.mxu0 %v3101
      %v3216 = vpop.f32.mrf.mxu0
      %v3217 = vadd.f32 0.0, %v3216
      %3218 = vdwg.mxu0
      %v3220 = vsel %vm257, %v2940, 0
      %v3223 = vsel %vm257, %v2941, 0
      %v3226 = vsel %vm257, %v2942, 0
      %v3229 = vsel %vm257, %v2943, 0
      %v3232 = vsel %vm257, %v2944, 0
      %v3235 = vsel %vm257, %v2945, 0
      %v3238 = vsel %vm257, %v2946, 0
      %v3241 = vsel %vm257, %v2947, 0
      %v3244 = vsel %vm257, %v2948, 0
      %v3247 = vsel %vm257, %v2949, 0
      %v3250 = vsel %vm257, %v2950, 0
      %v3253 = vsel %vm257, %v2951, 0
      %v3256 = vsel %vm257, %v2952, 0
      %v3259 = vsel %vm257, %v2953, 0
      %v3262 = vsel %vm257, %v2954, 0
      %v3265 = vsel %vm257, %v2955, 0
      %v3268 = vsel %vm257, %v2956, 0
      %v3271 = vsel %vm257, %v2957, 0
      %v3274 = vsel %vm257, %v2958, 0
      %v3277 = vsel %vm257, %v2959, 0
      %v3280 = vsel %vm257, %v2960, 0
      %v3283 = vsel %vm257, %v2961, 0
      %v3286 = vsel %vm257, %v2962, 0
      %v3289 = vsel %vm257, %v2963, 0
      %v3292 = vsel %vm257, %v2964, 0
      %v3295 = vsel %vm257, %v2965, 0
      %v3298 = vsel %vm257, %v2966, 0
      %v3301 = vsel %vm257, %v2967, 0
      %v3304 = vsel %vm257, %v2968, 0
      %v3307 = vsel %vm257, %v2969, 0
      %v3310 = vsel %vm257, %v2970, 0
      %v3313 = vsel %vm257, %v2971, 0
      %v3316 = vsel %vm509, %v2972, 0
      %3318 = vmatpush.msra.mxu0 0.0
      %3319 = vmatpush.msra.mxu0 0.0
      %3320 = vmatpush.msra.mxu0 0.0
      %3321 = vmatpush.msra.mxu0 0.0
      %3322 = vmatpush.msra.mxu0 0.0
      %3323 = vmatpush.msra.mxu0 0.0
      %3324 = vmatpush.msra.mxu0 0.0
      %3325 = vmatpush.msra.mxu0 0.0
      %3326 = vmatpush.msra.mxu0 0.0
      %3327 = vmatpush.msra.mxu0 0.0
      %3328 = vmatpush.msra.mxu0 0.0
      %3329 = vmatpush.msra.mxu0 0.0
      %3330 = vmatpush.msra.mxu0 0.0
      %3331 = vmatpush.msra.mxu0 0.0
      %3332 = vmatpush.msra.mxu0 0.0
      %3333 = vmatpush.msra.mxu0 %v3316
      %3334 = vmatmul.f32.gmra.mxu0 %v3220
      %v3335 = vpop.f32.mrf.mxu0
      %v3336 = vadd.f32 %v3124, %v3335
      %3337 = vmatmul.f32.gmra.mxu0 %v3223
      %v3338 = vpop.f32.mrf.mxu0
      %v3339 = vadd.f32 %v3127, %v3338
      %3340 = vmatmul.f32.gmra.mxu0 %v3226
      %v3341 = vpop.f32.mrf.mxu0
      %v3342 = vadd.f32 %v3130, %v3341
      %3343 = vmatmul.f32.gmra.mxu0 %v3229
      %v3344 = vpop.f32.mrf.mxu0
      %v3345 = vadd.f32 %v3133, %v3344
      %3346 = vmatmul.f32.gmra.mxu0 %v3232
      %v3347 = vpop.f32.mrf.mxu0
      %v3348 = vadd.f32 %v3136, %v3347
      %3349 = vmatmul.f32.gmra.mxu0 %v3235
      %v3350 = vpop.f32.mrf.mxu0
      %v3351 = vadd.f32 %v3139, %v3350
      %3352 = vmatmul.f32.gmra.mxu0 %v3238
      %v3353 = vpop.f32.mrf.mxu0
      %v3354 = vadd.f32 %v3142, %v3353
      %3355 = vmatmul.f32.gmra.mxu0 %v3241
      %v3356 = vpop.f32.mrf.mxu0
      %v3357 = vadd.f32 %v3145, %v3356
      %3358 = vmatmul.f32.gmra.mxu0 %v3244
      %v3359 = vpop.f32.mrf.mxu0
      %v3360 = vadd.f32 %v3148, %v3359
      %3361 = vmatmul.f32.gmra.mxu0 %v3247
      %v3362 = vpop.f32.mrf.mxu0
      %v3363 = vadd.f32 %v3151, %v3362
      %3364 = vmatmul.f32.gmra.mxu0 %v3250
      %v3365 = vpop.f32.mrf.mxu0
      %v3366 = vadd.f32 %v3154, %v3365
      %3367 = vmatmul.f32.gmra.mxu0 %v3253
      %v3368 = vpop.f32.mrf.mxu0
      %v3369 = vadd.f32 %v3157, %v3368
      %3370 = vmatmul.f32.gmra.mxu0 %v3256
      %v3371 = vpop.f32.mrf.mxu0
      %v3372 = vadd.f32 %v3160, %v3371
      %3373 = vmatmul.f32.gmra.mxu0 %v3259
      %v3374 = vpop.f32.mrf.mxu0
      %v3375 = vadd.f32 %v3163, %v3374
      %3376 = vmatmul.f32.gmra.mxu0 %v3262
      %v3377 = vpop.f32.mrf.mxu0
      %v3378 = vadd.f32 %v3166, %v3377
      %3379 = vmatmul.f32.gmra.mxu0 %v3265
      %v3380 = vpop.f32.mrf.mxu0
      %v3381 = vadd.f32 %v3169, %v3380
      %3382 = vmatmul.f32.gmra.mxu0 %v3268
      %v3383 = vpop.f32.mrf.mxu0
      %v3384 = vadd.f32 %v3172, %v3383
      %3385 = vmatmul.f32.gmra.mxu0 %v3271
      %v3386 = vpop.f32.mrf.mxu0
      %v3387 = vadd.f32 %v3175, %v3386
      %3388 = vmatmul.f32.gmra.mxu0 %v3274
      %v3389 = vpop.f32.mrf.mxu0
      %v3390 = vadd.f32 %v3178, %v3389
      %3391 = vmatmul.f32.gmra.mxu0 %v3277
      %v3392 = vpop.f32.mrf.mxu0
      %v3393 = vadd.f32 %v3181, %v3392
      %3394 = vmatmul.f32.gmra.mxu0 %v3280
      %v3395 = vpop.f32.mrf.mxu0
      %v3396 = vadd.f32 %v3184, %v3395
      %3397 = vmatmul.f32.gmra.mxu0 %v3283
      %v3398 = vpop.f32.mrf.mxu0
      %v3399 = vadd.f32 %v3187, %v3398
      %3400 = vmatmul.f32.gmra.mxu0 %v3286
      %v3401 = vpop.f32.mrf.mxu0
      %v3402 = vadd.f32 %v3190, %v3401
      %3403 = vmatmul.f32.gmra.mxu0 %v3289
      %v3404 = vpop.f32.mrf.mxu0
      %v3405 = vadd.f32 %v3193, %v3404
      %3406 = vmatmul.f32.gmra.mxu0 %v3292
      %v3407 = vpop.f32.mrf.mxu0
      %v3408 = vadd.f32 %v3196, %v3407
      %3409 = vmatmul.f32.gmra.mxu0 %v3295
      %v3410 = vpop.f32.mrf.mxu0
      %v3411 = vadd.f32 %v3199, %v3410
      %3412 = vmatmul.f32.gmra.mxu0 %v3298
      %v3413 = vpop.f32.mrf.mxu0
      %v3414 = vadd.f32 %v3202, %v3413
      %3415 = vmatmul.f32.gmra.mxu0 %v3301
      %v3416 = vpop.f32.mrf.mxu0
      %v3417 = vadd.f32 %v3205, %v3416
      %3418 = vmatmul.f32.gmra.mxu0 %v3304
      %v3419 = vpop.f32.mrf.mxu0
      %v3420 = vadd.f32 %v3208, %v3419
      %3421 = vmatmul.f32.gmra.mxu0 %v3307
      %v3422 = vpop.f32.mrf.mxu0
      %v3423 = vadd.f32 %v3211, %v3422
      %3424 = vmatmul.f32.gmra.mxu0 %v3310
      %v3425 = vpop.f32.mrf.mxu0
      %v3426 = vadd.f32 %v3214, %v3425
      %3427 = vmatmul.f32.gmra.mxu0 %v3313
      %v3428 = vpop.f32.mrf.mxu0
      %v3429 = vadd.f32 %v3217, %v3428
      %3430 = vdwg.mxu0
      %v3431 = vld [vmem:[#allocation3 + $0x2] sm:$0xff]
      %v3432 = vld [vmem:[#allocation3 + $0xa] sm:$0xff]
      %v3433 = vld [vmem:[#allocation3 + $0x1a] sm:$0xff]
      %v3434 = vld [vmem:[#allocation3 + $0x22] sm:$0xff]
      %v3435 = vld [vmem:[#allocation3 + $0x32] sm:$0xff]
      %v3436 = vld [vmem:[#allocation3 + $0x3a] sm:$0xff]
      %v3437 = vld [vmem:[#allocation3 + $0x4a] sm:$0xff]
      %v3438 = vld [vmem:[#allocation3 + $0x52] sm:$0xff]
      %v3439 = vld [vmem:[#allocation3 + $0x62] sm:$0xff]
      %v3440 = vld [vmem:[#allocation3 + $0x6a] sm:$0xff]
      %v3441 = vld [vmem:[#allocation3 + $0x7a] sm:$0xff]
      %v3442 = vld [vmem:[#allocation3 + $0x82] sm:$0xff]
      %v3443 = vld [vmem:[#allocation3 + $0x92] sm:$0xff]
      %v3444 = vld [vmem:[#allocation3 + $0x9a] sm:$0xff]
      %v3445 = vld [vmem:[#allocation3 + $0xaa] sm:$0xff]
      %v3446 = vld [vmem:[#allocation3 + $0xb2] sm:$0xff]
      %v3447 = vld [vmem:[#allocation3 + $0xc2] sm:$0xff]
      %v3448 = vld [vmem:[#allocation3 + $0xca] sm:$0xff]
      %v3449 = vld [vmem:[#allocation3 + $0xda] sm:$0xff]
      %v3450 = vld [vmem:[#allocation3 + $0xe2] sm:$0xff]
      %v3451 = vld [vmem:[#allocation3 + $0xf2] sm:$0xff]
      %v3452 = vld [vmem:[#allocation3 + $0xfa] sm:$0xff]
      %v3453 = vld [vmem:[#allocation3 + $0x10a] sm:$0xff]
      %v3454 = vld [vmem:[#allocation3 + $0x112] sm:$0xff]
      %v3455 = vld [vmem:[#allocation3 + $0x122] sm:$0xff]
      %v3456 = vld [vmem:[#allocation3 + $0x12a] sm:$0xff]
      %v3457 = vld [vmem:[#allocation3 + $0x13a] sm:$0xff]
      %v3458 = vld [vmem:[#allocation3 + $0x142] sm:$0xff]
      %v3459 = vld [vmem:[#allocation3 + $0x152] sm:$0xff]
      %v3460 = vld [vmem:[#allocation3 + $0x15a] sm:$0xff]
      %v3461 = vld [vmem:[#allocation3 + $0x16a] sm:$0xff]
      %v3462 = vld [vmem:[#allocation3 + $0x172] sm:$0xff]
      %s3463 = scalar_lea.vmem %s3, 8
      %v3464 = vld [vmem:[%s3463] sm:$0xf]
      %v3466 = vsel %vm257, %v3431, 0
      %v3469 = vsel %vm257, %v3432, 0
      %v3472 = vsel %vm257, %v3433, 0
      %v3475 = vsel %vm257, %v3434, 0
      %v3478 = vsel %vm257, %v3435, 0
      %v3481 = vsel %vm257, %v3436, 0
      %v3484 = vsel %vm257, %v3437, 0
      %v3487 = vsel %vm257, %v3438, 0
      %v3490 = vsel %vm257, %v3439, 0
      %v3493 = vsel %vm257, %v3440, 0
      %v3496 = vsel %vm257, %v3441, 0
      %v3499 = vsel %vm257, %v3442, 0
      %v3502 = vsel %vm257, %v3443, 0
      %v3505 = vsel %vm257, %v3444, 0
      %v3508 = vsel %vm257, %v3445, 0
      %v3511 = vsel %vm257, %v3446, 0
      %v3514 = vsel %vm257, %v3447, 0
      %v3517 = vsel %vm257, %v3448, 0
      %v3520 = vsel %vm257, %v3449, 0
      %v3523 = vsel %vm257, %v3450, 0
      %v3526 = vsel %vm257, %v3451, 0
      %v3529 = vsel %vm257, %v3452, 0
      %v3532 = vsel %vm257, %v3453, 0
      %v3535 = vsel %vm257, %v3454, 0
      %v3538 = vsel %vm257, %v3455, 0
      %v3541 = vsel %vm257, %v3456, 0
      %v3544 = vsel %vm257, %v3457, 0
      %v3547 = vsel %vm257, %v3458, 0
      %v3550 = vsel %vm257, %v3459, 0
      %v3553 = vsel %vm257, %v3460, 0
      %v3556 = vsel %vm257, %v3461, 0
      %v3559 = vsel %vm257, %v3462, 0
      %v3562 = vsel %vm509, %v3464, 0
      %3564 = vmatpush.msra.mxu0 0.0
      %3565 = vmatpush.msra.mxu0 0.0
      %3566 = vmatpush.msra.mxu0 0.0
      %3567 = vmatpush.msra.mxu0 0.0
      %3568 = vmatpush.msra.mxu0 0.0
      %3569 = vmatpush.msra.mxu0 0.0
      %3570 = vmatpush.msra.mxu0 0.0
      %3571 = vmatpush.msra.mxu0 0.0
      %3572 = vmatpush.msra.mxu0 0.0
      %3573 = vmatpush.msra.mxu0 0.0
      %3574 = vmatpush.msra.mxu0 0.0
      %3575 = vmatpush.msra.mxu0 0.0
      %3576 = vmatpush.msra.mxu0 0.0
      %3577 = vmatpush.msra.mxu0 0.0
      %3578 = vmatpush.msra.mxu0 0.0
      %3579 = vmatpush.msra.mxu0 %v3562
      %3580 = vmatmul.f32.gmra.mxu0 %v3466
      %v3581 = vpop.f32.mrf.mxu0
      %v3582 = vadd.f32 0.0, %v3581
      %3583 = vmatmul.f32.gmra.mxu0 %v3469
      %v3584 = vpop.f32.mrf.mxu0
      %v3585 = vadd.f32 0.0, %v3584
      %3586 = vmatmul.f32.gmra.mxu0 %v3472
      %v3587 = vpop.f32.mrf.mxu0
      %v3588 = vadd.f32 0.0, %v3587
      %3589 = vmatmul.f32.gmra.mxu0 %v3475
      %v3590 = vpop.f32.mrf.mxu0
      %v3591 = vadd.f32 0.0, %v3590
      %3592 = vmatmul.f32.gmra.mxu0 %v3478
      %v3593 = vpop.f32.mrf.mxu0
      %v3594 = vadd.f32 0.0, %v3593
      %3595 = vmatmul.f32.gmra.mxu0 %v3481
      %v3596 = vpop.f32.mrf.mxu0
      %v3597 = vadd.f32 0.0, %v3596
      %3598 = vmatmul.f32.gmra.mxu0 %v3484
      %v3599 = vpop.f32.mrf.mxu0
      %v3600 = vadd.f32 0.0, %v3599
      %3601 = vmatmul.f32.gmra.mxu0 %v3487
      %v3602 = vpop.f32.mrf.mxu0
      %v3603 = vadd.f32 0.0, %v3602
      %3604 = vmatmul.f32.gmra.mxu0 %v3490
      %v3605 = vpop.f32.mrf.mxu0
      %v3606 = vadd.f32 0.0, %v3605
      %3607 = vmatmul.f32.gmra.mxu0 %v3493
      %v3608 = vpop.f32.mrf.mxu0
      %v3609 = vadd.f32 0.0, %v3608
      %3610 = vmatmul.f32.gmra.mxu0 %v3496
      %v3611 = vpop.f32.mrf.mxu0
      %v3612 = vadd.f32 0.0, %v3611
      %3613 = vmatmul.f32.gmra.mxu0 %v3499
      %v3614 = vpop.f32.mrf.mxu0
      %v3615 = vadd.f32 0.0, %v3614
      %3616 = vmatmul.f32.gmra.mxu0 %v3502
      %v3617 = vpop.f32.mrf.mxu0
      %v3618 = vadd.f32 0.0, %v3617
      %3619 = vmatmul.f32.gmra.mxu0 %v3505
      %v3620 = vpop.f32.mrf.mxu0
      %v3621 = vadd.f32 0.0, %v3620
      %3622 = vmatmul.f32.gmra.mxu0 %v3508
      %v3623 = vpop.f32.mrf.mxu0
      %v3624 = vadd.f32 0.0, %v3623
      %3625 = vmatmul.f32.gmra.mxu0 %v3511
      %v3626 = vpop.f32.mrf.mxu0
      %v3627 = vadd.f32 0.0, %v3626
      %3628 = vmatmul.f32.gmra.mxu0 %v3514
      %v3629 = vpop.f32.mrf.mxu0
      %v3630 = vadd.f32 0.0, %v3629
      %3631 = vmatmul.f32.gmra.mxu0 %v3517
      %v3632 = vpop.f32.mrf.mxu0
      %v3633 = vadd.f32 0.0, %v3632
      %3634 = vmatmul.f32.gmra.mxu0 %v3520
      %v3635 = vpop.f32.mrf.mxu0
      %v3636 = vadd.f32 0.0, %v3635
      %3637 = vmatmul.f32.gmra.mxu0 %v3523
      %v3638 = vpop.f32.mrf.mxu0
      %v3639 = vadd.f32 0.0, %v3638
      %3640 = vmatmul.f32.gmra.mxu0 %v3526
      %v3641 = vpop.f32.mrf.mxu0
      %v3642 = vadd.f32 0.0, %v3641
      %3643 = vmatmul.f32.gmra.mxu0 %v3529
      %v3644 = vpop.f32.mrf.mxu0
      %v3645 = vadd.f32 0.0, %v3644
      %3646 = vmatmul.f32.gmra.mxu0 %v3532
      %v3647 = vpop.f32.mrf.mxu0
      %v3648 = vadd.f32 0.0, %v3647
      %3649 = vmatmul.f32.gmra.mxu0 %v3535
      %v3650 = vpop.f32.mrf.mxu0
      %v3651 = vadd.f32 0.0, %v3650
      %3652 = vmatmul.f32.gmra.mxu0 %v3538
      %v3653 = vpop.f32.mrf.mxu0
      %v3654 = vadd.f32 0.0, %v3653
      %3655 = vmatmul.f32.gmra.mxu0 %v3541
      %v3656 = vpop.f32.mrf.mxu0
      %v3657 = vadd.f32 0.0, %v3656
      %3658 = vmatmul.f32.gmra.mxu0 %v3544
      %v3659 = vpop.f32.mrf.mxu0
      %v3660 = vadd.f32 0.0, %v3659
      %3661 = vmatmul.f32.gmra.mxu0 %v3547
      %v3662 = vpop.f32.mrf.mxu0
      %v3663 = vadd.f32 0.0, %v3662
      %3664 = vmatmul.f32.gmra.mxu0 %v3550
      %v3665 = vpop.f32.mrf.mxu0
      %v3666 = vadd.f32 0.0, %v3665
      %3667 = vmatmul.f32.gmra.mxu0 %v3553
      %v3668 = vpop.f32.mrf.mxu0
      %v3669 = vadd.f32 0.0, %v3668
      %3670 = vmatmul.f32.gmra.mxu0 %v3556
      %v3671 = vpop.f32.mrf.mxu0
      %v3672 = vadd.f32 0.0, %v3671
      %3673 = vmatmul.f32.gmra.mxu0 %v3559
      %v3674 = vpop.f32.mrf.mxu0
      %v3675 = vadd.f32 0.0, %v3674
      %3676 = vdwg.mxu0
      %v3677 = vadd.f32 %v3336, %v3582
      %v3678 = vadd.f32 %v3339, %v3585
      %v3679 = vadd.f32 %v3342, %v3588
      %v3680 = vadd.f32 %v3345, %v3591
      %v3681 = vadd.f32 %v3348, %v3594
      %v3682 = vadd.f32 %v3351, %v3597
      %v3683 = vadd.f32 %v3354, %v3600
      %v3684 = vadd.f32 %v3357, %v3603
      %v3685 = vadd.f32 %v3360, %v3606
      %v3686 = vadd.f32 %v3363, %v3609
      %v3687 = vadd.f32 %v3366, %v3612
      %v3688 = vadd.f32 %v3369, %v3615
      %v3689 = vadd.f32 %v3372, %v3618
      %v3690 = vadd.f32 %v3375, %v3621
      %v3691 = vadd.f32 %v3378, %v3624
      %v3692 = vadd.f32 %v3381, %v3627
      %v3693 = vadd.f32 %v3384, %v3630
      %v3694 = vadd.f32 %v3387, %v3633
      %v3695 = vadd.f32 %v3390, %v3636
      %v3696 = vadd.f32 %v3393, %v3639
      %v3697 = vadd.f32 %v3396, %v3642
      %v3698 = vadd.f32 %v3399, %v3645
      %v3699 = vadd.f32 %v3402, %v3648
      %v3700 = vadd.f32 %v3405, %v3651
      %v3701 = vadd.f32 %v3408, %v3654
      %v3702 = vadd.f32 %v3411, %v3657
      %v3703 = vadd.f32 %v3414, %v3660
      %v3704 = vadd.f32 %v3417, %v3663
      %v3705 = vadd.f32 %v3420, %v3666
      %v3706 = vadd.f32 %v3423, %v3669
      %v3707 = vadd.f32 %v3426, %v3672
      %v3708 = vadd.f32 %v3429, %v3675
      %v3709 = vld [vmem:[%s2907] sm:$0xff]
      %v3710 = vld [vmem:[%s2907 + $0x8] sm:$0xff]
      %v3711 = vld [vmem:[%s2907 + $0x18] sm:$0xff]
      %v3712 = vld [vmem:[%s2907 + $0x20] sm:$0xff]
      %v3713 = vld [vmem:[%s2907 + $0x30] sm:$0xff]
      %v3714 = vld [vmem:[%s2907 + $0x38] sm:$0xff]
      %v3715 = vld [vmem:[%s2907 + $0x48] sm:$0xff]
      %v3716 = vld [vmem:[%s2907 + $0x50] sm:$0xff]
      %v3717 = vld [vmem:[%s2907 + $0x60] sm:$0xff]
      %v3718 = vld [vmem:[%s2907 + $0x68] sm:$0xff]
      %v3719 = vld [vmem:[%s2907 + $0x78] sm:$0xff]
      %v3720 = vld [vmem:[%s2907 + $0x80] sm:$0xff]
      %v3721 = vld [vmem:[%s2907 + $0x90] sm:$0xff]
      %v3722 = vld [vmem:[%s2907 + $0x98] sm:$0xff]
      %v3723 = vld [vmem:[%s2907 + $0xa8] sm:$0xff]
      %v3724 = vld [vmem:[%s2907 + $0xb0] sm:$0xff]
      %v3725 = vld [vmem:[%s2907 + $0xc0] sm:$0xff]
      %v3726 = vld [vmem:[%s2907 + $0xc8] sm:$0xff]
      %v3727 = vld [vmem:[%s2907 + $0xd8] sm:$0xff]
      %v3728 = vld [vmem:[%s2907 + $0xe0] sm:$0xff]
      %v3729 = vld [vmem:[%s2907 + $0xf0] sm:$0xff]
      %v3730 = vld [vmem:[%s2907 + $0xf8] sm:$0xff]
      %v3731 = vld [vmem:[%s2907 + $0x108] sm:$0xff]
      %v3732 = vld [vmem:[%s2907 + $0x110] sm:$0xff]
      %v3733 = vld [vmem:[%s2907 + $0x120] sm:$0xff]
      %v3734 = vld [vmem:[%s2907 + $0x128] sm:$0xff]
      %v3735 = vld [vmem:[%s2907 + $0x138] sm:$0xff]
      %v3736 = vld [vmem:[%s2907 + $0x140] sm:$0xff]
      %v3737 = vld [vmem:[%s2907 + $0x150] sm:$0xff]
      %v3738 = vld [vmem:[%s2907 + $0x158] sm:$0xff]
      %v3739 = vld [vmem:[%s2907 + $0x168] sm:$0xff]
      %v3740 = vld [vmem:[%s2907 + $0x170] sm:$0xff]
      %s3741 = scalar_lea.vmem %s3, 12
      %v3742 = vld [vmem:[%s3741] sm:$0xf]
      %v3744 = vsel %vm257, %v3709, 0
      %v3747 = vsel %vm257, %v3710, 0
      %v3750 = vsel %vm257, %v3711, 0
      %v3753 = vsel %vm257, %v3712, 0
      %v3756 = vsel %vm257, %v3713, 0
      %v3759 = vsel %vm257, %v3714, 0
      %v3762 = vsel %vm257, %v3715, 0
      %v3765 = vsel %vm257, %v3716, 0
      %v3768 = vsel %vm257, %v3717, 0
      %v3771 = vsel %vm257, %v3718, 0
      %v3774 = vsel %vm257, %v3719, 0
      %v3777 = vsel %vm257, %v3720, 0
      %v3780 = vsel %vm257, %v3721, 0
      %v3783 = vsel %vm257, %v3722, 0
      %v3786 = vsel %vm257, %v3723, 0
      %v3789 = vsel %vm257, %v3724, 0
      %v3792 = vsel %vm257, %v3725, 0
      %v3795 = vsel %vm257, %v3726, 0
      %v3798 = vsel %vm257, %v3727, 0
      %v3801 = vsel %vm257, %v3728, 0
      %v3804 = vsel %vm257, %v3729, 0
      %v3807 = vsel %vm257, %v3730, 0
      %v3810 = vsel %vm257, %v3731, 0
      %v3813 = vsel %vm257, %v3732, 0
      %v3816 = vsel %vm257, %v3733, 0
      %v3819 = vsel %vm257, %v3734, 0
      %v3822 = vsel %vm257, %v3735, 0
      %v3825 = vsel %vm257, %v3736, 0
      %v3828 = vsel %vm257, %v3737, 0
      %v3831 = vsel %vm257, %v3738, 0
      %v3834 = vsel %vm257, %v3739, 0
      %v3837 = vsel %vm257, %v3740, 0
      %v3840 = vsel %vm509, %v3742, 0
      %3842 = vmatpush.msra.mxu0 0.0
      %3843 = vmatpush.msra.mxu0 0.0
      %3844 = vmatpush.msra.mxu0 0.0
      %3845 = vmatpush.msra.mxu0 0.0
      %3846 = vmatpush.msra.mxu0 0.0
      %3847 = vmatpush.msra.mxu0 0.0
      %3848 = vmatpush.msra.mxu0 0.0
      %3849 = vmatpush.msra.mxu0 0.0
      %3850 = vmatpush.msra.mxu0 0.0
      %3851 = vmatpush.msra.mxu0 0.0
      %3852 = vmatpush.msra.mxu0 0.0
      %3853 = vmatpush.msra.mxu0 0.0
      %3854 = vmatpush.msra.mxu0 0.0
      %3855 = vmatpush.msra.mxu0 0.0
      %3856 = vmatpush.msra.mxu0 0.0
      %3857 = vmatpush.msra.mxu0 %v3840
      %3858 = vmatmul.f32.gmra.mxu0 %v3744
      %v3859 = vpop.f32.mrf.mxu0
      %v3860 = vadd.f32 0.0, %v3859
      %3861 = vmatmul.f32.gmra.mxu0 %v3747
      %v3862 = vpop.f32.mrf.mxu0
      %v3863 = vadd.f32 0.0, %v3862
      %3864 = vmatmul.f32.gmra.mxu0 %v3750
      %v3865 = vpop.f32.mrf.mxu0
      %v3866 = vadd.f32 0.0, %v3865
      %3867 = vmatmul.f32.gmra.mxu0 %v3753
      %v3868 = vpop.f32.mrf.mxu0
      %v3869 = vadd.f32 0.0, %v3868
      %3870 = vmatmul.f32.gmra.mxu0 %v3756
      %v3871 = vpop.f32.mrf.mxu0
      %v3872 = vadd.f32 0.0, %v3871
      %3873 = vmatmul.f32.gmra.mxu0 %v3759
      %v3874 = vpop.f32.mrf.mxu0
      %v3875 = vadd.f32 0.0, %v3874
      %3876 = vmatmul.f32.gmra.mxu0 %v3762
      %v3877 = vpop.f32.mrf.mxu0
      %v3878 = vadd.f32 0.0, %v3877
      %3879 = vmatmul.f32.gmra.mxu0 %v3765
      %v3880 = vpop.f32.mrf.mxu0
      %v3881 = vadd.f32 0.0, %v3880
      %3882 = vmatmul.f32.gmra.mxu0 %v3768
      %v3883 = vpop.f32.mrf.mxu0
      %v3884 = vadd.f32 0.0, %v3883
      %3885 = vmatmul.f32.gmra.mxu0 %v3771
      %v3886 = vpop.f32.mrf.mxu0
      %v3887 = vadd.f32 0.0, %v3886
      %3888 = vmatmul.f32.gmra.mxu0 %v3774
      %v3889 = vpop.f32.mrf.mxu0
      %v3890 = vadd.f32 0.0, %v3889
      %3891 = vmatmul.f32.gmra.mxu0 %v3777
      %v3892 = vpop.f32.mrf.mxu0
      %v3893 = vadd.f32 0.0, %v3892
      %3894 = vmatmul.f32.gmra.mxu0 %v3780
      %v3895 = vpop.f32.mrf.mxu0
      %v3896 = vadd.f32 0.0, %v3895
      %3897 = vmatmul.f32.gmra.mxu0 %v3783
      %v3898 = vpop.f32.mrf.mxu0
      %v3899 = vadd.f32 0.0, %v3898
      %3900 = vmatmul.f32.gmra.mxu0 %v3786
      %v3901 = vpop.f32.mrf.mxu0
      %v3902 = vadd.f32 0.0, %v3901
      %3903 = vmatmul.f32.gmra.mxu0 %v3789
      %v3904 = vpop.f32.mrf.mxu0
      %v3905 = vadd.f32 0.0, %v3904
      %3906 = vmatmul.f32.gmra.mxu0 %v3792
      %v3907 = vpop.f32.mrf.mxu0
      %v3908 = vadd.f32 0.0, %v3907
      %3909 = vmatmul.f32.gmra.mxu0 %v3795
      %v3910 = vpop.f32.mrf.mxu0
      %v3911 = vadd.f32 0.0, %v3910
      %3912 = vmatmul.f32.gmra.mxu0 %v3798
      %v3913 = vpop.f32.mrf.mxu0
      %v3914 = vadd.f32 0.0, %v3913
      %3915 = vmatmul.f32.gmra.mxu0 %v3801
      %v3916 = vpop.f32.mrf.mxu0
      %v3917 = vadd.f32 0.0, %v3916
      %3918 = vmatmul.f32.gmra.mxu0 %v3804
      %v3919 = vpop.f32.mrf.mxu0
      %v3920 = vadd.f32 0.0, %v3919
      %3921 = vmatmul.f32.gmra.mxu0 %v3807
      %v3922 = vpop.f32.mrf.mxu0
      %v3923 = vadd.f32 0.0, %v3922
      %3924 = vmatmul.f32.gmra.mxu0 %v3810
      %v3925 = vpop.f32.mrf.mxu0
      %v3926 = vadd.f32 0.0, %v3925
      %3927 = vmatmul.f32.gmra.mxu0 %v3813
      %v3928 = vpop.f32.mrf.mxu0
      %v3929 = vadd.f32 0.0, %v3928
      %3930 = vmatmul.f32.gmra.mxu0 %v3816
      %v3931 = vpop.f32.mrf.mxu0
      %v3932 = vadd.f32 0.0, %v3931
      %3933 = vmatmul.f32.gmra.mxu0 %v3819
      %v3934 = vpop.f32.mrf.mxu0
      %v3935 = vadd.f32 0.0, %v3934
      %3936 = vmatmul.f32.gmra.mxu0 %v3822
      %v3937 = vpop.f32.mrf.mxu0
      %v3938 = vadd.f32 0.0, %v3937
      %3939 = vmatmul.f32.gmra.mxu0 %v3825
      %v3940 = vpop.f32.mrf.mxu0
      %v3941 = vadd.f32 0.0, %v3940
      %3942 = vmatmul.f32.gmra.mxu0 %v3828
      %v3943 = vpop.f32.mrf.mxu0
      %v3944 = vadd.f32 0.0, %v3943
      %3945 = vmatmul.f32.gmra.mxu0 %v3831
      %v3946 = vpop.f32.mrf.mxu0
      %v3947 = vadd.f32 0.0, %v3946
      %3948 = vmatmul.f32.gmra.mxu0 %v3834
      %v3949 = vpop.f32.mrf.mxu0
      %v3950 = vadd.f32 0.0, %v3949
      %3951 = vmatmul.f32.gmra.mxu0 %v3837
      %v3952 = vpop.f32.mrf.mxu0
      %v3953 = vadd.f32 0.0, %v3952
      %3954 = vdwg.mxu0
      %v3955 = vadd.f32 %v3677, %v3860
      %v3956 = vadd.f32 %v3678, %v3863
      %v3957 = vadd.f32 %v3679, %v3866
      %v3958 = vadd.f32 %v3680, %v3869
      %v3959 = vadd.f32 %v3681, %v3872
      %v3960 = vadd.f32 %v3682, %v3875
      %v3961 = vadd.f32 %v3683, %v3878
      %v3962 = vadd.f32 %v3684, %v3881
      %v3963 = vadd.f32 %v3685, %v3884
      %v3964 = vadd.f32 %v3686, %v3887
      %v3965 = vadd.f32 %v3687, %v3890
      %v3966 = vadd.f32 %v3688, %v3893
      %v3967 = vadd.f32 %v3689, %v3896
      %v3968 = vadd.f32 %v3690, %v3899
      %v3969 = vadd.f32 %v3691, %v3902
      %v3970 = vadd.f32 %v3692, %v3905
      %v3971 = vadd.f32 %v3693, %v3908
      %v3972 = vadd.f32 %v3694, %v3911
      %v3973 = vadd.f32 %v3695, %v3914
      %v3974 = vadd.f32 %v3696, %v3917
      %v3975 = vadd.f32 %v3697, %v3920
      %v3976 = vadd.f32 %v3698, %v3923
      %v3977 = vadd.f32 %v3699, %v3926
      %v3978 = vadd.f32 %v3700, %v3929
      %v3979 = vadd.f32 %v3701, %v3932
      %v3980 = vadd.f32 %v3702, %v3935
      %v3981 = vadd.f32 %v3703, %v3938
      %v3982 = vadd.f32 %v3704, %v3941
      %v3983 = vadd.f32 %v3705, %v3944
      %v3984 = vadd.f32 %v3706, %v3947
      %v3985 = vadd.f32 %v3707, %v3950
      %v3986 = vadd.f32 %v3708, %v3953
      %v3987 = vld [vmem:[%s2907 + $0x1] sm:$0xff]
      %v3988 = vld [vmem:[%s2907 + $0x9] sm:$0xff]
      %v3989 = vld [vmem:[%s2907 + $0x19] sm:$0xff]
      %v3990 = vld [vmem:[%s2907 + $0x21] sm:$0xff]
      %v3991 = vld [vmem:[%s2907 + $0x31] sm:$0xff]
      %v3992 = vld [vmem:[%s2907 + $0x39] sm:$0xff]
      %v3993 = vld [vmem:[%s2907 + $0x49] sm:$0xff]
      %v3994 = vld [vmem:[%s2907 + $0x51] sm:$0xff]
      %v3995 = vld [vmem:[%s2907 + $0x61] sm:$0xff]
      %v3996 = vld [vmem:[%s2907 + $0x69] sm:$0xff]
      %v3997 = vld [vmem:[%s2907 + $0x79] sm:$0xff]
      %v3998 = vld [vmem:[%s2907 + $0x81] sm:$0xff]
      %v3999 = vld [vmem:[%s2907 + $0x91] sm:$0xff]
      %v4000 = vld [vmem:[%s2907 + $0x99] sm:$0xff]
      %v4001 = vld [vmem:[%s2907 + $0xa9] sm:$0xff]
      %v4002 = vld [vmem:[%s2907 + $0xb1] sm:$0xff]
      %v4003 = vld [vmem:[%s2907 + $0xc1] sm:$0xff]
      %v4004 = vld [vmem:[%s2907 + $0xc9] sm:$0xff]
      %v4005 = vld [vmem:[%s2907 + $0xd9] sm:$0xff]
      %v4006 = vld [vmem:[%s2907 + $0xe1] sm:$0xff]
      %v4007 = vld [vmem:[%s2907 + $0xf1] sm:$0xff]
      %v4008 = vld [vmem:[%s2907 + $0xf9] sm:$0xff]
      %v4009 = vld [vmem:[%s2907 + $0x109] sm:$0xff]
      %v4010 = vld [vmem:[%s2907 + $0x111] sm:$0xff]
      %v4011 = vld [vmem:[%s2907 + $0x121] sm:$0xff]
      %v4012 = vld [vmem:[%s2907 + $0x129] sm:$0xff]
      %v4013 = vld [vmem:[%s2907 + $0x139] sm:$0xff]
      %v4014 = vld [vmem:[%s2907 + $0x141] sm:$0xff]
      %v4015 = vld [vmem:[%s2907 + $0x151] sm:$0xff]
      %v4016 = vld [vmem:[%s2907 + $0x159] sm:$0xff]
      %v4017 = vld [vmem:[%s2907 + $0x169] sm:$0xff]
      %v4018 = vld [vmem:[%s2907 + $0x171] sm:$0xff]
      %s4019 = scalar_lea.vmem %s3, 16
      %v4020 = vld [vmem:[%s4019] sm:$0xf]
      %v4022 = vsel %vm257, %v3987, 0
      %v4025 = vsel %vm257, %v3988, 0
      %v4028 = vsel %vm257, %v3989, 0
      %v4031 = vsel %vm257, %v3990, 0
      %v4034 = vsel %vm257, %v3991, 0
      %v4037 = vsel %vm257, %v3992, 0
      %v4040 = vsel %vm257, %v3993, 0
      %v4043 = vsel %vm257, %v3994, 0
      %v4046 = vsel %vm257, %v3995, 0
      %v4049 = vsel %vm257, %v3996, 0
      %v4052 = vsel %vm257, %v3997, 0
      %v4055 = vsel %vm257, %v3998, 0
      %v4058 = vsel %vm257, %v3999, 0
      %v4061 = vsel %vm257, %v4000, 0
      %v4064 = vsel %vm257, %v4001, 0
      %v4067 = vsel %vm257, %v4002, 0
      %v4070 = vsel %vm257, %v4003, 0
      %v4073 = vsel %vm257, %v4004, 0
      %v4076 = vsel %vm257, %v4005, 0
      %v4079 = vsel %vm257, %v4006, 0
      %v4082 = vsel %vm257, %v4007, 0
      %v4085 = vsel %vm257, %v4008, 0
      %v4088 = vsel %vm257, %v4009, 0
      %v4091 = vsel %vm257, %v4010, 0
      %v4094 = vsel %vm257, %v4011, 0
      %v4097 = vsel %vm257, %v4012, 0
      %v4100 = vsel %vm257, %v4013, 0
      %v4103 = vsel %vm257, %v4014, 0
      %v4106 = vsel %vm257, %v4015, 0
      %v4109 = vsel %vm257, %v4016, 0
      %v4112 = vsel %vm257, %v4017, 0
      %v4115 = vsel %vm257, %v4018, 0
      %v4118 = vsel %vm509, %v4020, 0
      %4120 = vmatpush.msra.mxu0 0.0
      %4121 = vmatpush.msra.mxu0 0.0
      %4122 = vmatpush.msra.mxu0 0.0
      %4123 = vmatpush.msra.mxu0 0.0
      %4124 = vmatpush.msra.mxu0 0.0
      %4125 = vmatpush.msra.mxu0 0.0
      %4126 = vmatpush.msra.mxu0 0.0
      %4127 = vmatpush.msra.mxu0 0.0
      %4128 = vmatpush.msra.mxu0 0.0
      %4129 = vmatpush.msra.mxu0 0.0
      %4130 = vmatpush.msra.mxu0 0.0
      %4131 = vmatpush.msra.mxu0 0.0
      %4132 = vmatpush.msra.mxu0 0.0
      %4133 = vmatpush.msra.mxu0 0.0
      %4134 = vmatpush.msra.mxu0 0.0
      %4135 = vmatpush.msra.mxu0 %v4118
      %4136 = vmatmul.f32.gmra.mxu0 %v4022
      %v4137 = vpop.f32.mrf.mxu0
      %v4138 = vadd.f32 0.0, %v4137
      %4139 = vmatmul.f32.gmra.mxu0 %v4025
      %v4140 = vpop.f32.mrf.mxu0
      %v4141 = vadd.f32 0.0, %v4140
      %4142 = vmatmul.f32.gmra.mxu0 %v4028
      %v4143 = vpop.f32.mrf.mxu0
      %v4144 = vadd.f32 0.0, %v4143
      %4145 = vmatmul.f32.gmra.mxu0 %v4031
      %v4146 = vpop.f32.mrf.mxu0
      %v4147 = vadd.f32 0.0, %v4146
      %4148 = vmatmul.f32.gmra.mxu0 %v4034
      %v4149 = vpop.f32.mrf.mxu0
      %v4150 = vadd.f32 0.0, %v4149
      %4151 = vmatmul.f32.gmra.mxu0 %v4037
      %v4152 = vpop.f32.mrf.mxu0
      %v4153 = vadd.f32 0.0, %v4152
      %4154 = vmatmul.f32.gmra.mxu0 %v4040
      %v4155 = vpop.f32.mrf.mxu0
      %v4156 = vadd.f32 0.0, %v4155
      %4157 = vmatmul.f32.gmra.mxu0 %v4043
      %v4158 = vpop.f32.mrf.mxu0
      %v4159 = vadd.f32 0.0, %v4158
      %4160 = vmatmul.f32.gmra.mxu0 %v4046
      %v4161 = vpop.f32.mrf.mxu0
      %v4162 = vadd.f32 0.0, %v4161
      %4163 = vmatmul.f32.gmra.mxu0 %v4049
      %v4164 = vpop.f32.mrf.mxu0
      %v4165 = vadd.f32 0.0, %v4164
      %4166 = vmatmul.f32.gmra.mxu0 %v4052
      %v4167 = vpop.f32.mrf.mxu0
      %v4168 = vadd.f32 0.0, %v4167
      %4169 = vmatmul.f32.gmra.mxu0 %v4055
      %v4170 = vpop.f32.mrf.mxu0
      %v4171 = vadd.f32 0.0, %v4170
      %4172 = vmatmul.f32.gmra.mxu0 %v4058
      %v4173 = vpop.f32.mrf.mxu0
      %v4174 = vadd.f32 0.0, %v4173
      %4175 = vmatmul.f32.gmra.mxu0 %v4061
      %v4176 = vpop.f32.mrf.mxu0
      %v4177 = vadd.f32 0.0, %v4176
      %4178 = vmatmul.f32.gmra.mxu0 %v4064
      %v4179 = vpop.f32.mrf.mxu0
      %v4180 = vadd.f32 0.0, %v4179
      %4181 = vmatmul.f32.gmra.mxu0 %v4067
      %v4182 = vpop.f32.mrf.mxu0
      %v4183 = vadd.f32 0.0, %v4182
      %4184 = vmatmul.f32.gmra.mxu0 %v4070
      %v4185 = vpop.f32.mrf.mxu0
      %v4186 = vadd.f32 0.0, %v4185
      %4187 = vmatmul.f32.gmra.mxu0 %v4073
      %v4188 = vpop.f32.mrf.mxu0
      %v4189 = vadd.f32 0.0, %v4188
      %4190 = vmatmul.f32.gmra.mxu0 %v4076
      %v4191 = vpop.f32.mrf.mxu0
      %v4192 = vadd.f32 0.0, %v4191
      %4193 = vmatmul.f32.gmra.mxu0 %v4079
      %v4194 = vpop.f32.mrf.mxu0
      %v4195 = vadd.f32 0.0, %v4194
      %4196 = vmatmul.f32.gmra.mxu0 %v4082
      %v4197 = vpop.f32.mrf.mxu0
      %v4198 = vadd.f32 0.0, %v4197
      %4199 = vmatmul.f32.gmra.mxu0 %v4085
      %v4200 = vpop.f32.mrf.mxu0
      %v4201 = vadd.f32 0.0, %v4200
      %4202 = vmatmul.f32.gmra.mxu0 %v4088
      %v4203 = vpop.f32.mrf.mxu0
      %v4204 = vadd.f32 0.0, %v4203
      %4205 = vmatmul.f32.gmra.mxu0 %v4091
      %v4206 = vpop.f32.mrf.mxu0
      %v4207 = vadd.f32 0.0, %v4206
      %4208 = vmatmul.f32.gmra.mxu0 %v4094
      %v4209 = vpop.f32.mrf.mxu0
      %v4210 = vadd.f32 0.0, %v4209
      %4211 = vmatmul.f32.gmra.mxu0 %v4097
      %v4212 = vpop.f32.mrf.mxu0
      %v4213 = vadd.f32 0.0, %v4212
      %4214 = vmatmul.f32.gmra.mxu0 %v4100
      %v4215 = vpop.f32.mrf.mxu0
      %v4216 = vadd.f32 0.0, %v4215
      %4217 = vmatmul.f32.gmra.mxu0 %v4103
      %v4218 = vpop.f32.mrf.mxu0
      %v4219 = vadd.f32 0.0, %v4218
      %4220 = vmatmul.f32.gmra.mxu0 %v4106
      %v4221 = vpop.f32.mrf.mxu0
      %v4222 = vadd.f32 0.0, %v4221
      %4223 = vmatmul.f32.gmra.mxu0 %v4109
      %v4224 = vpop.f32.mrf.mxu0
      %v4225 = vadd.f32 0.0, %v4224
      %4226 = vmatmul.f32.gmra.mxu0 %v4112
      %v4227 = vpop.f32.mrf.mxu0
      %v4228 = vadd.f32 0.0, %v4227
      %4229 = vmatmul.f32.gmra.mxu0 %v4115
      %v4230 = vpop.f32.mrf.mxu0
      %v4231 = vadd.f32 0.0, %v4230
      %4232 = vdwg.mxu0
      %v4233 = vadd.f32 %v3955, %v4138
      %v4234 = vadd.f32 %v3956, %v4141
      %v4235 = vadd.f32 %v3957, %v4144
      %v4236 = vadd.f32 %v3958, %v4147
      %v4237 = vadd.f32 %v3959, %v4150
      %v4238 = vadd.f32 %v3960, %v4153
      %v4239 = vadd.f32 %v3961, %v4156
      %v4240 = vadd.f32 %v3962, %v4159
      %v4241 = vadd.f32 %v3963, %v4162
      %v4242 = vadd.f32 %v3964, %v4165
      %v4243 = vadd.f32 %v3965, %v4168
      %v4244 = vadd.f32 %v3966, %v4171
      %v4245 = vadd.f32 %v3967, %v4174
      %v4246 = vadd.f32 %v3968, %v4177
      %v4247 = vadd.f32 %v3969, %v4180
      %v4248 = vadd.f32 %v3970, %v4183
      %v4249 = vadd.f32 %v3971, %v4186
      %v4250 = vadd.f32 %v3972, %v4189
      %v4251 = vadd.f32 %v3973, %v4192
      %v4252 = vadd.f32 %v3974, %v4195
      %v4253 = vadd.f32 %v3975, %v4198
      %v4254 = vadd.f32 %v3976, %v4201
      %v4255 = vadd.f32 %v3977, %v4204
      %v4256 = vadd.f32 %v3978, %v4207
      %v4257 = vadd.f32 %v3979, %v4210
      %v4258 = vadd.f32 %v3980, %v4213
      %v4259 = vadd.f32 %v3981, %v4216
      %v4260 = vadd.f32 %v3982, %v4219
      %v4261 = vadd.f32 %v3983, %v4222
      %v4262 = vadd.f32 %v3984, %v4225
      %v4263 = vadd.f32 %v3985, %v4228
      %v4264 = vadd.f32 %v3986, %v4231
      %v4265 = vld [vmem:[%s2907 + $0x2] sm:$0xff]
      %v4266 = vld [vmem:[%s2907 + $0xa] sm:$0xff]
      %v4267 = vld [vmem:[%s2907 + $0x1a] sm:$0xff]
      %v4268 = vld [vmem:[%s2907 + $0x22] sm:$0xff]
      %v4269 = vld [vmem:[%s2907 + $0x32] sm:$0xff]
      %v4270 = vld [vmem:[%s2907 + $0x3a] sm:$0xff]
      %v4271 = vld [vmem:[%s2907 + $0x4a] sm:$0xff]
      %v4272 = vld [vmem:[%s2907 + $0x52] sm:$0xff]
      %v4273 = vld [vmem:[%s2907 + $0x62] sm:$0xff]
      %v4274 = vld [vmem:[%s2907 + $0x6a] sm:$0xff]
      %v4275 = vld [vmem:[%s2907 + $0x7a] sm:$0xff]
      %v4276 = vld [vmem:[%s2907 + $0x82] sm:$0xff]
      %v4277 = vld [vmem:[%s2907 + $0x92] sm:$0xff]
      %v4278 = vld [vmem:[%s2907 + $0x9a] sm:$0xff]
      %v4279 = vld [vmem:[%s2907 + $0xaa] sm:$0xff]
      %v4280 = vld [vmem:[%s2907 + $0xb2] sm:$0xff]
      %v4281 = vld [vmem:[%s2907 + $0xc2] sm:$0xff]
      %v4282 = vld [vmem:[%s2907 + $0xca] sm:$0xff]
      %v4283 = vld [vmem:[%s2907 + $0xda] sm:$0xff]
      %v4284 = vld [vmem:[%s2907 + $0xe2] sm:$0xff]
      %v4285 = vld [vmem:[%s2907 + $0xf2] sm:$0xff]
      %v4286 = vld [vmem:[%s2907 + $0xfa] sm:$0xff]
      %v4287 = vld [vmem:[%s2907 + $0x10a] sm:$0xff]
      %v4288 = vld [vmem:[%s2907 + $0x112] sm:$0xff]
      %v4289 = vld [vmem:[%s2907 + $0x122] sm:$0xff]
      %v4290 = vld [vmem:[%s2907 + $0x12a] sm:$0xff]
      %v4291 = vld [vmem:[%s2907 + $0x13a] sm:$0xff]
      %v4292 = vld [vmem:[%s2907 + $0x142] sm:$0xff]
      %v4293 = vld [vmem:[%s2907 + $0x152] sm:$0xff]
      %v4294 = vld [vmem:[%s2907 + $0x15a] sm:$0xff]
      %v4295 = vld [vmem:[%s2907 + $0x16a] sm:$0xff]
      %v4296 = vld [vmem:[%s2907 + $0x172] sm:$0xff]
      %s4297 = scalar_lea.vmem %s3, 20
      %v4298 = vld [vmem:[%s4297] sm:$0xf]
      %v4300 = vsel %vm257, %v4265, 0
      %v4303 = vsel %vm257, %v4266, 0
      %v4306 = vsel %vm257, %v4267, 0
      %v4309 = vsel %vm257, %v4268, 0
      %v4312 = vsel %vm257, %v4269, 0
      %v4315 = vsel %vm257, %v4270, 0
      %v4318 = vsel %vm257, %v4271, 0
      %v4321 = vsel %vm257, %v4272, 0
      %v4324 = vsel %vm257, %v4273, 0
      %v4327 = vsel %vm257, %v4274, 0
      %v4330 = vsel %vm257, %v4275, 0
      %v4333 = vsel %vm257, %v4276, 0
      %v4336 = vsel %vm257, %v4277, 0
      %v4339 = vsel %vm257, %v4278, 0
      %v4342 = vsel %vm257, %v4279, 0
      %v4345 = vsel %vm257, %v4280, 0
      %v4348 = vsel %vm257, %v4281, 0
      %v4351 = vsel %vm257, %v4282, 0
      %v4354 = vsel %vm257, %v4283, 0
      %v4357 = vsel %vm257, %v4284, 0
      %v4360 = vsel %vm257, %v4285, 0
      %v4363 = vsel %vm257, %v4286, 0
      %v4366 = vsel %vm257, %v4287, 0
      %v4369 = vsel %vm257, %v4288, 0
      %v4372 = vsel %vm257, %v4289, 0
      %v4375 = vsel %vm257, %v4290, 0
      %v4378 = vsel %vm257, %v4291, 0
      %v4381 = vsel %vm257, %v4292, 0
      %v4384 = vsel %vm257, %v4293, 0
      %v4387 = vsel %vm257, %v4294, 0
      %v4390 = vsel %vm257, %v4295, 0
      %v4393 = vsel %vm257, %v4296, 0
      %v4396 = vsel %vm509, %v4298, 0
      %4398 = vmatpush.msra.mxu0 0.0
      %4399 = vmatpush.msra.mxu0 0.0
      %4400 = vmatpush.msra.mxu0 0.0
      %4401 = vmatpush.msra.mxu0 0.0
      %4402 = vmatpush.msra.mxu0 0.0
      %4403 = vmatpush.msra.mxu0 0.0
      %4404 = vmatpush.msra.mxu0 0.0
      %4405 = vmatpush.msra.mxu0 0.0
      %4406 = vmatpush.msra.mxu0 0.0
      %4407 = vmatpush.msra.mxu0 0.0
      %4408 = vmatpush.msra.mxu0 0.0
      %4409 = vmatpush.msra.mxu0 0.0
      %4410 = vmatpush.msra.mxu0 0.0
      %4411 = vmatpush.msra.mxu0 0.0
      %4412 = vmatpush.msra.mxu0 0.0
      %4413 = vmatpush.msra.mxu0 %v4396
      %4414 = vmatmul.f32.gmra.mxu0 %v4300
      %v4415 = vpop.f32.mrf.mxu0
      %v4416 = vadd.f32 0.0, %v4415
      %4417 = vmatmul.f32.gmra.mxu0 %v4303
      %v4418 = vpop.f32.mrf.mxu0
      %v4419 = vadd.f32 0.0, %v4418
      %4420 = vmatmul.f32.gmra.mxu0 %v4306
      %v4421 = vpop.f32.mrf.mxu0
      %v4422 = vadd.f32 0.0, %v4421
      %4423 = vmatmul.f32.gmra.mxu0 %v4309
      %v4424 = vpop.f32.mrf.mxu0
      %v4425 = vadd.f32 0.0, %v4424
      %4426 = vmatmul.f32.gmra.mxu0 %v4312
      %v4427 = vpop.f32.mrf.mxu0
      %v4428 = vadd.f32 0.0, %v4427
      %4429 = vmatmul.f32.gmra.mxu0 %v4315
      %v4430 = vpop.f32.mrf.mxu0
      %v4431 = vadd.f32 0.0, %v4430
      %4432 = vmatmul.f32.gmra.mxu0 %v4318
      %v4433 = vpop.f32.mrf.mxu0
      %v4434 = vadd.f32 0.0, %v4433
      %4435 = vmatmul.f32.gmra.mxu0 %v4321
      %v4436 = vpop.f32.mrf.mxu0
      %v4437 = vadd.f32 0.0, %v4436
      %4438 = vmatmul.f32.gmra.mxu0 %v4324
      %v4439 = vpop.f32.mrf.mxu0
      %v4440 = vadd.f32 0.0, %v4439
      %4441 = vmatmul.f32.gmra.mxu0 %v4327
      %v4442 = vpop.f32.mrf.mxu0
      %v4443 = vadd.f32 0.0, %v4442
      %4444 = vmatmul.f32.gmra.mxu0 %v4330
      %v4445 = vpop.f32.mrf.mxu0
      %v4446 = vadd.f32 0.0, %v4445
      %4447 = vmatmul.f32.gmra.mxu0 %v4333
      %v4448 = vpop.f32.mrf.mxu0
      %v4449 = vadd.f32 0.0, %v4448
      %4450 = vmatmul.f32.gmra.mxu0 %v4336
      %v4451 = vpop.f32.mrf.mxu0
      %v4452 = vadd.f32 0.0, %v4451
      %4453 = vmatmul.f32.gmra.mxu0 %v4339
      %v4454 = vpop.f32.mrf.mxu0
      %v4455 = vadd.f32 0.0, %v4454
      %4456 = vmatmul.f32.gmra.mxu0 %v4342
      %v4457 = vpop.f32.mrf.mxu0
      %v4458 = vadd.f32 0.0, %v4457
      %4459 = vmatmul.f32.gmra.mxu0 %v4345
      %v4460 = vpop.f32.mrf.mxu0
      %v4461 = vadd.f32 0.0, %v4460
      %4462 = vmatmul.f32.gmra.mxu0 %v4348
      %v4463 = vpop.f32.mrf.mxu0
      %v4464 = vadd.f32 0.0, %v4463
      %4465 = vmatmul.f32.gmra.mxu0 %v4351
      %v4466 = vpop.f32.mrf.mxu0
      %v4467 = vadd.f32 0.0, %v4466
      %4468 = vmatmul.f32.gmra.mxu0 %v4354
      %v4469 = vpop.f32.mrf.mxu0
      %v4470 = vadd.f32 0.0, %v4469
      %4471 = vmatmul.f32.gmra.mxu0 %v4357
      %v4472 = vpop.f32.mrf.mxu0
      %v4473 = vadd.f32 0.0, %v4472
      %4474 = vmatmul.f32.gmra.mxu0 %v4360
      %v4475 = vpop.f32.mrf.mxu0
      %v4476 = vadd.f32 0.0, %v4475
      %4477 = vmatmul.f32.gmra.mxu0 %v4363
      %v4478 = vpop.f32.mrf.mxu0
      %v4479 = vadd.f32 0.0, %v4478
      %4480 = vmatmul.f32.gmra.mxu0 %v4366
      %v4481 = vpop.f32.mrf.mxu0
      %v4482 = vadd.f32 0.0, %v4481
      %4483 = vmatmul.f32.gmra.mxu0 %v4369
      %v4484 = vpop.f32.mrf.mxu0
      %v4485 = vadd.f32 0.0, %v4484
      %4486 = vmatmul.f32.gmra.mxu0 %v4372
      %v4487 = vpop.f32.mrf.mxu0
      %v4488 = vadd.f32 0.0, %v4487
      %4489 = vmatmul.f32.gmra.mxu0 %v4375
      %v4490 = vpop.f32.mrf.mxu0
      %v4491 = vadd.f32 0.0, %v4490
      %4492 = vmatmul.f32.gmra.mxu0 %v4378
      %v4493 = vpop.f32.mrf.mxu0
      %v4494 = vadd.f32 0.0, %v4493
      %4495 = vmatmul.f32.gmra.mxu0 %v4381
      %v4496 = vpop.f32.mrf.mxu0
      %v4497 = vadd.f32 0.0, %v4496
      %4498 = vmatmul.f32.gmra.mxu0 %v4384
      %v4499 = vpop.f32.mrf.mxu0
      %v4500 = vadd.f32 0.0, %v4499
      %4501 = vmatmul.f32.gmra.mxu0 %v4387
      %v4502 = vpop.f32.mrf.mxu0
      %v4503 = vadd.f32 0.0, %v4502
      %4504 = vmatmul.f32.gmra.mxu0 %v4390
      %v4505 = vpop.f32.mrf.mxu0
      %v4506 = vadd.f32 0.0, %v4505
      %4507 = vmatmul.f32.gmra.mxu0 %v4393
      %v4508 = vpop.f32.mrf.mxu0
      %v4509 = vadd.f32 0.0, %v4508
      %4510 = vdwg.mxu0
      %v4511 = vadd.f32 %v4233, %v4416
      %v4512 = vadd.f32 %v4234, %v4419
      %v4513 = vadd.f32 %v4235, %v4422
      %v4514 = vadd.f32 %v4236, %v4425
      %v4515 = vadd.f32 %v4237, %v4428
      %v4516 = vadd.f32 %v4238, %v4431
      %v4517 = vadd.f32 %v4239, %v4434
      %v4518 = vadd.f32 %v4240, %v4437
      %v4519 = vadd.f32 %v4241, %v4440
      %v4520 = vadd.f32 %v4242, %v4443
      %v4521 = vadd.f32 %v4243, %v4446
      %v4522 = vadd.f32 %v4244, %v4449
      %v4523 = vadd.f32 %v4245, %v4452
      %v4524 = vadd.f32 %v4246, %v4455
      %v4525 = vadd.f32 %v4247, %v4458
      %v4526 = vadd.f32 %v4248, %v4461
      %v4527 = vadd.f32 %v4249, %v4464
      %v4528 = vadd.f32 %v4250, %v4467
      %v4529 = vadd.f32 %v4251, %v4470
      %v4530 = vadd.f32 %v4252, %v4473
      %v4531 = vadd.f32 %v4253, %v4476
      %v4532 = vadd.f32 %v4254, %v4479
      %v4533 = vadd.f32 %v4255, %v4482
      %v4534 = vadd.f32 %v4256, %v4485
      %v4535 = vadd.f32 %v4257, %v4488
      %v4536 = vadd.f32 %v4258, %v4491
      %v4537 = vadd.f32 %v4259, %v4494
      %v4538 = vadd.f32 %v4260, %v4497
      %v4539 = vadd.f32 %v4261, %v4500
      %v4540 = vadd.f32 %v4262, %v4503
      %v4541 = vadd.f32 %v4263, %v4506
      %v4542 = vadd.f32 %v4264, %v4509
      %s4543 = scalar_lea.vmem [#allocation3], 48
      %v4544 = vld [vmem:[%s4543] sm:$0xff]
      %v4545 = vld [vmem:[%s4543 + $0x8] sm:$0xff]
      %v4546 = vld [vmem:[%s4543 + $0x18] sm:$0xff]
      %v4547 = vld [vmem:[%s4543 + $0x20] sm:$0xff]
      %v4548 = vld [vmem:[%s4543 + $0x30] sm:$0xff]
      %v4549 = vld [vmem:[%s4543 + $0x38] sm:$0xff]
      %v4550 = vld [vmem:[%s4543 + $0x48] sm:$0xff]
      %v4551 = vld [vmem:[%s4543 + $0x50] sm:$0xff]
      %v4552 = vld [vmem:[%s4543 + $0x60] sm:$0xff]
      %v4553 = vld [vmem:[%s4543 + $0x68] sm:$0xff]
      %v4554 = vld [vmem:[%s4543 + $0x78] sm:$0xff]
      %v4555 = vld [vmem:[%s4543 + $0x80] sm:$0xff]
      %v4556 = vld [vmem:[%s4543 + $0x90] sm:$0xff]
      %v4557 = vld [vmem:[%s4543 + $0x98] sm:$0xff]
      %v4558 = vld [vmem:[%s4543 + $0xa8] sm:$0xff]
      %v4559 = vld [vmem:[%s4543 + $0xb0] sm:$0xff]
      %v4560 = vld [vmem:[%s4543 + $0xc0] sm:$0xff]
      %v4561 = vld [vmem:[%s4543 + $0xc8] sm:$0xff]
      %v4562 = vld [vmem:[%s4543 + $0xd8] sm:$0xff]
      %v4563 = vld [vmem:[%s4543 + $0xe0] sm:$0xff]
      %v4564 = vld [vmem:[%s4543 + $0xf0] sm:$0xff]
      %v4565 = vld [vmem:[%s4543 + $0xf8] sm:$0xff]
      %v4566 = vld [vmem:[%s4543 + $0x108] sm:$0xff]
      %v4567 = vld [vmem:[%s4543 + $0x110] sm:$0xff]
      %v4568 = vld [vmem:[%s4543 + $0x120] sm:$0xff]
      %v4569 = vld [vmem:[%s4543 + $0x128] sm:$0xff]
      %v4570 = vld [vmem:[%s4543 + $0x138] sm:$0xff]
      %v4571 = vld [vmem:[%s4543 + $0x140] sm:$0xff]
      %v4572 = vld [vmem:[%s4543 + $0x150] sm:$0xff]
      %v4573 = vld [vmem:[%s4543 + $0x158] sm:$0xff]
      %v4574 = vld [vmem:[%s4543 + $0x168] sm:$0xff]
      %v4575 = vld [vmem:[%s4543 + $0x170] sm:$0xff]
      %s4576 = scalar_lea.vmem %s3, 24
      %v4577 = vld [vmem:[%s4576] sm:$0xf]
      %v4579 = vsel %vm257, %v4544, 0
      %v4582 = vsel %vm257, %v4545, 0
      %v4585 = vsel %vm257, %v4546, 0
      %v4588 = vsel %vm257, %v4547, 0
      %v4591 = vsel %vm257, %v4548, 0
      %v4594 = vsel %vm257, %v4549, 0
      %v4597 = vsel %vm257, %v4550, 0
      %v4600 = vsel %vm257, %v4551, 0
      %v4603 = vsel %vm257, %v4552, 0
      %v4606 = vsel %vm257, %v4553, 0
      %v4609 = vsel %vm257, %v4554, 0
      %v4612 = vsel %vm257, %v4555, 0
      %v4615 = vsel %vm257, %v4556, 0
      %v4618 = vsel %vm257, %v4557, 0
      %v4621 = vsel %vm257, %v4558, 0
      %v4624 = vsel %vm257, %v4559, 0
      %v4627 = vsel %vm257, %v4560, 0
      %v4630 = vsel %vm257, %v4561, 0
      %v4633 = vsel %vm257, %v4562, 0
      %v4636 = vsel %vm257, %v4563, 0
      %v4639 = vsel %vm257, %v4564, 0
      %v4642 = vsel %vm257, %v4565, 0
      %v4645 = vsel %vm257, %v4566, 0
      %v4648 = vsel %vm257, %v4567, 0
      %v4651 = vsel %vm257, %v4568, 0
      %v4654 = vsel %vm257, %v4569, 0
      %v4657 = vsel %vm257, %v4570, 0
      %v4660 = vsel %vm257, %v4571, 0
      %v4663 = vsel %vm257, %v4572, 0
      %v4666 = vsel %vm257, %v4573, 0
      %v4669 = vsel %vm257, %v4574, 0
      %v4672 = vsel %vm257, %v4575, 0
      %v4675 = vsel %vm509, %v4577, 0
      %4677 = vmatpush.msra.mxu0 0.0
      %4678 = vmatpush.msra.mxu0 0.0
      %4679 = vmatpush.msra.mxu0 0.0
      %4680 = vmatpush.msra.mxu0 0.0
      %4681 = vmatpush.msra.mxu0 0.0
      %4682 = vmatpush.msra.mxu0 0.0
      %4683 = vmatpush.msra.mxu0 0.0
      %4684 = vmatpush.msra.mxu0 0.0
      %4685 = vmatpush.msra.mxu0 0.0
      %4686 = vmatpush.msra.mxu0 0.0
      %4687 = vmatpush.msra.mxu0 0.0
      %4688 = vmatpush.msra.mxu0 0.0
      %4689 = vmatpush.msra.mxu0 0.0
      %4690 = vmatpush.msra.mxu0 0.0
      %4691 = vmatpush.msra.mxu0 0.0
      %4692 = vmatpush.msra.mxu0 %v4675
      %4693 = vmatmul.f32.gmra.mxu0 %v4579
      %v4694 = vpop.f32.mrf.mxu0
      %v4695 = vadd.f32 0.0, %v4694
      %4696 = vmatmul.f32.gmra.mxu0 %v4582
      %v4697 = vpop.f32.mrf.mxu0
      %v4698 = vadd.f32 0.0, %v4697
      %4699 = vmatmul.f32.gmra.mxu0 %v4585
      %v4700 = vpop.f32.mrf.mxu0
      %v4701 = vadd.f32 0.0, %v4700
      %4702 = vmatmul.f32.gmra.mxu0 %v4588
      %v4703 = vpop.f32.mrf.mxu0
      %v4704 = vadd.f32 0.0, %v4703
      %4705 = vmatmul.f32.gmra.mxu0 %v4591
      %v4706 = vpop.f32.mrf.mxu0
      %v4707 = vadd.f32 0.0, %v4706
      %4708 = vmatmul.f32.gmra.mxu0 %v4594
      %v4709 = vpop.f32.mrf.mxu0
      %v4710 = vadd.f32 0.0, %v4709
      %4711 = vmatmul.f32.gmra.mxu0 %v4597
      %v4712 = vpop.f32.mrf.mxu0
      %v4713 = vadd.f32 0.0, %v4712
      %4714 = vmatmul.f32.gmra.mxu0 %v4600
      %v4715 = vpop.f32.mrf.mxu0
      %v4716 = vadd.f32 0.0, %v4715
      %4717 = vmatmul.f32.gmra.mxu0 %v4603
      %v4718 = vpop.f32.mrf.mxu0
      %v4719 = vadd.f32 0.0, %v4718
      %4720 = vmatmul.f32.gmra.mxu0 %v4606
      %v4721 = vpop.f32.mrf.mxu0
      %v4722 = vadd.f32 0.0, %v4721
      %4723 = vmatmul.f32.gmra.mxu0 %v4609
      %v4724 = vpop.f32.mrf.mxu0
      %v4725 = vadd.f32 0.0, %v4724
      %4726 = vmatmul.f32.gmra.mxu0 %v4612
      %v4727 = vpop.f32.mrf.mxu0
      %v4728 = vadd.f32 0.0, %v4727
      %4729 = vmatmul.f32.gmra.mxu0 %v4615
      %v4730 = vpop.f32.mrf.mxu0
      %v4731 = vadd.f32 0.0, %v4730
      %4732 = vmatmul.f32.gmra.mxu0 %v4618
      %v4733 = vpop.f32.mrf.mxu0
      %v4734 = vadd.f32 0.0, %v4733
      %4735 = vmatmul.f32.gmra.mxu0 %v4621
      %v4736 = vpop.f32.mrf.mxu0
      %v4737 = vadd.f32 0.0, %v4736
      %4738 = vmatmul.f32.gmra.mxu0 %v4624
      %v4739 = vpop.f32.mrf.mxu0
      %v4740 = vadd.f32 0.0, %v4739
      %4741 = vmatmul.f32.gmra.mxu0 %v4627
      %v4742 = vpop.f32.mrf.mxu0
      %v4743 = vadd.f32 0.0, %v4742
      %4744 = vmatmul.f32.gmra.mxu0 %v4630
      %v4745 = vpop.f32.mrf.mxu0
      %v4746 = vadd.f32 0.0, %v4745
      %4747 = vmatmul.f32.gmra.mxu0 %v4633
      %v4748 = vpop.f32.mrf.mxu0
      %v4749 = vadd.f32 0.0, %v4748
      %4750 = vmatmul.f32.gmra.mxu0 %v4636
      %v4751 = vpop.f32.mrf.mxu0
      %v4752 = vadd.f32 0.0, %v4751
      %4753 = vmatmul.f32.gmra.mxu0 %v4639
      %v4754 = vpop.f32.mrf.mxu0
      %v4755 = vadd.f32 0.0, %v4754
      %4756 = vmatmul.f32.gmra.mxu0 %v4642
      %v4757 = vpop.f32.mrf.mxu0
      %v4758 = vadd.f32 0.0, %v4757
      %4759 = vmatmul.f32.gmra.mxu0 %v4645
      %v4760 = vpop.f32.mrf.mxu0
      %v4761 = vadd.f32 0.0, %v4760
      %4762 = vmatmul.f32.gmra.mxu0 %v4648
      %v4763 = vpop.f32.mrf.mxu0
      %v4764 = vadd.f32 0.0, %v4763
      %4765 = vmatmul.f32.gmra.mxu0 %v4651
      %v4766 = vpop.f32.mrf.mxu0
      %v4767 = vadd.f32 0.0, %v4766
      %4768 = vmatmul.f32.gmra.mxu0 %v4654
      %v4769 = vpop.f32.mrf.mxu0
      %v4770 = vadd.f32 0.0, %v4769
      %4771 = vmatmul.f32.gmra.mxu0 %v4657
      %v4772 = vpop.f32.mrf.mxu0
      %v4773 = vadd.f32 0.0, %v4772
      %4774 = vmatmul.f32.gmra.mxu0 %v4660
      %v4775 = vpop.f32.mrf.mxu0
      %v4776 = vadd.f32 0.0, %v4775
      %4777 = vmatmul.f32.gmra.mxu0 %v4663
      %v4778 = vpop.f32.mrf.mxu0
      %v4779 = vadd.f32 0.0, %v4778
      %4780 = vmatmul.f32.gmra.mxu0 %v4666
      %v4781 = vpop.f32.mrf.mxu0
      %v4782 = vadd.f32 0.0, %v4781
      %4783 = vmatmul.f32.gmra.mxu0 %v4669
      %v4784 = vpop.f32.mrf.mxu0
      %v4785 = vadd.f32 0.0, %v4784
      %4786 = vmatmul.f32.gmra.mxu0 %v4672
      %v4787 = vpop.f32.mrf.mxu0
      %v4788 = vadd.f32 0.0, %v4787
      %4789 = vdwg.mxu0
      %v4790 = vadd.f32 %v4511, %v4695
      %v4791 = vadd.f32 %v4512, %v4698
      %v4792 = vadd.f32 %v4513, %v4701
      %v4793 = vadd.f32 %v4514, %v4704
      %v4794 = vadd.f32 %v4515, %v4707
      %v4795 = vadd.f32 %v4516, %v4710
      %v4796 = vadd.f32 %v4517, %v4713
      %v4797 = vadd.f32 %v4518, %v4716
      %v4798 = vadd.f32 %v4519, %v4719
      %v4799 = vadd.f32 %v4520, %v4722
      %v4800 = vadd.f32 %v4521, %v4725
      %v4801 = vadd.f32 %v4522, %v4728
      %v4802 = vadd.f32 %v4523, %v4731
      %v4803 = vadd.f32 %v4524, %v4734
      %v4804 = vadd.f32 %v4525, %v4737
      %v4805 = vadd.f32 %v4526, %v4740
      %v4806 = vadd.f32 %v4527, %v4743
      %v4807 = vadd.f32 %v4528, %v4746
      %v4808 = vadd.f32 %v4529, %v4749
      %v4809 = vadd.f32 %v4530, %v4752
      %v4810 = vadd.f32 %v4531, %v4755
      %v4811 = vadd.f32 %v4532, %v4758
      %v4812 = vadd.f32 %v4533, %v4761
      %v4813 = vadd.f32 %v4534, %v4764
      %v4814 = vadd.f32 %v4535, %v4767
      %v4815 = vadd.f32 %v4536, %v4770
      %v4816 = vadd.f32 %v4537, %v4773
      %v4817 = vadd.f32 %v4538, %v4776
      %v4818 = vadd.f32 %v4539, %v4779
      %v4819 = vadd.f32 %v4540, %v4782
      %v4820 = vadd.f32 %v4541, %v4785
      %v4821 = vadd.f32 %v4542, %v4788
      %v4822 = vld [vmem:[%s4543 + $0x1] sm:$0xff]
      %v4823 = vld [vmem:[%s4543 + $0x9] sm:$0xff]
      %v4824 = vld [vmem:[%s4543 + $0x19] sm:$0xff]
      %v4825 = vld [vmem:[%s4543 + $0x21] sm:$0xff]
      %v4826 = vld [vmem:[%s4543 + $0x31] sm:$0xff]
      %v4827 = vld [vmem:[%s4543 + $0x39] sm:$0xff]
      %v4828 = vld [vmem:[%s4543 + $0x49] sm:$0xff]
      %v4829 = vld [vmem:[%s4543 + $0x51] sm:$0xff]
      %v4830 = vld [vmem:[%s4543 + $0x61] sm:$0xff]
      %v4831 = vld [vmem:[%s4543 + $0x69] sm:$0xff]
      %v4832 = vld [vmem:[%s4543 + $0x79] sm:$0xff]
      %v4833 = vld [vmem:[%s4543 + $0x81] sm:$0xff]
      %v4834 = vld [vmem:[%s4543 + $0x91] sm:$0xff]
      %v4835 = vld [vmem:[%s4543 + $0x99] sm:$0xff]
      %v4836 = vld [vmem:[%s4543 + $0xa9] sm:$0xff]
      %v4837 = vld [vmem:[%s4543 + $0xb1] sm:$0xff]
      %v4838 = vld [vmem:[%s4543 + $0xc1] sm:$0xff]
      %v4839 = vld [vmem:[%s4543 + $0xc9] sm:$0xff]
      %v4840 = vld [vmem:[%s4543 + $0xd9] sm:$0xff]
      %v4841 = vld [vmem:[%s4543 + $0xe1] sm:$0xff]
      %v4842 = vld [vmem:[%s4543 + $0xf1] sm:$0xff]
      %v4843 = vld [vmem:[%s4543 + $0xf9] sm:$0xff]
      %v4844 = vld [vmem:[%s4543 + $0x109] sm:$0xff]
      %v4845 = vld [vmem:[%s4543 + $0x111] sm:$0xff]
      %v4846 = vld [vmem:[%s4543 + $0x121] sm:$0xff]
      %v4847 = vld [vmem:[%s4543 + $0x129] sm:$0xff]
      %v4848 = vld [vmem:[%s4543 + $0x139] sm:$0xff]
      %v4849 = vld [vmem:[%s4543 + $0x141] sm:$0xff]
      %v4850 = vld [vmem:[%s4543 + $0x151] sm:$0xff]
      %v4851 = vld [vmem:[%s4543 + $0x159] sm:$0xff]
      %v4852 = vld [vmem:[%s4543 + $0x169] sm:$0xff]
      %v4853 = vld [vmem:[%s4543 + $0x171] sm:$0xff]
      %s4854 = scalar_lea.vmem %s3, 28
      %v4855 = vld [vmem:[%s4854] sm:$0xf]
      %v4857 = vsel %vm257, %v4822, 0
      %v4860 = vsel %vm257, %v4823, 0
      %v4863 = vsel %vm257, %v4824, 0
      %v4866 = vsel %vm257, %v4825, 0
      %v4869 = vsel %vm257, %v4826, 0
      %v4872 = vsel %vm257, %v4827, 0
      %v4875 = vsel %vm257, %v4828, 0
      %v4878 = vsel %vm257, %v4829, 0
      %v4881 = vsel %vm257, %v4830, 0
      %v4884 = vsel %vm257, %v4831, 0
      %v4887 = vsel %vm257, %v4832, 0
      %v4890 = vsel %vm257, %v4833, 0
      %v4893 = vsel %vm257, %v4834, 0
      %v4896 = vsel %vm257, %v4835, 0
      %v4899 = vsel %vm257, %v4836, 0
      %v4902 = vsel %vm257, %v4837, 0
      %v4905 = vsel %vm257, %v4838, 0
      %v4908 = vsel %vm257, %v4839, 0
      %v4911 = vsel %vm257, %v4840, 0
      %v4914 = vsel %vm257, %v4841, 0
      %v4917 = vsel %vm257, %v4842, 0
      %v4920 = vsel %vm257, %v4843, 0
      %v4923 = vsel %vm257, %v4844, 0
      %v4926 = vsel %vm257, %v4845, 0
      %v4929 = vsel %vm257, %v4846, 0
      %v4932 = vsel %vm257, %v4847, 0
      %v4935 = vsel %vm257, %v4848, 0
      %v4938 = vsel %vm257, %v4849, 0
      %v4941 = vsel %vm257, %v4850, 0
      %v4944 = vsel %vm257, %v4851, 0
      %v4947 = vsel %vm257, %v4852, 0
      %v4950 = vsel %vm257, %v4853, 0
      %v4953 = vsel %vm509, %v4855, 0
      %4955 = vmatpush.msra.mxu0 0.0
      %4956 = vmatpush.msra.mxu0 0.0
      %4957 = vmatpush.msra.mxu0 0.0
      %4958 = vmatpush.msra.mxu0 0.0
      %4959 = vmatpush.msra.mxu0 0.0
      %4960 = vmatpush.msra.mxu0 0.0
      %4961 = vmatpush.msra.mxu0 0.0
      %4962 = vmatpush.msra.mxu0 0.0
      %4963 = vmatpush.msra.mxu0 0.0
      %4964 = vmatpush.msra.mxu0 0.0
      %4965 = vmatpush.msra.mxu0 0.0
      %4966 = vmatpush.msra.mxu0 0.0
      %4967 = vmatpush.msra.mxu0 0.0
      %4968 = vmatpush.msra.mxu0 0.0
      %4969 = vmatpush.msra.mxu0 0.0
      %4970 = vmatpush.msra.mxu0 %v4953
      %4971 = vmatmul.f32.gmra.mxu0 %v4857
      %v4972 = vpop.f32.mrf.mxu0
      %v4973 = vadd.f32 0.0, %v4972
      %4974 = vmatmul.f32.gmra.mxu0 %v4860
      %v4975 = vpop.f32.mrf.mxu0
      %v4976 = vadd.f32 0.0, %v4975
      %4977 = vmatmul.f32.gmra.mxu0 %v4863
      %v4978 = vpop.f32.mrf.mxu0
      %v4979 = vadd.f32 0.0, %v4978
      %4980 = vmatmul.f32.gmra.mxu0 %v4866
      %v4981 = vpop.f32.mrf.mxu0
      %v4982 = vadd.f32 0.0, %v4981
      %4983 = vmatmul.f32.gmra.mxu0 %v4869
      %v4984 = vpop.f32.mrf.mxu0
      %v4985 = vadd.f32 0.0, %v4984
      %4986 = vmatmul.f32.gmra.mxu0 %v4872
      %v4987 = vpop.f32.mrf.mxu0
      %v4988 = vadd.f32 0.0, %v4987
      %4989 = vmatmul.f32.gmra.mxu0 %v4875
      %v4990 = vpop.f32.mrf.mxu0
      %v4991 = vadd.f32 0.0, %v4990
      %4992 = vmatmul.f32.gmra.mxu0 %v4878
      %v4993 = vpop.f32.mrf.mxu0
      %v4994 = vadd.f32 0.0, %v4993
      %4995 = vmatmul.f32.gmra.mxu0 %v4881
      %v4996 = vpop.f32.mrf.mxu0
      %v4997 = vadd.f32 0.0, %v4996
      %4998 = vmatmul.f32.gmra.mxu0 %v4884
      %v4999 = vpop.f32.mrf.mxu0
      %v5000 = vadd.f32 0.0, %v4999
      %5001 = vmatmul.f32.gmra.mxu0 %v4887
      %v5002 = vpop.f32.mrf.mxu0
      %v5003 = vadd.f32 0.0, %v5002
      %5004 = vmatmul.f32.gmra.mxu0 %v4890
      %v5005 = vpop.f32.mrf.mxu0
      %v5006 = vadd.f32 0.0, %v5005
      %5007 = vmatmul.f32.gmra.mxu0 %v4893
      %v5008 = vpop.f32.mrf.mxu0
      %v5009 = vadd.f32 0.0, %v5008
      %5010 = vmatmul.f32.gmra.mxu0 %v4896
      %v5011 = vpop.f32.mrf.mxu0
      %v5012 = vadd.f32 0.0, %v5011
      %5013 = vmatmul.f32.gmra.mxu0 %v4899
      %v5014 = vpop.f32.mrf.mxu0
      %v5015 = vadd.f32 0.0, %v5014
      %5016 = vmatmul.f32.gmra.mxu0 %v4902
      %v5017 = vpop.f32.mrf.mxu0
      %v5018 = vadd.f32 0.0, %v5017
      %5019 = vmatmul.f32.gmra.mxu0 %v4905
      %v5020 = vpop.f32.mrf.mxu0
      %v5021 = vadd.f32 0.0, %v5020
      %5022 = vmatmul.f32.gmra.mxu0 %v4908
      %v5023 = vpop.f32.mrf.mxu0
      %v5024 = vadd.f32 0.0, %v5023
      %5025 = vmatmul.f32.gmra.mxu0 %v4911
      %v5026 = vpop.f32.mrf.mxu0
      %v5027 = vadd.f32 0.0, %v5026
      %5028 = vmatmul.f32.gmra.mxu0 %v4914
      %v5029 = vpop.f32.mrf.mxu0
      %v5030 = vadd.f32 0.0, %v5029
      %5031 = vmatmul.f32.gmra.mxu0 %v4917
      %v5032 = vpop.f32.mrf.mxu0
      %v5033 = vadd.f32 0.0, %v5032
      %5034 = vmatmul.f32.gmra.mxu0 %v4920
      %v5035 = vpop.f32.mrf.mxu0
      %v5036 = vadd.f32 0.0, %v5035
      %5037 = vmatmul.f32.gmra.mxu0 %v4923
      %v5038 = vpop.f32.mrf.mxu0
      %v5039 = vadd.f32 0.0, %v5038
      %5040 = vmatmul.f32.gmra.mxu0 %v4926
      %v5041 = vpop.f32.mrf.mxu0
      %v5042 = vadd.f32 0.0, %v5041
      %5043 = vmatmul.f32.gmra.mxu0 %v4929
      %v5044 = vpop.f32.mrf.mxu0
      %v5045 = vadd.f32 0.0, %v5044
      %5046 = vmatmul.f32.gmra.mxu0 %v4932
      %v5047 = vpop.f32.mrf.mxu0
      %v5048 = vadd.f32 0.0, %v5047
      %5049 = vmatmul.f32.gmra.mxu0 %v4935
      %v5050 = vpop.f32.mrf.mxu0
      %v5051 = vadd.f32 0.0, %v5050
      %5052 = vmatmul.f32.gmra.mxu0 %v4938
      %v5053 = vpop.f32.mrf.mxu0
      %v5054 = vadd.f32 0.0, %v5053
      %5055 = vmatmul.f32.gmra.mxu0 %v4941
      %v5056 = vpop.f32.mrf.mxu0
      %v5057 = vadd.f32 0.0, %v5056
      %5058 = vmatmul.f32.gmra.mxu0 %v4944
      %v5059 = vpop.f32.mrf.mxu0
      %v5060 = vadd.f32 0.0, %v5059
      %5061 = vmatmul.f32.gmra.mxu0 %v4947
      %v5062 = vpop.f32.mrf.mxu0
      %v5063 = vadd.f32 0.0, %v5062
      %5064 = vmatmul.f32.gmra.mxu0 %v4950
      %v5065 = vpop.f32.mrf.mxu0
      %v5066 = vadd.f32 0.0, %v5065
      %5067 = vdwg.mxu0
      %v5068 = vadd.f32 %v4790, %v4973
      %v5069 = vadd.f32 %v4791, %v4976
      %v5070 = vadd.f32 %v4792, %v4979
      %v5071 = vadd.f32 %v4793, %v4982
      %v5072 = vadd.f32 %v4794, %v4985
      %v5073 = vadd.f32 %v4795, %v4988
      %v5074 = vadd.f32 %v4796, %v4991
      %v5075 = vadd.f32 %v4797, %v4994
      %v5076 = vadd.f32 %v4798, %v4997
      %v5077 = vadd.f32 %v4799, %v5000
      %v5078 = vadd.f32 %v4800, %v5003
      %v5079 = vadd.f32 %v4801, %v5006
      %v5080 = vadd.f32 %v4802, %v5009
      %v5081 = vadd.f32 %v4803, %v5012
      %v5082 = vadd.f32 %v4804, %v5015
      %v5083 = vadd.f32 %v4805, %v5018
      %v5084 = vadd.f32 %v4806, %v5021
      %v5085 = vadd.f32 %v4807, %v5024
      %v5086 = vadd.f32 %v4808, %v5027
      %v5087 = vadd.f32 %v4809, %v5030
      %v5088 = vadd.f32 %v4810, %v5033
      %v5089 = vadd.f32 %v4811, %v5036
      %v5090 = vadd.f32 %v4812, %v5039
      %v5091 = vadd.f32 %v4813, %v5042
      %v5092 = vadd.f32 %v4814, %v5045
      %v5093 = vadd.f32 %v4815, %v5048
      %v5094 = vadd.f32 %v4816, %v5051
      %v5095 = vadd.f32 %v4817, %v5054
      %v5096 = vadd.f32 %v4818, %v5057
      %v5097 = vadd.f32 %v4819, %v5060
      %v5098 = vadd.f32 %v4820, %v5063
      %v5099 = vadd.f32 %v4821, %v5066
      %v5100 = vld [vmem:[%s4543 + $0x2] sm:$0xff]
      %v5101 = vld [vmem:[%s4543 + $0xa] sm:$0xff]
      %v5102 = vld [vmem:[%s4543 + $0x1a] sm:$0xff]
      %v5103 = vld [vmem:[%s4543 + $0x22] sm:$0xff]
      %v5104 = vld [vmem:[%s4543 + $0x32] sm:$0xff]
      %v5105 = vld [vmem:[%s4543 + $0x3a] sm:$0xff]
      %v5106 = vld [vmem:[%s4543 + $0x4a] sm:$0xff]
      %v5107 = vld [vmem:[%s4543 + $0x52] sm:$0xff]
      %v5108 = vld [vmem:[%s4543 + $0x62] sm:$0xff]
      %v5109 = vld [vmem:[%s4543 + $0x6a] sm:$0xff]
      %v5110 = vld [vmem:[%s4543 + $0x7a] sm:$0xff]
      %v5111 = vld [vmem:[%s4543 + $0x82] sm:$0xff]
      %v5112 = vld [vmem:[%s4543 + $0x92] sm:$0xff]
      %v5113 = vld [vmem:[%s4543 + $0x9a] sm:$0xff]
      %v5114 = vld [vmem:[%s4543 + $0xaa] sm:$0xff]
      %v5115 = vld [vmem:[%s4543 + $0xb2] sm:$0xff]
      %v5116 = vld [vmem:[%s4543 + $0xc2] sm:$0xff]
      %v5117 = vld [vmem:[%s4543 + $0xca] sm:$0xff]
      %v5118 = vld [vmem:[%s4543 + $0xda] sm:$0xff]
      %v5119 = vld [vmem:[%s4543 + $0xe2] sm:$0xff]
      %v5120 = vld [vmem:[%s4543 + $0xf2] sm:$0xff]
      %v5121 = vld [vmem:[%s4543 + $0xfa] sm:$0xff]
      %v5122 = vld [vmem:[%s4543 + $0x10a] sm:$0xff]
      %v5123 = vld [vmem:[%s4543 + $0x112] sm:$0xff]
      %v5124 = vld [vmem:[%s4543 + $0x122] sm:$0xff]
      %v5125 = vld [vmem:[%s4543 + $0x12a] sm:$0xff]
      %v5126 = vld [vmem:[%s4543 + $0x13a] sm:$0xff]
      %v5127 = vld [vmem:[%s4543 + $0x142] sm:$0xff]
      %v5128 = vld [vmem:[%s4543 + $0x152] sm:$0xff]
      %v5129 = vld [vmem:[%s4543 + $0x15a] sm:$0xff]
      %v5130 = vld [vmem:[%s4543 + $0x16a] sm:$0xff]
      %v5131 = vld [vmem:[%s4543 + $0x172] sm:$0xff]
      %s5132 = scalar_lea.vmem %s3, 32
      %v5133 = vld [vmem:[%s5132] sm:$0xf]
      %v5135 = vsel %vm257, %v5100, 0
      %v5138 = vsel %vm257, %v5101, 0
      %v5141 = vsel %vm257, %v5102, 0
      %v5144 = vsel %vm257, %v5103, 0
      %v5147 = vsel %vm257, %v5104, 0
      %v5150 = vsel %vm257, %v5105, 0
      %v5153 = vsel %vm257, %v5106, 0
      %v5156 = vsel %vm257, %v5107, 0
      %v5159 = vsel %vm257, %v5108, 0
      %v5162 = vsel %vm257, %v5109, 0
      %v5165 = vsel %vm257, %v5110, 0
      %v5168 = vsel %vm257, %v5111, 0
      %v5171 = vsel %vm257, %v5112, 0
      %v5174 = vsel %vm257, %v5113, 0
      %v5177 = vsel %vm257, %v5114, 0
      %v5180 = vsel %vm257, %v5115, 0
      %v5183 = vsel %vm257, %v5116, 0
      %v5186 = vsel %vm257, %v5117, 0
      %v5189 = vsel %vm257, %v5118, 0
      %v5192 = vsel %vm257, %v5119, 0
      %v5195 = vsel %vm257, %v5120, 0
      %v5198 = vsel %vm257, %v5121, 0
      %v5201 = vsel %vm257, %v5122, 0
      %v5204 = vsel %vm257, %v5123, 0
      %v5207 = vsel %vm257, %v5124, 0
      %v5210 = vsel %vm257, %v5125, 0
      %v5213 = vsel %vm257, %v5126, 0
      %v5216 = vsel %vm257, %v5127, 0
      %v5219 = vsel %vm257, %v5128, 0
      %v5222 = vsel %vm257, %v5129, 0
      %v5225 = vsel %vm257, %v5130, 0
      %v5228 = vsel %vm257, %v5131, 0
      %v5231 = vsel %vm509, %v5133, 0
      %5233 = vmatpush.msra.mxu0 0.0
      %5234 = vmatpush.msra.mxu0 0.0
      %5235 = vmatpush.msra.mxu0 0.0
      %5236 = vmatpush.msra.mxu0 0.0
      %5237 = vmatpush.msra.mxu0 0.0
      %5238 = vmatpush.msra.mxu0 0.0
      %5239 = vmatpush.msra.mxu0 0.0
      %5240 = vmatpush.msra.mxu0 0.0
      %5241 = vmatpush.msra.mxu0 0.0
      %5242 = vmatpush.msra.mxu0 0.0
      %5243 = vmatpush.msra.mxu0 0.0
      %5244 = vmatpush.msra.mxu0 0.0
      %5245 = vmatpush.msra.mxu0 0.0
      %5246 = vmatpush.msra.mxu0 0.0
      %5247 = vmatpush.msra.mxu0 0.0
      %5248 = vmatpush.msra.mxu0 %v5231
      %5249 = vmatmul.f32.gmra.mxu0 %v5135
      %v5250 = vpop.f32.mrf.mxu0
      %v5251 = vadd.f32 0.0, %v5250
      %5252 = vmatmul.f32.gmra.mxu0 %v5138
      %v5253 = vpop.f32.mrf.mxu0
      %v5254 = vadd.f32 0.0, %v5253
      %5255 = vmatmul.f32.gmra.mxu0 %v5141
      %v5256 = vpop.f32.mrf.mxu0
      %v5257 = vadd.f32 0.0, %v5256
      %5258 = vmatmul.f32.gmra.mxu0 %v5144
      %v5259 = vpop.f32.mrf.mxu0
      %v5260 = vadd.f32 0.0, %v5259
      %5261 = vmatmul.f32.gmra.mxu0 %v5147
      %v5262 = vpop.f32.mrf.mxu0
      %v5263 = vadd.f32 0.0, %v5262
      %5264 = vmatmul.f32.gmra.mxu0 %v5150
      %v5265 = vpop.f32.mrf.mxu0
      %v5266 = vadd.f32 0.0, %v5265
      %5267 = vmatmul.f32.gmra.mxu0 %v5153
      %v5268 = vpop.f32.mrf.mxu0
      %v5269 = vadd.f32 0.0, %v5268
      %5270 = vmatmul.f32.gmra.mxu0 %v5156
      %v5271 = vpop.f32.mrf.mxu0
      %v5272 = vadd.f32 0.0, %v5271
      %5273 = vmatmul.f32.gmra.mxu0 %v5159
      %v5274 = vpop.f32.mrf.mxu0
      %v5275 = vadd.f32 0.0, %v5274
      %5276 = vmatmul.f32.gmra.mxu0 %v5162
      %v5277 = vpop.f32.mrf.mxu0
      %v5278 = vadd.f32 0.0, %v5277
      %5279 = vmatmul.f32.gmra.mxu0 %v5165
      %v5280 = vpop.f32.mrf.mxu0
      %v5281 = vadd.f32 0.0, %v5280
      %5282 = vmatmul.f32.gmra.mxu0 %v5168
      %v5283 = vpop.f32.mrf.mxu0
      %v5284 = vadd.f32 0.0, %v5283
      %5285 = vmatmul.f32.gmra.mxu0 %v5171
      %v5286 = vpop.f32.mrf.mxu0
      %v5287 = vadd.f32 0.0, %v5286
      %5288 = vmatmul.f32.gmra.mxu0 %v5174
      %v5289 = vpop.f32.mrf.mxu0
      %v5290 = vadd.f32 0.0, %v5289
      %5291 = vmatmul.f32.gmra.mxu0 %v5177
      %v5292 = vpop.f32.mrf.mxu0
      %v5293 = vadd.f32 0.0, %v5292
      %5294 = vmatmul.f32.gmra.mxu0 %v5180
      %v5295 = vpop.f32.mrf.mxu0
      %v5296 = vadd.f32 0.0, %v5295
      %5297 = vmatmul.f32.gmra.mxu0 %v5183
      %v5298 = vpop.f32.mrf.mxu0
      %v5299 = vadd.f32 0.0, %v5298
      %5300 = vmatmul.f32.gmra.mxu0 %v5186
      %v5301 = vpop.f32.mrf.mxu0
      %v5302 = vadd.f32 0.0, %v5301
      %5303 = vmatmul.f32.gmra.mxu0 %v5189
      %v5304 = vpop.f32.mrf.mxu0
      %v5305 = vadd.f32 0.0, %v5304
      %5306 = vmatmul.f32.gmra.mxu0 %v5192
      %v5307 = vpop.f32.mrf.mxu0
      %v5308 = vadd.f32 0.0, %v5307
      %5309 = vmatmul.f32.gmra.mxu0 %v5195
      %v5310 = vpop.f32.mrf.mxu0
      %v5311 = vadd.f32 0.0, %v5310
      %5312 = vmatmul.f32.gmra.mxu0 %v5198
      %v5313 = vpop.f32.mrf.mxu0
      %v5314 = vadd.f32 0.0, %v5313
      %5315 = vmatmul.f32.gmra.mxu0 %v5201
      %v5316 = vpop.f32.mrf.mxu0
      %v5317 = vadd.f32 0.0, %v5316
      %5318 = vmatmul.f32.gmra.mxu0 %v5204
      %v5319 = vpop.f32.mrf.mxu0
      %v5320 = vadd.f32 0.0, %v5319
      %5321 = vmatmul.f32.gmra.mxu0 %v5207
      %v5322 = vpop.f32.mrf.mxu0
      %v5323 = vadd.f32 0.0, %v5322
      %5324 = vmatmul.f32.gmra.mxu0 %v5210
      %v5325 = vpop.f32.mrf.mxu0
      %v5326 = vadd.f32 0.0, %v5325
      %5327 = vmatmul.f32.gmra.mxu0 %v5213
      %v5328 = vpop.f32.mrf.mxu0
      %v5329 = vadd.f32 0.0, %v5328
      %5330 = vmatmul.f32.gmra.mxu0 %v5216
      %v5331 = vpop.f32.mrf.mxu0
      %v5332 = vadd.f32 0.0, %v5331
      %5333 = vmatmul.f32.gmra.mxu0 %v5219
      %v5334 = vpop.f32.mrf.mxu0
      %v5335 = vadd.f32 0.0, %v5334
      %5336 = vmatmul.f32.gmra.mxu0 %v5222
      %v5337 = vpop.f32.mrf.mxu0
      %v5338 = vadd.f32 0.0, %v5337
      %5339 = vmatmul.f32.gmra.mxu0 %v5225
      %v5340 = vpop.f32.mrf.mxu0
      %v5341 = vadd.f32 0.0, %v5340
      %5342 = vmatmul.f32.gmra.mxu0 %v5228
      %v5343 = vpop.f32.mrf.mxu0
      %v5344 = vadd.f32 0.0, %v5343
      %5345 = vdwg.mxu0
      %v5346 = vadd.f32 %v5068, %v5251
      %v5347 = vadd.f32 %v5069, %v5254
      %v5348 = vadd.f32 %v5070, %v5257
      %v5349 = vadd.f32 %v5071, %v5260
      %v5350 = vadd.f32 %v5072, %v5263
      %v5351 = vadd.f32 %v5073, %v5266
      %v5352 = vadd.f32 %v5074, %v5269
      %v5353 = vadd.f32 %v5075, %v5272
      %v5354 = vadd.f32 %v5076, %v5275
      %v5355 = vadd.f32 %v5077, %v5278
      %v5356 = vadd.f32 %v5078, %v5281
      %v5357 = vadd.f32 %v5079, %v5284
      %v5358 = vadd.f32 %v5080, %v5287
      %v5359 = vadd.f32 %v5081, %v5290
      %v5360 = vadd.f32 %v5082, %v5293
      %v5361 = vadd.f32 %v5083, %v5296
      %v5362 = vadd.f32 %v5084, %v5299
      %v5363 = vadd.f32 %v5085, %v5302
      %v5364 = vadd.f32 %v5086, %v5305
      %v5365 = vadd.f32 %v5087, %v5308
      %v5366 = vadd.f32 %v5088, %v5311
      %v5367 = vadd.f32 %v5089, %v5314
      %v5368 = vadd.f32 %v5090, %v5317
      %v5369 = vadd.f32 %v5091, %v5320
      %v5370 = vadd.f32 %v5092, %v5323
      %v5371 = vadd.f32 %v5093, %v5326
      %v5372 = vadd.f32 %v5094, %v5329
      %v5373 = vadd.f32 %v5095, %v5332
      %v5374 = vadd.f32 %v5096, %v5335
      %v5375 = vadd.f32 %v5097, %v5338
      %v5376 = vadd.f32 %v5098, %v5341
      %v5377 = vadd.f32 %v5099, %v5344
      %v5378 = vld [vmem:[%s4] sm:$0x1]
      %v5380 = vperm.slane %v5378, 0
      %v5382 = vadd.f32 %v5346, %v5380
      %v5383 = vadd.f32 %v5347, %v5380
      %v5384 = vadd.f32 %v5348, %v5380
      %v5385 = vadd.f32 %v5349, %v5380
      %v5386 = vadd.f32 %v5350, %v5380
      %v5387 = vadd.f32 %v5351, %v5380
      %v5388 = vadd.f32 %v5352, %v5380
      %v5389 = vadd.f32 %v5353, %v5380
      %v5390 = vadd.f32 %v5354, %v5380
      %v5391 = vadd.f32 %v5355, %v5380
      %v5392 = vadd.f32 %v5356, %v5380
      %v5393 = vadd.f32 %v5357, %v5380
      %v5394 = vadd.f32 %v5358, %v5380
      %v5395 = vadd.f32 %v5359, %v5380
      %v5396 = vadd.f32 %v5360, %v5380
      %v5397 = vadd.f32 %v5361, %v5380
      %v5398 = vadd.f32 %v5362, %v5380
      %v5399 = vadd.f32 %v5363, %v5380
      %v5400 = vadd.f32 %v5364, %v5380
      %v5401 = vadd.f32 %v5365, %v5380
      %v5402 = vadd.f32 %v5366, %v5380
      %v5403 = vadd.f32 %v5367, %v5380
      %v5404 = vadd.f32 %v5368, %v5380
      %v5405 = vadd.f32 %v5369, %v5380
      %v5406 = vadd.f32 %v5370, %v5380
      %v5407 = vadd.f32 %v5371, %v5380
      %v5408 = vadd.f32 %v5372, %v5380
      %v5409 = vadd.f32 %v5373, %v5380
      %v5410 = vadd.f32 %v5374, %v5380
      %v5411 = vadd.f32 %v5375, %v5380
      %v5412 = vadd.f32 %v5376, %v5380
      %v5413 = vadd.f32 %v5377, %v5380
      %v5414 = vadd.f32 %v5382, %v225
      %v5415 = vadd.f32 %v5383, %v226
      %v5416 = vadd.f32 %v5384, %v227
      %v5417 = vadd.f32 %v5385, %v228
      %v5418 = vadd.f32 %v5386, %v229
      %v5419 = vadd.f32 %v5387, %v230
      %v5420 = vadd.f32 %v5388, %v231
      %v5421 = vadd.f32 %v5389, %v232
      %v5422 = vadd.f32 %v5390, %v233
      %v5423 = vadd.f32 %v5391, %v234
      %v5424 = vadd.f32 %v5392, %v235
      %v5425 = vadd.f32 %v5393, %v236
      %v5426 = vadd.f32 %v5394, %v237
      %v5427 = vadd.f32 %v5395, %v238
      %v5428 = vadd.f32 %v5396, %v239
      %v5429 = vadd.f32 %v5397, %v240
      %v5430 = vadd.f32 %v5398, %v241
      %v5431 = vadd.f32 %v5399, %v242
      %v5432 = vadd.f32 %v5400, %v243
      %v5433 = vadd.f32 %v5401, %v244
      %v5434 = vadd.f32 %v5402, %v245
      %v5435 = vadd.f32 %v5403, %v246
      %v5436 = vadd.f32 %v5404, %v247
      %v5437 = vadd.f32 %v5405, %v248
      %v5438 = vadd.f32 %v5406, %v249
      %v5439 = vadd.f32 %v5407, %v250
      %v5440 = vadd.f32 %v5408, %v251
      %v5441 = vadd.f32 %v5409, %v252
      %v5442 = vadd.f32 %v5410, %v253
      %v5443 = vadd.f32 %v5411, %v254
      %v5444 = vadd.f32 %v5412, %v255
      %v5445 = vadd.f32 %v5413, %v256
      %5446 = vst.msk [vmem:[%s224] sm:$0xff] %vm257, %v5414
      %5447 = vst.msk [vmem:[%s224 + $0x8] sm:$0xff] %vm257, %v5415
      %5448 = vst.msk [vmem:[%s224 + $0x10] sm:$0xff] %vm257, %v5416
      %5449 = vst.msk [vmem:[%s224 + $0x18] sm:$0xff] %vm257, %v5417
      %5450 = vst.msk [vmem:[%s224 + $0x20] sm:$0xff] %vm257, %v5418
      %5451 = vst.msk [vmem:[%s224 + $0x28] sm:$0xff] %vm257, %v5419
      %5452 = vst.msk [vmem:[%s224 + $0x30] sm:$0xff] %vm257, %v5420
      %5453 = vst.msk [vmem:[%s224 + $0x38] sm:$0xff] %vm257, %v5421
      %5454 = vst.msk [vmem:[%s224 + $0x40] sm:$0xff] %vm257, %v5422
      %5455 = vst.msk [vmem:[%s224 + $0x48] sm:$0xff] %vm257, %v5423
      %5456 = vst.msk [vmem:[%s224 + $0x50] sm:$0xff] %vm257, %v5424
      %5457 = vst.msk [vmem:[%s224 + $0x58] sm:$0xff] %vm257, %v5425
      %5458 = vst.msk [vmem:[%s224 + $0x60] sm:$0xff] %vm257, %v5426
      %5459 = vst.msk [vmem:[%s224 + $0x68] sm:$0xff] %vm257, %v5427
      %5460 = vst.msk [vmem:[%s224 + $0x70] sm:$0xff] %vm257, %v5428
      %5461 = vst.msk [vmem:[%s224 + $0x78] sm:$0xff] %vm257, %v5429
      %5462 = vst.msk [vmem:[%s224 + $0x80] sm:$0xff] %vm257, %v5430
      %5463 = vst.msk [vmem:[%s224 + $0x88] sm:$0xff] %vm257, %v5431
      %5464 = vst.msk [vmem:[%s224 + $0x90] sm:$0xff] %vm257, %v5432
      %5465 = vst.msk [vmem:[%s224 + $0x98] sm:$0xff] %vm257, %v5433
      %5466 = vst.msk [vmem:[%s224 + $0xa0] sm:$0xff] %vm257, %v5434
      %5467 = vst.msk [vmem:[%s224 + $0xa8] sm:$0xff] %vm257, %v5435
      %5468 = vst.msk [vmem:[%s224 + $0xb0] sm:$0xff] %vm257, %v5436
      %5469 = vst.msk [vmem:[%s224 + $0xb8] sm:$0xff] %vm257, %v5437
      %5470 = vst.msk [vmem:[%s224 + $0xc0] sm:$0xff] %vm257, %v5438
      %5471 = vst.msk [vmem:[%s224 + $0xc8] sm:$0xff] %vm257, %v5439
      %5472 = vst.msk [vmem:[%s224 + $0xd0] sm:$0xff] %vm257, %v5440
      %5473 = vst.msk [vmem:[%s224 + $0xd8] sm:$0xff] %vm257, %v5441
      %5474 = vst.msk [vmem:[%s224 + $0xe0] sm:$0xff] %vm257, %v5442
      %5475 = vst.msk [vmem:[%s224 + $0xe8] sm:$0xff] %vm257, %v5443
      %5476 = vst.msk [vmem:[%s224 + $0xf0] sm:$0xff] %vm257, %v5444
      %5477 = vst.msk [vmem:[%s224 + $0xf8] sm:$0xff] %vm257, %v5445
      %p5478 = scmp.lt.s32.totalorder %s16, 1
      %s5479 = scalar_select %p5478, %s16, 1
      %s5480 = smul.addr %s5479, 32
      %s5481 = smul.addr %s5480, 8
      %s5482 = scalar_lea.vmem %s5, %s5481
      // Predicated region
      $region41: #{basic_block_forward.1} parent=39 // pred_check
        %p5483 = pneg %p144
      $region42: #{basic_block_forward.1} parent=39 // pred_check_branch
        %5485 = sbr.rel (%p5483) target = $region44
      $region43: #{basic_block_forward.1} parent=39 // pred_region
        _
      $region44: #{basic_block_forward.1} parent=39 // pred_fallthru
        _
    $region40: #{basic_block_forward.1} parent=5 // pred_fallthru
      _
    %p5486 = scmp.le.s32.totalorder 2, %s11
    // Predicated region
    $region45: #{basic_block_forward.1} parent=5 // pred_check
      %p5487 = pneg %p5486
    $region46: #{basic_block_forward.1} parent=5 // pred_check_branch
      %5489 = sbr.rel (%p5487) target = $region48
    $region47: #{basic_block_forward.1} parent=5 // pred_region
      %s5490 = ssub.s32 %s11, 2
      // Predicated region
      $region49: #{basic_block_forward.1} parent=47 // pred_check
        %p5491 = pneg %p150
      $region50: #{basic_block_forward.1} parent=47 // pred_check_branch
        %5493 = sbr.rel (%p5491) target = $region52
      $region51: #{basic_block_forward.1} parent=47 // pred_region
        %p5494 = scmp.lt.s32.totalorder %s17, 1
        %s5495 = scalar_select %p5494, %s17, 1
        %s5496 = smul.addr %s5495, 32
        %s5497 = smul.addr %s5496, 8
        %s5498 = scalar_lea.vmem %s5, %s5497
      $region52: #{basic_block_forward.1} parent=47 // pred_fallthru
        _
    $region48: #{basic_block_forward.1} parent=5 // pred_fallthru
      _
  $region6: #{basic_block_forward.1} parent=0 // loop_footer
    %s15 = sadd.s32 1, %s11
  $region7: #{basic_block_forward.1} parent=0 // loop_footer_branch
    %10 = sbr.rel target = $region3
  $region8: #{basic_block_forward.1} parent=0 // loop_exit
    _

</llo_original>
